<compile_context>
chip_gen: v6e
topology: v6e:2x2x1
jax: 0.10.0
libtpu: 0.0.40
codegen_flags: <defaults>
</compile_context>

<pallas_src>
import functools
import math

import jax
import jax.numpy as jnp
from jax.experimental import pallas as pl
from jax.experimental.pallas import tpu as pltpu

MIB = 1024 * 1024


# ----------------------------------------------------------------------------
# small helpers
# ----------------------------------------------------------------------------
def _layer_norm(v, w, b, eps=1e-5):
    mu = jnp.mean(v, axis=-1, keepdims=True)
    var = jnp.mean(jnp.square(v - mu), axis=-1, keepdims=True)
    return (v - mu) * jax.lax.rsqrt(var + eps) * w + b


def _round_up(x, m):
    return (x + m - 1) // m * m


def _pick_tile(dim, prefs):
    """Largest preference that divides `dim`; else the full dim (a block equal to the
    full array dim is always a legal BlockSpec, just possibly not lane-aligned)."""
    for t in prefs:
        if dim % t == 0:
            return t
    return dim


def _physical_vmem_bytes():
    try:
        info = pltpu.get_tpu_info()
        cap = int(getattr(info, "vmem_capacity_bytes", 0))
        if cap > 0:
            return cap
    except Exception:
        pass
    try:
        kind = jax.devices()[0].device_kind.lower()
        if "v7" in kind:
            return 64 * MIB
    except Exception:
        pass
    return 128 * MIB                                    # v5e / v6e


_VMEM_CAP_CACHE = None


def _vmem_cap():
    """Per-kernel VMEM budget: physical capacity minus headroom for Mosaic internal scratch.
    ~112 MiB on v5e/v6e, ~48 MiB on v7x (generation-specific instead of a blanket clamp)."""
    global _VMEM_CAP_CACHE
    if _VMEM_CAP_CACHE is None:
        _VMEM_CAP_CACHE = max(32 * MIB, _physical_vmem_bytes() - 16 * MIB)
    return _VMEM_CAP_CACHE


def _vmem_limit(need_bytes):
    return int(min(_vmem_cap(), max(32 * MIB, int(need_bytes) + 8 * MIB)))


# ----------------------------------------------------------------------------
# pipeline_mode=Buffered(1) support probe (single-buffer constant weight blocks)
# ----------------------------------------------------------------------------
def _probe_kernel(x_ref, o_ref):
    o_ref[...] = x_ref[...] + 1.0


def _probe_buffered_support():
    """Constant-index blocks don't need double buffering; Buffered(1) halves their VMEM
    footprint.  Probe once, eagerly (outside any trace); fall back cleanly if unsupported."""
    try:
        spec = pl.BlockSpec((8, 128), lambda i: (0, 0), pipeline_mode=pl.Buffered(1))
        f = pl.pallas_call(
            _probe_kernel,
            grid=(2,),
            in_specs=[spec],
            out_specs=pl.BlockSpec((8, 128), lambda i: (0, 0)),
            out_shape=jax.ShapeDtypeStruct((8, 128), jnp.float32),
        )
        jax.block_until_ready(f(jnp.zeros((8, 128), jnp.float32)))
        return True
    except Exception:
        return False


_BUFFERED_OK = _probe_buffered_support()


def _wspec(shape, index_map):
    """BlockSpec for blocks whose block index is constant over the whole grid."""
    if _BUFFERED_OK:
        return pl.BlockSpec(shape, index_map, pipeline_mode=pl.Buffered(1))
    return pl.BlockSpec(shape, index_map)


def _wbuf():
    return 1 if _BUFFERED_OK else 2


# ----------------------------------------------------------------------------
# Pallas kernels
# ----------------------------------------------------------------------------
def qkv_projection_kernel(heads, x_ref, ln1w_ref, ln1b_ref, wqkv_ref, bqkv_ref,
                          q_ref, k_ref, v_ref):
    """Pre-norm + fused QKV projection for one (batch, seq-tile) block.  q/k/v are written
    in (head, seq, head_dim) bf16 layout so the flash kernel needs no per-step transposes."""
    x = x_ref[0]                                              # (TS, E) f32
    TS, E = x.shape
    D = E // heads
    nx = _layer_norm(x, ln1w_ref[0], ln1b_ref[0])
    qkv = jnp.dot(nx.astype(jnp.bfloat16), wqkv_ref[...],
                  preferred_element_type=jnp.float32) + bqkv_ref[0]      # (TS, 3E) f32

    def split_heads(m):                                       # (TS, E) -> (H, TS, D) bf16
        return m.reshape(TS, heads, D).transpose(1, 0, 2).astype(jnp.bfloat16)

    q_ref[0] = split_heads(qkv[:, 0 * E:1 * E])
    k_ref[0] = split_heads(qkv[:, 1 * E:2 * E])
    v_ref[0] = split_heads(qkv[:, 2 * E:3 * E])


def flash_attention_kernel(heads, scale, causal, tq, tk, *refs):
    """Flash-style attention + output projection + residual.
    grid = (batch, q tiles, kv tiles); the kv axis is the (arbitrary) reduction axis and
    only (H, TQ, TK) score tiles exist in VMEM.  The additive mask is head-invariant: it is
    either DMA'd as a (TQ, TK) tile or generated in-kernel for the causal case."""
    if causal:
        (q_ref, k_ref, v_ref, x_ref, wo_ref, bo_ref,
         o_ref, m_sc, l_sc, acc_sc) = refs
        mask_ref = None
    else:
        (q_ref, k_ref, v_ref, mask_ref, x_ref, wo_ref, bo_ref,
         o_ref, m_sc, l_sc, acc_sc) = refs

    qi = pl.program_id(1)
    ki = pl.program_id(2)

    @pl.when(ki == 0)
    def _():
        m_sc[...] = jnp.full(m_sc.shape, -1e30, m_sc.dtype)
        l_sc[...] = jnp.zeros(l_sc.shape, l_sc.dtype)
        acc_sc[...] = jnp.zeros(acc_sc.shape, acc_sc.dtype)

    def update():
        q = q_ref[0]                                          # (H, TQ, D) bf16
        k = k_ref[0]                                          # (H, TK, D) bf16
        v = v_ref[0]                                          # (H, TK, D) bf16
        s = jnp.einsum("hqd,hkd->hqk", q, k,
                       preferred_element_type=jnp.float32) * scale      # (H, TQ, TK) f32
        if causal:
            row = qi * tq + jax.lax.broadcasted_iota(jnp.int32, (tq, tk), 0)
            col = ki * tk + jax.lax.broadcasted_iota(jnp.int32, (tq, tk), 1)
            bias = jnp.where(row >= col, 0.0, -1e9).astype(jnp.float32)
        else:
            bias = mask_ref[0]                                # (TQ, TK) f32, head-invariant
        s = s + bias[None, :, :]
        m_prev = m_sc[...]
        m_new = jnp.maximum(m_prev, jnp.max(s, axis=-1, keepdims=True))
        alpha = jnp.exp(m_prev - m_new)
        p = jnp.exp(s - m_new)
        l_sc[...] = alpha * l_sc[...] + jnp.sum(p, axis=-1, keepdims=True)
        acc_sc[...] = alpha * acc_sc[...] + jnp.einsum(
            "hqk,hkd->hqd", p.astype(jnp.bfloat16), v,
            preferred_element_type=jnp.float32)
        m_sc[...] = m_new

    if causal:
        # Skip KV tiles that lie entirely in the masked (future) region.  The ki == 0 tile
        # is never skipped, so l > 0 at finalization.
        pl.when(ki * tk <= qi * tq + (tq - 1))(update)
    else:
        update()

    @pl.when(ki == pl.num_programs(2) - 1)
    def _():
        ctx = acc_sc[...] * pl.reciprocal(l_sc[...], approx=True)       # (H, TQ, D) f32
        D = ctx.shape[-1]
        ctx = ctx.transpose(1, 0, 2).reshape(tq, heads * D)             # concat-head layout
        out = jnp.dot(ctx.astype(jnp.bfloat16), wo_ref[...],
                      preferred_element_type=jnp.float32) + bo_ref[0]
        o_ref[0] = (out + x_ref[0]).astype(o_ref.dtype)


def ffn_resident_kernel(x_ref, ln2w_ref, ln2b_ref, w1_ref, b1_ref, w2_ref, b2_ref, o_ref):
    """Pre-norm MLP + residual with both bf16 weights resident in VMEM: one write per output
    block, no hidden-dim read-modify-write passes."""
    x = x_ref[0]                                              # (TS, E) f32
    nx = _layer_norm(x, ln2w_ref[0], ln2b_ref[0]).astype(jnp.bfloat16)
    h1 = jnp.maximum(
        jnp.dot(nx, w1_ref[...], preferred_element_type=jnp.float32) + b1_ref[0], 0.0)
    o_ref[0] = (x + b2_ref[0]
                + jnp.dot(h1.astype(jnp.bfloat16), w2_ref[...],
                          preferred_element_type=jnp.float32)).astype(o_ref.dtype)


def ffn_hidden_tiled_kernel(x_ref, ln2w_ref, ln2b_ref, w1_ref, b1_ref, w2_ref, b2_ref,
                            o_ref, nx_ref):
    """Fallback when the full 4E weights don't fit VMEM: the hidden dim is tiled and partial
    products accumulate into the resident f32 output block."""
    k = pl.program_id(2)

    @pl.when(k == 0)
    def _():
        x = x_ref[0]
        nx_ref[...] = _layer_norm(x, ln2w_ref[0], ln2b_ref[0]).astype(nx_ref.dtype)
        o_ref[0] = x + b2_ref[0]

    h1 = jnp.maximum(
        jnp.dot(nx_ref[...], w1_ref[...], preferred_element_type=jnp.float32) + b1_ref[0],
        0.0)
    o_ref[0] += jnp.dot(h1.astype(jnp.bfloat16), w2_ref[...],
                        preferred_element_type=jnp.float32)


def fc_out_kernel(x_ref, w_ref, b_ref, o_ref):
    """fc_out: (TS, E)bf16 @ (E, TN)bf16 + (TN,), tiled over seq and the padded vocab dim."""
    o_ref[0] = (jnp.dot(x_ref[0], w_ref[...], preferred_element_type=jnp.float32)
                + b_ref[0]).astype(o_ref.dtype)


# ----------------------------------------------------------------------------
# pallas_call wrappers
# ----------------------------------------------------------------------------
def run_qkv_projection(x, lp, heads):
    B, S, E = x.shape
    D = E // heads
    TS = _pick_tile(S, (512, 256, 128))
    need = (2 * TS * E * 4 + 6 * heads * TS * D * 2
            + _wbuf() * (E * 3 * E * 2 + 3 * E * 4 + 2 * E * 4)
            + 4 * TS * 3 * E * 4)
    cost = pl.CostEstimate(flops=int(2 * B * S * E * 3 * E), transcendentals=0,
                           bytes_accessed=int(B * S * E * 4 + 3 * B * S * E * 2
                                              + E * 3 * E * 2))
    out_sd = jax.ShapeDtypeStruct((B, heads, S, D), jnp.bfloat16)
    spec_qkv = pl.BlockSpec((1, heads, TS, D), lambda b, s: (b, 0, s, 0))
    return pl.pallas_call(
        functools.partial(qkv_projection_kernel, heads),
        grid=(B, S // TS),
        in_specs=[pl.BlockSpec((1, TS, E), lambda b, s: (b, s, 0)),
                  _wspec(lp["ln1_w"].shape, lambda b, s: (0, 0)),
                  _wspec(lp["ln1_b"].shape, lambda b, s: (0, 0)),
                  _wspec(lp["wqkv_t"].shape, lambda b, s: (0, 0)),
                  _wspec(lp["bqkv"].shape, lambda b, s: (0, 0))],
        out_specs=(spec_qkv, spec_qkv, spec_qkv),
        out_shape=(out_sd, out_sd, out_sd),
        compiler_params=pltpu.CompilerParams(
            dimension_semantics=("parallel", "parallel"),
            vmem_limit_bytes=_vmem_limit(need)),
        cost_estimate=cost,
    )(x, lp["ln1_w"], lp["ln1_b"], lp["wqkv_t"], lp["bqkv"])


def run_flash_attention(x, q, k, v, mask, lp, heads, causal):
    B, S, E = x.shape
    D = E // heads
    TQ = TK = _pick_tile(S, (256, 128))          # 256 aligns the v6e/v7x MXU when possible
    scale = 1.0 / math.sqrt(D)

    in_specs = [pl.BlockSpec((1, heads, TQ, D), lambda b, qi, ki: (b, 0, qi, 0)),
                pl.BlockSpec((1, heads, TK, D), lambda b, qi, ki: (b, 0, ki, 0)),
                pl.BlockSpec((1, heads, TK, D), lambda b, qi, ki: (b, 0, ki, 0))]
    operands = [q, k, v]
    if not causal:
        in_specs.append(pl.BlockSpec((1, TQ, TK), lambda b, qi, ki: (b, qi, ki)))
        operands.append(mask)
    in_specs += [pl.BlockSpec((1, TQ, E), lambda b, qi, ki: (b, qi, 0)),
                 _wspec(lp["wo_t"].shape, lambda b, qi, ki: (0, 0)),
                 _wspec(lp["bo"].shape, lambda b, qi, ki: (0, 0))]
    operands += [x, lp["wo_t"], lp["bo"]]

    need = (6 * heads * TQ * D * 2                          # q/k/v blocks (double buffered)
            + (0 if causal else 2 * TQ * TK * 4)            # mask tile
            + 4 * TQ * E * 4                                # x + out blocks
            + _wbuf() * (E * E * 2 + E * 4)                 # wo, bo
            + heads * TQ * (D + 2) * 4                      # m/l/acc scratch
            + 2 * heads * TQ * TK * 4)                      # s, p tiles
    cost = pl.CostEstimate(
        flops=int(4 * B * S * S * E + 2 * B * S * E * E),
        transcendentals=int(B * heads * S * S),
        bytes_accessed=int(3 * B * S * E * 2 * (S // TQ) + 2 * B * S * E * 4
                           + (0 if causal else B * S * S * 4) + E * E * 2))
    return pl.pallas_call(
        functools.partial(flash_attention_kernel, heads, scale, causal, TQ, TK),
        grid=(B, S // TQ, S // TK),
        in_specs=in_specs,
        out_specs=pl.BlockSpec((1, TQ, E), lambda b, qi, ki: (b, qi, 0)),
        out_shape=jax.ShapeDtypeStruct((B, S, E), jnp.float32),
        scratch_shapes=[pltpu.VMEM((heads, TQ, 1), jnp.float32),
                        pltpu.VMEM((heads, TQ, 1), jnp.float32),
                        pltpu.VMEM((heads, TQ, D), jnp.float32)],
        compiler_params=pltpu.CompilerParams(
            dimension_semantics=("parallel", "parallel", "arbitrary"),
            vmem_limit_bytes=_vmem_limit(need)),
        cost_estimate=cost,
    )(*operands)


def run_ffn_block(x, lp):
    B, S, E = x.shape
    H4 = lp["w1_t"].shape[1]
    TS = _pick_tile(S, (512, 256, 128))
    cost = pl.CostEstimate(flops=int(4 * B * S * E * H4), transcendentals=0,
                           bytes_accessed=int(2 * B * S * E * 4 + 2 * E * H4 * 2))

    w_all = _wbuf() * 2 * E * H4 * 2
    act = 4 * TS * E * 4 + TS * H4 * 4 + 2 * TS * E * 2
    if w_all + act + 8 * MIB <= _vmem_cap():
        return pl.pallas_call(
            ffn_resident_kernel,
            grid=(B, S // TS),
            in_specs=[pl.BlockSpec((1, TS, E), lambda b, s: (b, s, 0)),
                      _wspec(lp["ln2_w"].shape, lambda b, s: (0, 0)),
                      _wspec(lp["ln2_b"].shape, lambda b, s: (0, 0)),
                      _wspec(lp["w1_t"].shape, lambda b, s: (0, 0)),
                      _wspec(lp["b1"].shape, lambda b, s: (0, 0)),
                      _wspec(lp["w2_t"].shape, lambda b, s: (0, 0)),
                      _wspec(lp["b2"].shape, lambda b, s: (0, 0))],
            out_specs=pl.BlockSpec((1, TS, E), lambda b, s: (b, s, 0)),
            out_shape=jax.ShapeDtypeStruct((B, S, E), jnp.float32),
            compiler_params=pltpu.CompilerParams(
                dimension_semantics=("parallel", "parallel"),
                vmem_limit_bytes=_vmem_limit(w_all + act)),
            cost_estimate=cost,
        )(x, lp["ln2_w"], lp["ln2_b"], lp["w1_t"], lp["b1"], lp["w2_t"], lp["b2"])

    # Fallback: tile the 4E hidden dim and accumulate into the resident output.
    TH = _pick_tile(H4, (2048, 1024, 512, 256, 128))
    need = (4 * E * TH * 2 + 2 * TH * 4 + 4 * TS * E * 4
            + TS * E * 2 + TS * TH * 4 + _wbuf() * 3 * E * 4)
    return pl.pallas_call(
        ffn_hidden_tiled_kernel,
        grid=(B, S // TS, H4 // TH),
        in_specs=[pl.BlockSpec((1, TS, E), lambda b, s, h: (b, s, 0)),
                  _wspec(lp["ln2_w"].shape, lambda b, s, h: (0, 0)),
                  _wspec(lp["ln2_b"].shape, lambda b, s, h: (0, 0)),
                  pl.BlockSpec((E, TH), lambda b, s, h: (0, h)),
                  pl.BlockSpec((1, TH), lambda b, s, h: (0, h)),
                  pl.BlockSpec((TH, E), lambda b, s, h: (h, 0)),
                  _wspec(lp["b2"].shape, lambda b, s, h: (0, 0))],
        out_specs=pl.BlockSpec((1, TS, E), lambda b, s, h: (b, s, 0)),
        out_shape=jax.ShapeDtypeStruct((B, S, E), jnp.float32),
        scratch_shapes=[pltpu.VMEM((TS, E), jnp.bfloat16)],
        compiler_params=pltpu.CompilerParams(
            dimension_semantics=("parallel", "parallel", "arbitrary"),
            vmem_limit_bytes=_vmem_limit(need)),
        cost_estimate=cost,
    )(x, lp["ln2_w"], lp["ln2_b"], lp["w1_t"], lp["b1"], lp["w2_t"], lp["b2"])


def run_fc_out(x, w_pad_t, b_pad, vocab):
    """fc_out with the vocab dim padded at init to a multiple of 128 (lane-dense stores);
    the activation is cast to bf16 once in the wrapper instead of per vocab tile."""
    B, S, E = x.shape
    Vp = w_pad_t.shape[1]
    TS = _pick_tile(S, (512, 256, 128))
    TN = _pick_tile(Vp, (1024, 512, 256, 128))
    xb = x.astype(jnp.bfloat16)
    need = 2 * TS * E * 2 + 2 * (E * TN * 2 + TN * 4) + 2 * TS * TN * 4
    cost = pl.CostEstimate(flops=int(2 * B * S * E * Vp), transcendentals=0,
                           bytes_accessed=int(B * S * E * 2 + E * Vp * 2 + B * S * Vp * 4))
    out = pl.pallas_call(
        fc_out_kernel,
        grid=(B, S // TS, Vp // TN),
        in_specs=[pl.BlockSpec((1, TS, E), lambda b, s, n: (b, s, 0)),
                  pl.BlockSpec((E, TN), lambda b, s, n: (0, n)),
                  pl.BlockSpec((1, TN), lambda b, s, n: (0, n))],
        out_specs=pl.BlockSpec((1, TS, TN), lambda b, s, n: (b, s, n)),
        out_shape=jax.ShapeDtypeStruct((B, S, Vp), jnp.float32),
        compiler_params=pltpu.CompilerParams(
            dimension_semantics=("parallel", "parallel", "parallel"),
            vmem_limit_bytes=_vmem_limit(need)),
        cost_estimate=cost,
    )(xb, w_pad_t, b_pad)
    return out[:, :, :vocab]                      # drop lane padding from the logits


# ----------------------------------------------------------------------------
# Model glue (parameters, embedding gather, positional encoding)
# ----------------------------------------------------------------------------
def generate_positional_encoding(max_length, embed_size, reverse=False):
    position = jnp.arange(max_length, dtype=jnp.float32)[:, None]
    div_term = jnp.exp(jnp.arange(0, embed_size, 2, dtype=jnp.float32)
                       * (-math.log(10000.0) / embed_size))
    ang = position * div_term
    pe = jnp.zeros((max_length, embed_size), jnp.float32)
    pe = pe.at[:, 0::2].set(jnp.sin(ang))
    pe = pe.at[:, 1::2].set(jnp.cos(ang))
    if reverse:
        pe = pe[:, ::-1]
    return pe[None]                                           # (1, max_length, embed_size)


def init_params(key, vocab_size, embed_size, num_layers, heads,
                progressive_head=1, max_length=2048):
    E = embed_size
    layer_heads = [min(heads, 2 ** (li // progressive_head)) for li in range(num_layers)]
    counter = [0]

    def rnd(shape, scale=0.02, dtype=jnp.float32):
        counter[0] += 1
        kk = jax.random.fold_in(key, counter[0])
        return (scale * jax.random.normal(kk, shape, jnp.float32)).astype(dtype)

    bf16 = jnp.bfloat16
    Vp = _round_up(vocab_size, 128)                # fc_out padding hoisted here (done once)
    params = {
        "embedding": rnd((vocab_size, E), 1.0),
        "pos_enc": generate_positional_encoding(max_length, E),
        "grid_enc": generate_positional_encoding(64, E // 4, True),
        "grid_scale": jnp.array([2.4002, 2.6549, 1.2614], jnp.float32),  # unused (use_grid_encoder=False)
        "fc_out_wt": jnp.pad(rnd((E, vocab_size)),
                             ((0, 0), (0, Vp - vocab_size))).astype(bf16),   # fc_out.weight.T, padded
        "fc_out_b": jnp.pad(rnd((1, vocab_size)), ((0, 0), (0, Vp - vocab_size))),
        "layers": [],
    }
    for _ in range(num_layers):
        params["layers"].append({
            "ln1_w": jnp.ones((1, E), jnp.float32),
            "ln1_b": jnp.zeros((1, E), jnp.float32),
            "wqkv_t": rnd((E, 3 * E), dtype=bf16),            # in_proj_weight.T
            "bqkv": rnd((1, 3 * E)),
            "wo_t": rnd((E, E), dtype=bf16),                  # out_proj.weight.T
            "bo": rnd((1, E)),
            "ln2_w": jnp.ones((1, E), jnp.float32),
            "ln2_b": jnp.zeros((1, E), jnp.float32),
            "w1_t": rnd((E, 4 * E), dtype=bf16),              # feed_forward[0].weight.T
            "b1": rnd((1, 4 * E)),
            "w2_t": rnd((4 * E, E), dtype=bf16),              # feed_forward[-1].weight.T
            "b2": rnd((1, E)),
        })
    return params, layer_heads


def transformer_forward(params, x_tokens, mask=None, *, heads, layer_heads,
                        vocab_size, causal=False):
    """x_tokens: (B, S, 5) int32 tokens/grid cells.
    mask: (B, S, S) additive float attention mask, or None with causal=True (the causal
    additive mask is then generated in-kernel and fully-masked KV tiles are skipped)."""
    del heads  # per-layer head counts are in layer_heads; the mask is head-invariant.
    B, S, C = x_tokens.shape
    assert C == 5
    # combine_encoding (use_grid_encoder=False path): just the positional encoding.
    # TODO(synk): grid-encoder branch of combine_encoding (grid_scale * grid_encoding of
    #             x[:, :, 1:5]) is not implemented; reference runs with use_grid_encoder=False.
    h = params["embedding"][x_tokens[:, :, 0]] + params["pos_enc"][:, :S, :]
    # self.dropout and per-layer dropouts are identity in eval mode.

    # mask_expansion(mask, heads) followed by the per-layer stride slice only replicates the
    # head-invariant (B, S, S) mask, so it is passed once and tiled/broadcast in-kernel.
    for li, lp in enumerate(params["layers"]):
        lh = layer_heads[li]
        q, k, v = run_qkv_projection(h, lp, lh)
        h = run_flash_attention(h, q, k, v, mask, lp, lh, causal)
        h = run_ffn_block(h, lp)
        # TODO(synk): fuse the attention->FFN handoff (or carry the residual stream in bf16)
        #             to cut the per-layer HBM round trips of the (B, S, E) f32 activation.

    return run_fc_out(h, params["fc_out_wt"], params["fc_out_b"], vocab_size)


# ----------------------------------------------------------------------------
if __name__ == "__main__":
    B, S, E = 2, 8, 32
    heads, num_layers, vocab = 4, 2, 11

    key = jax.random.PRNGKey(0)
    k_par, k_tok, k_grid = jax.random.split(key, 3)

    params, layer_heads = init_params(k_par, vocab, E, num_layers, heads)

    tok = jax.random.randint(k_tok, (B, S, 1), 0, vocab, dtype=jnp.int32)
    grid_cols = jax.random.randint(k_grid, (B, S, 4), 0, 64, dtype=jnp.int32)
    x = jnp.concatenate([tok, grid_cols], axis=-1)            # (B, S, 5)

    # Causal additive float attention mask (B, S, S) for the explicit-mask path.
    causal_bias = jnp.where(jnp.tril(jnp.ones((S, S), jnp.bool_)), 0.0, -1e9).astype(jnp.float32)
    mask = jnp.broadcast_to(causal_bias, (B, S, S))

    fwd_masked = jax.jit(functools.partial(
        transformer_forward, heads=heads, layer_heads=layer_heads,
        vocab_size=vocab, causal=False))
    fwd_causal = jax.jit(functools.partial(
        transformer_forward, mask=None, heads=heads, layer_heads=layer_heads,
        vocab_size=vocab, causal=True))

    out_m = jax.block_until_ready(fwd_masked(params, x, mask))
    out_c = jax.block_until_ready(fwd_causal(params, x))

    assert out_m.shape == (B, S, vocab) and out_m.dtype == jnp.float32
    assert bool(jnp.all(jnp.isfinite(out_m))) and bool(jnp.all(jnp.isfinite(out_c)))
    # Explicit-mask and in-kernel-causal paths compute identical math -> must agree.
    assert bool(jnp.allclose(out_m, out_c, rtol=1e-3, atol=1e-3))
    print("KERNEL_OK")
</pallas_src>

<mosaic_0001>
module attributes {stable_mosaic.version = 11 : i64} {
  func.func @_probe_kernel(%arg0: i32, %arg1: memref<8x128xf32, #tpu.memory_space<vmem>>, %arg2: memref<8x128xf32, #tpu.memory_space<vmem>>) attributes {dimension_semantics = [#tpu.dimension_semantics<arbitrary>], iteration_bounds = array<i64: 2>, scalar_prefetch = 0 : i64, scratch_operands = 0 : i64, tpu.core_type = #tpu.core_type<tc>, window_params = [{pipeline_mode = #tpu.pipeline_mode<synchronous>, transform_indices = @transform_0, window_bounds = array<i64: 8, 128>}, {pipeline_mode = #tpu.pipeline_mode<synchronous>, transform_indices = @transform_1, window_bounds = array<i64: 8, 128>}]} {
    %c0 = arith.constant 0 : index
    %c0_0 = arith.constant 0 : index
    %0 = vector.load %arg1[%c0, %c0_0] : memref<8x128xf32, #tpu.memory_space<vmem>>, vector<8x128xf32>
    %cst = arith.constant 1.000000e+00 : f32
    %1 = vector.broadcast %cst : f32 to vector<8x128xf32>
    %2 = arith.addf %0, %1 : vector<8x128xf32>
    %c0_1 = arith.constant 0 : index
    %c0_2 = arith.constant 0 : index
    %3 = vector.load %arg2[%c0_1, %c0_2] : memref<8x128xf32, #tpu.memory_space<vmem>>, vector<8x128xf32>
    tpu.vector_store %arg2[%c0_1, %c0_2], %2 {strides = array<i32>} : memref<8x128xf32, #tpu.memory_space<vmem>>, vector<8x128xf32>,
    return
  }
  func.func @transform_0(%arg0: i32) -> (i32, i32) {
    %c0_i32 = arith.constant 0 : i32
    %c0_i32_0 = arith.constant 0 : i32
    %c0_i32_1 = arith.constant 0 : i32
    return %c0_i32, %c0_i32_0 : i32, i32
  }
  func.func @transform_1(%arg0: i32) -> (i32, i32) {
    %c0_i32 = arith.constant 0 : i32
    %c0_i32_0 = arith.constant 0 : i32
    %c0_i32_1 = arith.constant 0 : i32
    return %c0_i32, %c0_i32_0 : i32, i32
  }
}

module attributes {stable_mosaic.version = 11 : i64} {
  func.func @qkv_projection_kernel(%arg0: i32, %arg1: i32, %arg2: memref<1x8x32xf32, #tpu.memory_space<vmem>>, %arg3: memref<1x32xf32, #tpu.memory_space<vmem>>, %arg4: memref<1x32xf32, #tpu.memory_space<vmem>>, %arg5: memref<32x96xbf16, #tpu.memory_space<vmem>>, %arg6: memref<1x96xf32, #tpu.memory_space<vmem>>, %arg7: memref<1x1x8x32xbf16, #tpu.memory_space<vmem>>, %arg8: memref<1x1x8x32xbf16, #tpu.memory_space<vmem>>, %arg9: memref<1x1x8x32xbf16, #tpu.memory_space<vmem>>) attributes {dimension_semantics = [#tpu.dimension_semantics<parallel>, #tpu.dimension_semantics<parallel>], iteration_bounds = array<i64: 2, 1>, scalar_prefetch = 0 : i64, scratch_operands = 0 : i64, tpu.core_type = #tpu.core_type<tc>, window_params = [{transform_indices = @transform_0, window_bounds = array<i64: 1, 8, 32>}, {pipeline_mode = #tpu.pipeline_mode<synchronous>, transform_indices = @transform_1, window_bounds = array<i64: 1, 32>}, {pipeline_mode = #tpu.pipeline_mode<synchronous>, transform_indices = @transform_2, window_bounds = array<i64: 1, 32>}, {pipeline_mode = #tpu.pipeline_mode<synchronous>, transform_indices = @transform_3, window_bounds = array<i64: 32, 96>}, {pipeline_mode = #tpu.pipeline_mode<synchronous>, transform_indices = @transform_4, window_bounds = array<i64: 1, 96>}, {transform_indices = @transform_5, window_bounds = array<i64: 1, 1, 8, 32>}, {transform_indices = @transform_6, window_bounds = array<i64: 1, 1, 8, 32>}, {transform_indices = @transform_7, window_bounds = array<i64: 1, 1, 8, 32>}]} {
    %c0 = arith.constant 0 : index
    %c0_0 = arith.constant 0 : index
    %c0_1 = arith.constant 0 : index
    %0 = vector.load %arg2[%c0, %c0_0, %c0_1] : memref<1x8x32xf32, #tpu.memory_space<vmem>>, vector<1x8x32xf32>
    %1 = vector.shape_cast %0 : vector<1x8x32xf32> to vector<8x32xf32>
    %c0_2 = arith.constant 0 : index
    %c0_3 = arith.constant 0 : index
    %2 = vector.load %arg3[%c0_2, %c0_3] : memref<1x32xf32, #tpu.memory_space<vmem>>, vector<1x32xf32>
    %3 = vector.shape_cast %2 : vector<1x32xf32> to vector<32xf32>
    %c0_4 = arith.constant 0 : index
    %c0_5 = arith.constant 0 : index
    %4 = vector.load %arg4[%c0_4, %c0_5] : memref<1x32xf32, #tpu.memory_space<vmem>>, vector<1x32xf32>
    %5 = vector.shape_cast %4 : vector<1x32xf32> to vector<32xf32>
    %cst = arith.constant dense<0.000000e+00> : vector<8xf32>
    %6 = vector.multi_reduction <add>, %1, %cst [1] : vector<8x32xf32> to vector<8xf32>
    %7 = vector.shape_cast %6 : vector<8xf32> to vector<8x1xf32>
    %cst_6 = arith.constant 3.200000e+01 : f32
    %8 = vector.broadcast %cst_6 : f32 to vector<8x1xf32>
    %9 = arith.divf %7, %8 : vector<8x1xf32>
    %10 = vector.broadcast %9 : vector<8x1xf32> to vector<8x32xf32>
    %11 = arith.subf %1, %10 : vector<8x32xf32>
    %12 = arith.mulf %11, %11 : vector<8x32xf32>
    %cst_7 = arith.constant dense<0.000000e+00> : vector<8xf32>
    %13 = vector.multi_reduction <add>, %12, %cst_7 [1] : vector<8x32xf32> to vector<8xf32>
    %14 = vector.shape_cast %13 : vector<8xf32> to vector<8x1xf32>
    %cst_8 = arith.constant 3.200000e+01 : f32
    %15 = vector.broadcast %cst_8 : f32 to vector<8x1xf32>
    %16 = arith.divf %14, %15 : vector<8x1xf32>
    %17 = vector.broadcast %9 : vector<8x1xf32> to vector<8x32xf32>
    %18 = arith.subf %1, %17 : vector<8x32xf32>
    %cst_9 = arith.constant 9.99999974E-6 : f32
    %19 = vector.broadcast %cst_9 : f32 to vector<8x1xf32>
    %20 = arith.addf %16, %19 : vector<8x1xf32>
    %21 = math.rsqrt %20 : vector<8x1xf32>
    %22 = vector.broadcast %21 : vector<8x1xf32> to vector<8x32xf32>
    %23 = arith.mulf %18, %22 : vector<8x32xf32>
    %24 = vector.shape_cast %3 : vector<32xf32> to vector<1x32xf32>
    %25 = vector.broadcast %24 : vector<1x32xf32> to vector<8x32xf32>
    %26 = arith.mulf %23, %25 : vector<8x32xf32>
    %27 = vector.shape_cast %5 : vector<32xf32> to vector<1x32xf32>
    %28 = vector.broadcast %27 : vector<1x32xf32> to vector<8x32xf32>
    %29 = arith.addf %26, %28 : vector<8x32xf32>
    %30 = arith.truncf %29 : vector<8x32xf32> to vector<8x32xbf16>
    %c0_10 = arith.constant 0 : index
    %c0_11 = arith.constant 0 : index
    %31 = vector.load %arg5[%c0_10, %c0_11] : memref<32x96xbf16, #tpu.memory_space<vmem>>, vector<32x96xbf16>
    %cst_12 = arith.constant dense<0.000000e+00> : vector<8x96xf32>
    %32 = tpu.matmul %30, %31, %cst_12 {dimension_numbers = #tpu.dot_dimension_numbers<[1], [0], [0], [1], [0, 0, 1, 1], [], []>} : vector<8x32xbf16>, vector<32x96xbf16>, vector<8x96xf32> -> vector<8x96xf32>
    %c0_13 = arith.constant 0 : index
    %c0_14 = arith.constant 0 : index
    %33 = vector.load %arg6[%c0_13, %c0_14] : memref<1x96xf32, #tpu.memory_space<vmem>>, vector<1x96xf32>
    %34 = vector.shape_cast %33 : vector<1x96xf32> to vector<96xf32>
    %35 = vector.shape_cast %34 : vector<96xf32> to vector<1x96xf32>
    %36 = vector.broadcast %35 : vector<1x96xf32> to vector<8x96xf32>
    %37 = arith.addf %32, %36 : vector<8x96xf32>
    %38 = vector.extract_strided_slice %37 {offsets = [0, 0], sizes = [8, 32], strides = [1, 1]} : vector<8x96xf32> to vector<8x32xf32>
    %39 = vector.shape_cast %38 : vector<8x32xf32> to vector<8x1x32xf32>
    %40 = tpu.transpose %39, [1, 0, 2] : vector<8x1x32xf32> -> vector<1x8x32xf32>
    %41 = arith.truncf %40 : vector<1x8x32xf32> to vector<1x8x32xbf16>
    %c0_15 = arith.constant 0 : index
    %c0_16 = arith.constant 0 : index
    %c0_17 = arith.constant 0 : index
    %c0_18 = arith.constant 0 : index
    %42 = vector.load %arg7[%c0_15, %c0_16, %c0_17, %c0_18] : memref<1x1x8x32xbf16, #tpu.memory_space<vmem>>, vector<1x1x8x32xbf16>
    %43 = vector.shape_cast %42 : vector<1x1x8x32xbf16> to vector<1x8x32xbf16>
    %44 = vector.shape_cast %41 : vector<1x8x32xbf16> to vector<1x1x8x32xbf16>
    tpu.vector_store %arg7[%c0_15, %c0_16, %c0_17, %c0_18], %44 {strides = array<i32>} : memref<1x1x8x32xbf16, #tpu.memory_space<vmem>>, vector<1x1x8x32xbf16>,
    %45 = vector.extract_strided_slice %37 {offsets = [0, 32], sizes = [8, 32], strides = [1, 1]} : vector<8x96xf32> to vector<8x32xf32>
    %46 = vector.shape_cast %45 : vector<8x32xf32> to vector<8x1x32xf32>
    %47 = tpu.transpose %46, [1, 0, 2] : vector<8x1x32xf32> -> vector<1x8x32xf32>
    %48 = arith.truncf %47 : vector<1x8x32xf32> to vector<1x8x32xbf16>
    %c0_19 = arith.constant 0 : index
    %c0_20 = arith.constant 0 : index
    %c0_21 = arith.constant 0 : index
    %c0_22 = arith.constant 0 : index
    %49 = vector.load %arg8[%c0_19, %c0_20, %c0_21, %c0_22] : memref<1x1x8x32xbf16, #tpu.memory_space<vmem>>, vector<1x1x8x32xbf16>
    %50 = vector.shape_cast %49 : vector<1x1x8x32xbf16> to vector<1x8x32xbf16>
    %51 = vector.shape_cast %48 : vector<1x8x32xbf16> to vector<1x1x8x32xbf16>
    tpu.vector_store %arg8[%c0_19, %c0_20, %c0_21, %c0_22], %51 {strides = array<i32>} : memref<1x1x8x32xbf16, #tpu.memory_space<vmem>>, vector<1x1x8x32xbf16>,
    %52 = vector.extract_strided_slice %37 {offsets = [0, 64], sizes = [8, 32], strides = [1, 1]} : vector<8x96xf32> to vector<8x32xf32>
    %53 = vector.shape_cast %52 : vector<8x32xf32> to vector<8x1x32xf32>
    %54 = tpu.transpose %53, [1, 0, 2] : vector<8x1x32xf32> -> vector<1x8x32xf32>
    %55 = arith.truncf %54 : vector<1x8x32xf32> to vector<1x8x32xbf16>
    %c0_23 = arith.constant 0 : index
    %c0_24 = arith.constant 0 : index
    %c0_25 = arith.constant 0 : index
    %c0_26 = arith.constant 0 : index
    %56 = vector.load %arg9[%c0_23, %c0_24, %c0_25, %c0_26] : memref<1x1x8x32xbf16, #tpu.memory_space<vmem>>, vector<1x1x8x32xbf16>
    %57 = vector.shape_cast %56 : vector<1x1x8x32xbf16> to vector<1x8x32xbf16>
    %58 = vector.shape_cast %55 : vector<1x8x32xbf16> to vector<1x1x8x32xbf16>
    tpu.vector_store %arg9[%c0_23, %c0_24, %c0_25, %c0_26], %58 {strides = array<i32>} : memref<1x1x8x32xbf16, #tpu.memory_space<vmem>>, vector<1x1x8x32xbf16>,
    return
  }
  func.func @transform_0(%arg0: i32, %arg1: i32) -> (i32, i32, i32) {
    %c0_i32 = arith.constant 0 : i32
    %c0_i32_0 = arith.constant 0 : i32
    return %arg0, %arg1, %c0_i32 : i32, i32, i32
  }
  func.func @transform_1(%arg0: i32, %arg1: i32) -> (i32, i32) {
    %c0_i32 = arith.constant 0 : i32
    %c0_i32_0 = arith.constant 0 : i32
    %c0_i32_1 = arith.constant 0 : i32
    return %c0_i32, %c0_i32_0 : i32, i32
  }
  func.func @transform_2(%arg0: i32, %arg1: i32) -> (i32, i32) {
    %c0_i32 = arith.constant 0 : i32
    %c0_i32_0 = arith.constant 0 : i32
    %c0_i32_1 = arith.constant 0 : i32
    return %c0_i32, %c0_i32_0 : i32, i32
  }
  func.func @transform_3(%arg0: i32, %arg1: i32) -> (i32, i32) {
    %c0_i32 = arith.constant 0 : i32
    %c0_i32_0 = arith.constant 0 : i32
    %c0_i32_1 = arith.constant 0 : i32
    return %c0_i32, %c0_i32_0 : i32, i32
  }
  func.func @transform_4(%arg0: i32, %arg1: i32) -> (i32, i32) {
    %c0_i32 = arith.constant 0 : i32
    %c0_i32_0 = arith.constant 0 : i32
    %c0_i32_1 = arith.constant 0 : i32
    return %c0_i32, %c0_i32_0 : i32, i32
  }
  func.func @transform_5(%arg0: i32, %arg1: i32) -> (i32, i32, i32, i32) {
    %c0_i32 = arith.constant 0 : i32
    %c0_i32_0 = arith.constant 0 : i32
    %c0_i32_1 = arith.constant 0 : i32
    return %arg0, %c0_i32, %arg1, %c0_i32_0 : i32, i32, i32, i32
  }
  func.func @transform_6(%arg0: i32, %arg1: i32) -> (i32, i32, i32, i32) {
    %c0_i32 = arith.constant 0 : i32
    %c0_i32_0 = arith.constant 0 : i32
    %c0_i32_1 = arith.constant 0 : i32
    return %arg0, %c0_i32, %arg1, %c0_i32_0 : i32, i32, i32, i32
  }
  func.func @transform_7(%arg0: i32, %arg1: i32) -> (i32, i32, i32, i32) {
    %c0_i32 = arith.constant 0 : i32
    %c0_i32_0 = arith.constant 0 : i32
    %c0_i32_1 = arith.constant 0 : i32
    return %arg0, %c0_i32, %arg1, %c0_i32_0 : i32, i32, i32, i32
  }
}

module attributes {stable_mosaic.version = 11 : i64} {
  func.func @ffn_resident_kernel(%arg0: i32, %arg1: i32, %arg2: memref<1x8x32xf32, #tpu.memory_space<vmem>>, %arg3: memref<1x32xf32, #tpu.memory_space<vmem>>, %arg4: memref<1x32xf32, #tpu.memory_space<vmem>>, %arg5: memref<32x128xbf16, #tpu.memory_space<vmem>>, %arg6: memref<1x128xf32, #tpu.memory_space<vmem>>, %arg7: memref<128x32xbf16, #tpu.memory_space<vmem>>, %arg8: memref<1x32xf32, #tpu.memory_space<vmem>>, %arg9: memref<1x8x32xf32, #tpu.memory_space<vmem>>) attributes {dimension_semantics = [#tpu.dimension_semantics<parallel>, #tpu.dimension_semantics<parallel>], iteration_bounds = array<i64: 2, 1>, scalar_prefetch = 0 : i64, scratch_operands = 0 : i64, tpu.core_type = #tpu.core_type<tc>, window_params = [{transform_indices = @transform_0, window_bounds = array<i64: 1, 8, 32>}, {pipeline_mode = #tpu.pipeline_mode<synchronous>, transform_indices = @transform_1, window_bounds = array<i64: 1, 32>}, {pipeline_mode = #tpu.pipeline_mode<synchronous>, transform_indices = @transform_2, window_bounds = array<i64: 1, 32>}, {pipeline_mode = #tpu.pipeline_mode<synchronous>, transform_indices = @transform_3, window_bounds = array<i64: 32, 128>}, {pipeline_mode = #tpu.pipeline_mode<synchronous>, transform_indices = @transform_4, window_bounds = array<i64: 1, 128>}, {pipeline_mode = #tpu.pipeline_mode<synchronous>, transform_indices = @transform_5, window_bounds = array<i64: 128, 32>}, {pipeline_mode = #tpu.pipeline_mode<synchronous>, transform_indices = @transform_6, window_bounds = array<i64: 1, 32>}, {transform_indices = @transform_7, window_bounds = array<i64: 1, 8, 32>}]} {
    %c0 = arith.constant 0 : index
    %c0_0 = arith.constant 0 : index
    %c0_1 = arith.constant 0 : index
    %0 = vector.load %arg2[%c0, %c0_0, %c0_1] : memref<1x8x32xf32, #tpu.memory_space<vmem>>, vector<1x8x32xf32>
    %1 = vector.shape_cast %0 : vector<1x8x32xf32> to vector<8x32xf32>
    %c0_2 = arith.constant 0 : index
    %c0_3 = arith.constant 0 : index
    %2 = vector.load %arg3[%c0_2, %c0_3] : memref<1x32xf32, #tpu.memory_space<vmem>>, vector<1x32xf32>
    %3 = vector.shape_cast %2 : vector<1x32xf32> to vector<32xf32>
    %c0_4 = arith.constant 0 : index
    %c0_5 = arith.constant 0 : index
    %4 = vector.load %arg4[%c0_4, %c0_5] : memref<1x32xf32, #tpu.memory_space<vmem>>, vector<1x32xf32>
    %5 = vector.shape_cast %4 : vector<1x32xf32> to vector<32xf32>
    %cst = arith.constant dense<0.000000e+00> : vector<8xf32>
    %6 = vector.multi_reduction <add>, %1, %cst [1] : vector<8x32xf32> to vector<8xf32>
    %7 = vector.shape_cast %6 : vector<8xf32> to vector<8x1xf32>
    %cst_6 = arith.constant 3.200000e+01 : f32
    %8 = vector.broadcast %cst_6 : f32 to vector<8x1xf32>
    %9 = arith.divf %7, %8 : vector<8x1xf32>
    %10 = vector.broadcast %9 : vector<8x1xf32> to vector<8x32xf32>
    %11 = arith.subf %1, %10 : vector<8x32xf32>
    %12 = arith.mulf %11, %11 : vector<8x32xf32>
    %cst_7 = arith.constant dense<0.000000e+00> : vector<8xf32>
    %13 = vector.multi_reduction <add>, %12, %cst_7 [1] : vector<8x32xf32> to vector<8xf32>
    %14 = vector.shape_cast %13 : vector<8xf32> to vector<8x1xf32>
    %cst_8 = arith.constant 3.200000e+01 : f32
    %15 = vector.broadcast %cst_8 : f32 to vector<8x1xf32>
    %16 = arith.divf %14, %15 : vector<8x1xf32>
    %17 = vector.broadcast %9 : vector<8x1xf32> to vector<8x32xf32>
    %18 = arith.subf %1, %17 : vector<8x32xf32>
    %cst_9 = arith.constant 9.99999974E-6 : f32
    %19 = vector.broadcast %cst_9 : f32 to vector<8x1xf32>
    %20 = arith.addf %16, %19 : vector<8x1xf32>
    %21 = math.rsqrt %20 : vector<8x1xf32>
    %22 = vector.broadcast %21 : vector<8x1xf32> to vector<8x32xf32>
    %23 = arith.mulf %18, %22 : vector<8x32xf32>
    %24 = vector.shape_cast %3 : vector<32xf32> to vector<1x32xf32>
    %25 = vector.broadcast %24 : vector<1x32xf32> to vector<8x32xf32>
    %26 = arith.mulf %23, %25 : vector<8x32xf32>
    %27 = vector.shape_cast %5 : vector<32xf32> to vector<1x32xf32>
    %28 = vector.broadcast %27 : vector<1x32xf32> to vector<8x32xf32>
    %29 = arith.addf %26, %28 : vector<8x32xf32>
    %30 = arith.truncf %29 : vector<8x32xf32> to vector<8x32xbf16>
    %c0_10 = arith.constant 0 : index
    %c0_11 = arith.constant 0 : index
    %31 = vector.load %arg5[%c0_10, %c0_11] : memref<32x128xbf16, #tpu.memory_space<vmem>>, vector<32x128xbf16>
    %cst_12 = arith.constant dense<0.000000e+00> : vector<8x128xf32>
    %32 = tpu.matmul %30, %31, %cst_12 {dimension_numbers = #tpu.dot_dimension_numbers<[1], [0], [0], [1], [0, 0, 1, 1], [], []>} : vector<8x32xbf16>, vector<32x128xbf16>, vector<8x128xf32> -> vector<8x128xf32>
    %c0_13 = arith.constant 0 : index
    %c0_14 = arith.constant 0 : index
    %33 = vector.load %arg6[%c0_13, %c0_14] : memref<1x128xf32, #tpu.memory_space<vmem>>, vector<1x128xf32>
    %34 = vector.shape_cast %33 : vector<1x128xf32> to vector<128xf32>
    %35 = vector.shape_cast %34 : vector<128xf32> to vector<1x128xf32>
    %36 = vector.broadcast %35 : vector<1x128xf32> to vector<8x128xf32>
    %37 = arith.addf %32, %36 : vector<8x128xf32>
    %cst_15 = arith.constant 0.000000e+00 : f32
    %38 = vector.broadcast %cst_15 : f32 to vector<8x128xf32>
    %39 = arith.maximumf %37, %38 : vector<8x128xf32>
    %c0_16 = arith.constant 0 : index
    %c0_17 = arith.constant 0 : index
    %40 = vector.load %arg8[%c0_16, %c0_17] : memref<1x32xf32, #tpu.memory_space<vmem>>, vector<1x32xf32>
    %41 = vector.shape_cast %40 : vector<1x32xf32> to vector<32xf32>
    %42 = vector.shape_cast %41 : vector<32xf32> to vector<1x32xf32>
    %43 = vector.broadcast %42 : vector<1x32xf32> to vector<8x32xf32>
    %44 = arith.addf %1, %43 : vector<8x32xf32>
    %45 = arith.truncf %39 : vector<8x128xf32> to vector<8x128xbf16>
    %c0_18 = arith.constant 0 : index
    %c0_19 = arith.constant 0 : index
    %46 = vector.load %arg7[%c0_18, %c0_19] : memref<128x32xbf16, #tpu.memory_space<vmem>>, vector<128x32xbf16>
    %cst_20 = arith.constant dense<0.000000e+00> : vector<8x32xf32>
    %47 = tpu.matmul %45, %46, %cst_20 {dimension_numbers = #tpu.dot_dimension_numbers<[1], [0], [0], [1], [0, 0, 1, 1], [], []>} : vector<8x128xbf16>, vector<128x32xbf16>, vector<8x32xf32> -> vector<8x32xf32>
    %48 = arith.addf %44, %47 : vector<8x32xf32>
    %c0_21 = arith.constant 0 : index
    %c0_22 = arith.constant 0 : index
    %c0_23 = arith.constant 0 : index
    %49 = vector.load %arg9[%c0_21, %c0_22, %c0_23] : memref<1x8x32xf32, #tpu.memory_space<vmem>>, vector<1x8x32xf32>
    %50 = vector.shape_cast %49 : vector<1x8x32xf32> to vector<8x32xf32>
    %51 = vector.shape_cast %48 : vector<8x32xf32> to vector<1x8x32xf32>
    tpu.vector_store %arg9[%c0_21, %c0_22, %c0_23], %51 {strides = array<i32>} : memref<1x8x32xf32, #tpu.memory_space<vmem>>, vector<1x8x32xf32>,
    return
  }
  func.func @transform_0(%arg0: i32, %arg1: i32) -> (i32, i32, i32) {
    %c0_i32 = arith.constant 0 : i32
    %c0_i32_0 = arith.constant 0 : i32
    return %arg0, %arg1, %c0_i32 : i32, i32, i32
  }
  func.func @transform_1(%arg0: i32, %arg1: i32) -> (i32, i32) {
    %c0_i32 = arith.constant 0 : i32
    %c0_i32_0 = arith.constant 0 : i32
    %c0_i32_1 = arith.constant 0 : i32
    return %c0_i32, %c0_i32_0 : i32, i32
  }
  func.func @transform_2(%arg0: i32, %arg1: i32) -> (i32, i32) {
    %c0_i32 = arith.constant 0 : i32
    %c0_i32_0 = arith.constant 0 : i32
    %c0_i32_1 = arith.constant 0 : i32
    return %c0_i32, %c0_i32_0 : i32, i32
  }
  func.func @transform_3(%arg0: i32, %arg1: i32) -> (i32, i32) {
    %c0_i32 = arith.constant 0 : i32
    %c0_i32_0 = arith.constant 0 : i32
    %c0_i32_1 = arith.constant 0 : i32
    return %c0_i32, %c0_i32_0 : i32, i32
  }
  func.func @transform_4(%arg0: i32, %arg1: i32) -> (i32, i32) {
    %c0_i32 = arith.constant 0 : i32
    %c0_i32_0 = arith.constant 0 : i32
    %c0_i32_1 = arith.constant 0 : i32
    return %c0_i32, %c0_i32_0 : i32, i32
  }
  func.func @transform_5(%arg0: i32, %arg1: i32) -> (i32, i32) {
    %c0_i32 = arith.constant 0 : i32
    %c0_i32_0 = arith.constant 0 : i32
    %c0_i32_1 = arith.constant 0 : i32
    return %c0_i32, %c0_i32_0 : i32, i32
  }
  func.func @transform_6(%arg0: i32, %arg1: i32) -> (i32, i32) {
    %c0_i32 = arith.constant 0 : i32
    %c0_i32_0 = arith.constant 0 : i32
    %c0_i32_1 = arith.constant 0 : i32
    return %c0_i32, %c0_i32_0 : i32, i32
  }
  func.func @transform_7(%arg0: i32, %arg1: i32) -> (i32, i32, i32) {
    %c0_i32 = arith.constant 0 : i32
    %c0_i32_0 = arith.constant 0 : i32
    return %arg0, %arg1, %c0_i32 : i32, i32, i32
  }
}

module attributes {stable_mosaic.version = 11 : i64} {
  func.func @flash_attention_kernel(%arg0: i32, %arg1: i32, %arg2: i32, %arg3: memref<1x1x8x32xbf16, #tpu.memory_space<vmem>>, %arg4: memref<1x1x8x32xbf16, #tpu.memory_space<vmem>>, %arg5: memref<1x1x8x32xbf16, #tpu.memory_space<vmem>>, %arg6: memref<1x8x8xf32, #tpu.memory_space<vmem>>, %arg7: memref<1x8x32xf32, #tpu.memory_space<vmem>>, %arg8: memref<32x32xbf16, #tpu.memory_space<vmem>>, %arg9: memref<1x32xf32, #tpu.memory_space<vmem>>, %arg10: memref<1x8x32xf32, #tpu.memory_space<vmem>>, %arg11: memref<1x8x1xf32, #tpu.memory_space<vmem>>, %arg12: memref<1x8x1xf32, #tpu.memory_space<vmem>>, %arg13: memref<1x8x32xf32, #tpu.memory_space<vmem>>) attributes {dimension_semantics = [#tpu.dimension_semantics<parallel>, #tpu.dimension_semantics<parallel>, #tpu.dimension_semantics<arbitrary>], iteration_bounds = array<i64: 2, 1, 1>, scalar_prefetch = 0 : i64, scratch_operands = 3 : i64, tpu.core_type = #tpu.core_type<tc>, window_params = [{transform_indices = @transform_0, window_bounds = array<i64: 1, 1, 8, 32>}, {transform_indices = @transform_1, window_bounds = array<i64: 1, 1, 8, 32>}, {transform_indices = @transform_2, window_bounds = array<i64: 1, 1, 8, 32>}, {transform_indices = @transform_3, window_bounds = array<i64: 1, 8, 8>}, {transform_indices = @transform_4, window_bounds = array<i64: 1, 8, 32>}, {pipeline_mode = #tpu.pipeline_mode<synchronous>, transform_indices = @transform_5, window_bounds = array<i64: 32, 32>}, {pipeline_mode = #tpu.pipeline_mode<synchronous>, transform_indices = @transform_6, window_bounds = array<i64: 1, 32>}, {transform_indices = @transform_7, window_bounds = array<i64: 1, 8, 32>}]} {
    %c0_i32 = arith.constant 0 : i32
    %0 = arith.cmpi eq, %arg2, %c0_i32 : i32
    %1 = arith.extui %0 : i1 to i32
    %c0_i32_0 = arith.constant 0 : i32
    %2 = arith.cmpi ne, %1, %c0_i32_0 : i32
    scf.if %2 {
      %cst_39 = arith.constant -1.000000e+30 : f32
      %42 = vector.broadcast %cst_39 : f32 to vector<1x8x1xf32>
      %c0_40 = arith.constant 0 : index
      %c0_41 = arith.constant 0 : index
      %c0_42 = arith.constant 0 : index
      %43 = vector.load %arg11[%c0_40, %c0_41, %c0_42] : memref<1x8x1xf32, #tpu.memory_space<vmem>>, vector<1x8x1xf32>
      tpu.vector_store %arg11[%c0_40, %c0_41, %c0_42], %42 {strides = array<i32>} : memref<1x8x1xf32, #tpu.memory_space<vmem>>, vector<1x8x1xf32>,
      %cst_43 = arith.constant 0.000000e+00 : f32
      %44 = vector.broadcast %cst_43 : f32 to vector<1x8x1xf32>
      %c0_44 = arith.constant 0 : index
      %c0_45 = arith.constant 0 : index
      %c0_46 = arith.constant 0 : index
      %45 = vector.load %arg12[%c0_44, %c0_45, %c0_46] : memref<1x8x1xf32, #tpu.memory_space<vmem>>, vector<1x8x1xf32>
      tpu.vector_store %arg12[%c0_44, %c0_45, %c0_46], %44 {strides = array<i32>} : memref<1x8x1xf32, #tpu.memory_space<vmem>>, vector<1x8x1xf32>,
      %cst_47 = arith.constant 0.000000e+00 : f32
      %46 = vector.broadcast %cst_47 : f32 to vector<1x8x32xf32>
      %c0_48 = arith.constant 0 : index
      %c0_49 = arith.constant 0 : index
      %c0_50 = arith.constant 0 : index
      %47 = vector.load %arg13[%c0_48, %c0_49, %c0_50] : memref<1x8x32xf32, #tpu.memory_space<vmem>>, vector<1x8x32xf32>
      tpu.vector_store %arg13[%c0_48, %c0_49, %c0_50], %46 {strides = array<i32>} : memref<1x8x32xf32, #tpu.memory_space<vmem>>, vector<1x8x32xf32>,
    } else {
    }
    %c0 = arith.constant 0 : index
    %c0_1 = arith.constant 0 : index
    %c0_2 = arith.constant 0 : index
    %c0_3 = arith.constant 0 : index
    %3 = vector.load %arg3[%c0, %c0_1, %c0_2, %c0_3] : memref<1x1x8x32xbf16, #tpu.memory_space<vmem>>, vector<1x1x8x32xbf16>
    %4 = vector.shape_cast %3 : vector<1x1x8x32xbf16> to vector<1x8x32xbf16>
    %c0_4 = arith.constant 0 : index
    %c0_5 = arith.constant 0 : index
    %c0_6 = arith.constant 0 : index
    %c0_7 = arith.constant 0 : index
    %5 = vector.load %arg4[%c0_4, %c0_5, %c0_6, %c0_7] : memref<1x1x8x32xbf16, #tpu.memory_space<vmem>>, vector<1x1x8x32xbf16>
    %6 = vector.shape_cast %5 : vector<1x1x8x32xbf16> to vector<1x8x32xbf16>
    %c0_8 = arith.constant 0 : index
    %c0_9 = arith.constant 0 : index
    %c0_10 = arith.constant 0 : index
    %c0_11 = arith.constant 0 : index
    %7 = vector.load %arg5[%c0_8, %c0_9, %c0_10, %c0_11] : memref<1x1x8x32xbf16, #tpu.memory_space<vmem>>, vector<1x1x8x32xbf16>
    %8 = vector.shape_cast %7 : vector<1x1x8x32xbf16> to vector<1x8x32xbf16>
    "tpu.trace_start"() <{level = 10 : i32, message = "hqd,hkd->hqk"}> : () -> ()
    %cst = arith.constant dense<0.000000e+00> : vector<1x8x8xf32>
    %9 = tpu.matmul %4, %6, %cst {dimension_numbers = #tpu.dot_dimension_numbers<[2], [2], [1], [1], [0, 0, 0, 1, 1, 1], [0], [0]>} : vector<1x8x32xbf16>, vector<1x8x32xbf16>, vector<1x8x8xf32> -> vector<1x8x8xf32>
    "tpu.trace_stop"() : () -> ()
    %cst_12 = arith.constant 0.176776692 : f32
    %10 = vector.broadcast %cst_12 : f32 to vector<1x8x8xf32>
    %11 = arith.mulf %9, %10 : vector<1x8x8xf32>
    %c0_13 = arith.constant 0 : index
    %c0_14 = arith.constant 0 : index
    %c0_15 = arith.constant 0 : index
    %12 = vector.load %arg6[%c0_13, %c0_14, %c0_15] : memref<1x8x8xf32, #tpu.memory_space<vmem>>, vector<1x8x8xf32>
    %13 = vector.shape_cast %12 : vector<1x8x8xf32> to vector<8x8xf32>
    %14 = vector.shape_cast %13 : vector<8x8xf32> to vector<1x8x8xf32>
    %15 = arith.addf %11, %14 : vector<1x8x8xf32>
    %c0_16 = arith.constant 0 : index
    %c0_17 = arith.constant 0 : index
    %c0_18 = arith.constant 0 : index
    %16 = vector.load %arg11[%c0_16, %c0_17, %c0_18] : memref<1x8x1xf32, #tpu.memory_space<vmem>>, vector<1x8x1xf32>
    %cst_19 = arith.constant dense<0xFF800000> : vector<1x8xf32>
    %17 = vector.multi_reduction <maximumf>, %15, %cst_19 [2] : vector<1x8x8xf32> to vector<1x8xf32>
    %18 = vector.shape_cast %17 : vector<1x8xf32> to vector<1x8x1xf32>
    %19 = arith.maximumf %16, %18 : vector<1x8x1xf32>
    %20 = arith.subf %16, %19 : vector<1x8x1xf32>
    %21 = math.exp %20 : vector<1x8x1xf32>
    %22 = vector.broadcast %19 : vector<1x8x1xf32> to vector<1x8x8xf32>
    %23 = arith.subf %15, %22 : vector<1x8x8xf32>
    %24 = math.exp %23 : vector<1x8x8xf32>
    %c0_20 = arith.constant 0 : index
    %c0_21 = arith.constant 0 : index
    %c0_22 = arith.constant 0 : index
    %25 = vector.load %arg12[%c0_20, %c0_21, %c0_22] : memref<1x8x1xf32, #tpu.memory_space<vmem>>, vector<1x8x1xf32>
    %26 = arith.mulf %21, %25 : vector<1x8x1xf32>
    %cst_23 = arith.constant dense<0.000000e+00> : vector<1x8xf32>
    %27 = vector.multi_reduction <add>, %24, %cst_23 [2] : vector<1x8x8xf32> to vector<1x8xf32>
    %28 = vector.shape_cast %27 : vector<1x8xf32> to vector<1x8x1xf32>
    %29 = arith.addf %26, %28 : vector<1x8x1xf32>
    %c0_24 = arith.constant 0 : index
    %c0_25 = arith.constant 0 : index
    %c0_26 = arith.constant 0 : index
    %30 = vector.load %arg12[%c0_24, %c0_25, %c0_26] : memref<1x8x1xf32, #tpu.memory_space<vmem>>, vector<1x8x1xf32>
    tpu.vector_store %arg12[%c0_24, %c0_25, %c0_26], %29 {strides = array<i32>} : memref<1x8x1xf32, #tpu.memory_space<vmem>>, vector<1x8x1xf32>,
    %c0_27 = arith.constant 0 : index
    %c0_28 = arith.constant 0 : index
    %c0_29 = arith.constant 0 : index
    %31 = vector.load %arg13[%c0_27, %c0_28, %c0_29] : memref<1x8x32xf32, #tpu.memory_space<vmem>>, vector<1x8x32xf32>
    %32 = vector.broadcast %21 : vector<1x8x1xf32> to vector<1x8x32xf32>
    %33 = arith.mulf %32, %31 : vector<1x8x32xf32>
    %34 = arith.truncf %24 : vector<1x8x8xf32> to vector<1x8x8xbf16>
    "tpu.trace_start"() <{level = 10 : i32, message = "hqk,hkd->hqd"}> : () -> ()
    %cst_30 = arith.constant dense<0.000000e+00> : vector<1x8x32xf32>
    %35 = tpu.matmul %34, %8, %cst_30 {dimension_numbers = #tpu.dot_dimension_numbers<[2], [1], [1], [2], [0, 0, 0, 1, 1, 2], [0], [0]>} : vector<1x8x8xbf16>, vector<1x8x32xbf16>, vector<1x8x32xf32> -> vector<1x8x32xf32>
    "tpu.trace_stop"() : () -> ()
    %36 = arith.addf %33, %35 : vector<1x8x32xf32>
    %c0_31 = arith.constant 0 : index
    %c0_32 = arith.constant 0 : index
    %c0_33 = arith.constant 0 : index
    %37 = vector.load %arg13[%c0_31, %c0_32, %c0_33] : memref<1x8x32xf32, #tpu.memory_space<vmem>>, vector<1x8x32xf32>
    tpu.vector_store %arg13[%c0_31, %c0_32, %c0_33], %36 {strides = array<i32>} : memref<1x8x32xf32, #tpu.memory_space<vmem>>, vector<1x8x32xf32>,
    %c0_34 = arith.constant 0 : index
    %c0_35 = arith.constant 0 : index
    %c0_36 = arith.constant 0 : index
    %38 = vector.load %arg11[%c0_34, %c0_35, %c0_36] : memref<1x8x1xf32, #tpu.memory_space<vmem>>, vector<1x8x1xf32>
    tpu.vector_store %arg11[%c0_34, %c0_35, %c0_36], %19 {strides = array<i32>} : memref<1x8x1xf32, #tpu.memory_space<vmem>>, vector<1x8x1xf32>,
    %c0_i32_37 = arith.constant 0 : i32
    %39 = arith.cmpi eq, %arg2, %c0_i32_37 : i32
    %40 = arith.extui %39 : i1 to i32
    %c0_i32_38 = arith.constant 0 : i32
    %41 = arith.cmpi ne, %40, %c0_i32_38 : i32
    scf.if %41 {
      %c0_39 = arith.constant 0 : index
      %c0_40 = arith.constant 0 : index
      %c0_41 = arith.constant 0 : index
      %42 = vector.load %arg13[%c0_39, %c0_40, %c0_41] : memref<1x8x32xf32, #tpu.memory_space<vmem>>, vector<1x8x32xf32>
      %c0_42 = arith.constant 0 : index
      %c0_43 = arith.constant 0 : index
      %c0_44 = arith.constant 0 : index
      %43 = vector.load %arg12[%c0_42, %c0_43, %c0_44] : memref<1x8x1xf32, #tpu.memory_space<vmem>>, vector<1x8x1xf32>
      %44 = tpu.reciprocal %43 {approx = true} : vector<1x8x1xf32> -> vector<1x8x1xf32>
      %45 = vector.broadcast %44 : vector<1x8x1xf32> to vector<1x8x32xf32>
      %46 = arith.mulf %42, %45 : vector<1x8x32xf32>
      %47 = tpu.transpose %46, [1, 0, 2] : vector<1x8x32xf32> -> vector<8x1x32xf32>
      %48 = vector.shape_cast %47 : vector<8x1x32xf32> to vector<8x32xf32>
      %49 = arith.truncf %48 : vector<8x32xf32> to vector<8x32xbf16>
      %c0_45 = arith.constant 0 : index
      %c0_46 = arith.constant 0 : index
      %50 = vector.load %arg8[%c0_45, %c0_46] : memref<32x32xbf16, #tpu.memory_space<vmem>>, vector<32x32xbf16>
      %cst_47 = arith.constant dense<0.000000e+00> : vector<8x32xf32>
      %51 = tpu.matmul %49, %50, %cst_47 {dimension_numbers = #tpu.dot_dimension_numbers<[1], [0], [0], [1], [0, 0, 1, 1], [], []>} : vector<8x32xbf16>, vector<32x32xbf16>, vector<8x32xf32> -> vector<8x32xf32>
      %c0_48 = arith.constant 0 : index
      %c0_49 = arith.constant 0 : index
      %52 = vector.load %arg9[%c0_48, %c0_49] : memref<1x32xf32, #tpu.memory_space<vmem>>, vector<1x32xf32>
      %53 = vector.shape_cast %52 : vector<1x32xf32> to vector<32xf32>
      %54 = vector.shape_cast %53 : vector<32xf32> to vector<1x32xf32>
      %55 = vector.broadcast %54 : vector<1x32xf32> to vector<8x32xf32>
      %56 = arith.addf %51, %55 : vector<8x32xf32>
      %c0_50 = arith.constant 0 : index
      %c0_51 = arith.constant 0 : index
      %c0_52 = arith.constant 0 : index
      %57 = vector.load %arg7[%c0_50, %c0_51, %c0_52] : memref<1x8x32xf32, #tpu.memory_space<vmem>>, vector<1x8x32xf32>
      %58 = vector.shape_cast %57 : vector<1x8x32xf32> to vector<8x32xf32>
      %59 = arith.addf %56, %58 : vector<8x32xf32>
      %c0_53 = arith.constant 0 : index
      %c0_54 = arith.constant 0 : index
      %c0_55 = arith.constant 0 : index
      %60 = vector.load %arg10[%c0_53, %c0_54, %c0_55] : memref<1x8x32xf32, #tpu.memory_space<vmem>>, vector<1x8x32xf32>
      %61 = vector.shape_cast %60 : vector<1x8x32xf32> to vector<8x32xf32>
      %62 = vector.shape_cast %59 : vector<8x32xf32> to vector<1x8x32xf32>
      tpu.vector_store %arg10[%c0_53, %c0_54, %c0_55], %62 {strides = array<i32>} : memref<1x8x32xf32, #tpu.memory_space<vmem>>, vector<1x8x32xf32>,
    } else {
    }
    return
  }
  func.func @transform_0(%arg0: i32, %arg1: i32, %arg2: i32) -> (i32, i32, i32, i32) {
    %c0_i32 = arith.constant 0 : i32
    %c0_i32_0 = arith.constant 0 : i32
    %c0_i32_1 = arith.constant 0 : i32
    return %arg0, %c0_i32, %arg1, %c0_i32_0 : i32, i32, i32, i32
  }
  func.func @transform_1(%arg0: i32, %arg1: i32, %arg2: i32) -> (i32, i32, i32, i32) {
    %c0_i32 = arith.constant 0 : i32
    %c0_i32_0 = arith.constant 0 : i32
    %c0_i32_1 = arith.constant 0 : i32
    return %arg0, %c0_i32, %arg2, %c0_i32_0 : i32, i32, i32, i32
  }
  func.func @transform_2(%arg0: i32, %arg1: i32, %arg2: i32) -> (i32, i32, i32, i32) {
    %c0_i32 = arith.constant 0 : i32
    %c0_i32_0 = arith.constant 0 : i32
    %c0_i32_1 = arith.constant 0 : i32
    return %arg0, %c0_i32, %arg2, %c0_i32_0 : i32, i32, i32, i32
  }
  func.func @transform_3(%arg0: i32, %arg1: i32, %arg2: i32) -> (i32, i32, i32) {
    %c0_i32 = arith.constant 0 : i32
    return %arg0, %arg1, %arg2 : i32, i32, i32
  }
  func.func @transform_4(%arg0: i32, %arg1: i32, %arg2: i32) -> (i32, i32, i32) {
    %c0_i32 = arith.constant 0 : i32
    %c0_i32_0 = arith.constant 0 : i32
    return %arg0, %arg1, %c0_i32 : i32, i32, i32
  }
  func.func @transform_5(%arg0: i32, %arg1: i32, %arg2: i32) -> (i32, i32) {
    %c0_i32 = arith.constant 0 : i32
    %c0_i32_0 = arith.constant 0 : i32
    %c0_i32_1 = arith.constant 0 : i32
    return %c0_i32, %c0_i32_0 : i32, i32
  }
  func.func @transform_6(%arg0: i32, %arg1: i32, %arg2: i32) -> (i32, i32) {
    %c0_i32 = arith.constant 0 : i32
    %c0_i32_0 = arith.constant 0 : i32
    %c0_i32_1 = arith.constant 0 : i32
    return %c0_i32, %c0_i32_0 : i32, i32
  }
  func.func @transform_7(%arg0: i32, %arg1: i32, %arg2: i32) -> (i32, i32, i32) {
    %c0_i32 = arith.constant 0 : i32
    %c0_i32_0 = arith.constant 0 : i32
    return %arg0, %arg1, %c0_i32 : i32, i32, i32
  }
}

module attributes {stable_mosaic.version = 11 : i64} {
  func.func @qkv_projection_kernel(%arg0: i32, %arg1: i32, %arg2: memref<1x8x32xf32, #tpu.memory_space<vmem>>, %arg3: memref<1x32xf32, #tpu.memory_space<vmem>>, %arg4: memref<1x32xf32, #tpu.memory_space<vmem>>, %arg5: memref<32x96xbf16, #tpu.memory_space<vmem>>, %arg6: memref<1x96xf32, #tpu.memory_space<vmem>>, %arg7: memref<1x2x8x16xbf16, #tpu.memory_space<vmem>>, %arg8: memref<1x2x8x16xbf16, #tpu.memory_space<vmem>>, %arg9: memref<1x2x8x16xbf16, #tpu.memory_space<vmem>>) attributes {dimension_semantics = [#tpu.dimension_semantics<parallel>, #tpu.dimension_semantics<parallel>], iteration_bounds = array<i64: 2, 1>, scalar_prefetch = 0 : i64, scratch_operands = 0 : i64, tpu.core_type = #tpu.core_type<tc>, window_params = [{transform_indices = @transform_0, window_bounds = array<i64: 1, 8, 32>}, {pipeline_mode = #tpu.pipeline_mode<synchronous>, transform_indices = @transform_1, window_bounds = array<i64: 1, 32>}, {pipeline_mode = #tpu.pipeline_mode<synchronous>, transform_indices = @transform_2, window_bounds = array<i64: 1, 32>}, {pipeline_mode = #tpu.pipeline_mode<synchronous>, transform_indices = @transform_3, window_bounds = array<i64: 32, 96>}, {pipeline_mode = #tpu.pipeline_mode<synchronous>, transform_indices = @transform_4, window_bounds = array<i64: 1, 96>}, {transform_indices = @transform_5, window_bounds = array<i64: 1, 2, 8, 16>}, {transform_indices = @transform_6, window_bounds = array<i64: 1, 2, 8, 16>}, {transform_indices = @transform_7, window_bounds = array<i64: 1, 2, 8, 16>}]} {
    %c0 = arith.constant 0 : index
    %c0_0 = arith.constant 0 : index
    %c0_1 = arith.constant 0 : index
    %0 = vector.load %arg2[%c0, %c0_0, %c0_1] : memref<1x8x32xf32, #tpu.memory_space<vmem>>, vector<1x8x32xf32>
    %1 = vector.shape_cast %0 : vector<1x8x32xf32> to vector<8x32xf32>
    %c0_2 = arith.constant 0 : index
    %c0_3 = arith.constant 0 : index
    %2 = vector.load %arg3[%c0_2, %c0_3] : memref<1x32xf32, #tpu.memory_space<vmem>>, vector<1x32xf32>
    %3 = vector.shape_cast %2 : vector<1x32xf32> to vector<32xf32>
    %c0_4 = arith.constant 0 : index
    %c0_5 = arith.constant 0 : index
    %4 = vector.load %arg4[%c0_4, %c0_5] : memref<1x32xf32, #tpu.memory_space<vmem>>, vector<1x32xf32>
    %5 = vector.shape_cast %4 : vector<1x32xf32> to vector<32xf32>
    %cst = arith.constant dense<0.000000e+00> : vector<8xf32>
    %6 = vector.multi_reduction <add>, %1, %cst [1] : vector<8x32xf32> to vector<8xf32>
    %7 = vector.shape_cast %6 : vector<8xf32> to vector<8x1xf32>
    %cst_6 = arith.constant 3.200000e+01 : f32
    %8 = vector.broadcast %cst_6 : f32 to vector<8x1xf32>
    %9 = arith.divf %7, %8 : vector<8x1xf32>
    %10 = vector.broadcast %9 : vector<8x1xf32> to vector<8x32xf32>
    %11 = arith.subf %1, %10 : vector<8x32xf32>
    %12 = arith.mulf %11, %11 : vector<8x32xf32>
    %cst_7 = arith.constant dense<0.000000e+00> : vector<8xf32>
    %13 = vector.multi_reduction <add>, %12, %cst_7 [1] : vector<8x32xf32> to vector<8xf32>
    %14 = vector.shape_cast %13 : vector<8xf32> to vector<8x1xf32>
    %cst_8 = arith.constant 3.200000e+01 : f32
    %15 = vector.broadcast %cst_8 : f32 to vector<8x1xf32>
    %16 = arith.divf %14, %15 : vector<8x1xf32>
    %17 = vector.broadcast %9 : vector<8x1xf32> to vector<8x32xf32>
    %18 = arith.subf %1, %17 : vector<8x32xf32>
    %cst_9 = arith.constant 9.99999974E-6 : f32
    %19 = vector.broadcast %cst_9 : f32 to vector<8x1xf32>
    %20 = arith.addf %16, %19 : vector<8x1xf32>
    %21 = math.rsqrt %20 : vector<8x1xf32>
    %22 = vector.broadcast %21 : vector<8x1xf32> to vector<8x32xf32>
    %23 = arith.mulf %18, %22 : vector<8x32xf32>
    %24 = vector.shape_cast %3 : vector<32xf32> to vector<1x32xf32>
    %25 = vector.broadcast %24 : vector<1x32xf32> to vector<8x32xf32>
    %26 = arith.mulf %23, %25 : vector<8x32xf32>
    %27 = vector.shape_cast %5 : vector<32xf32> to vector<1x32xf32>
    %28 = vector.broadcast %27 : vector<1x32xf32> to vector<8x32xf32>
    %29 = arith.addf %26, %28 : vector<8x32xf32>
    %30 = arith.truncf %29 : vector<8x32xf32> to vector<8x32xbf16>
    %c0_10 = arith.constant 0 : index
    %c0_11 = arith.constant 0 : index
    %31 = vector.load %arg5[%c0_10, %c0_11] : memref<32x96xbf16, #tpu.memory_space<vmem>>, vector<32x96xbf16>
    %cst_12 = arith.constant dense<0.000000e+00> : vector<8x96xf32>
    %32 = tpu.matmul %30, %31, %cst_12 {dimension_numbers = #tpu.dot_dimension_numbers<[1], [0], [0], [1], [0, 0, 1, 1], [], []>} : vector<8x32xbf16>, vector<32x96xbf16>, vector<8x96xf32> -> vector<8x96xf32>
    %c0_13 = arith.constant 0 : index
    %c0_14 = arith.constant 0 : index
    %33 = vector.load %arg6[%c0_13, %c0_14] : memref<1x96xf32, #tpu.memory_space<vmem>>, vector<1x96xf32>
    %34 = vector.shape_cast %33 : vector<1x96xf32> to vector<96xf32>
    %35 = vector.shape_cast %34 : vector<96xf32> to vector<1x96xf32>
    %36 = vector.broadcast %35 : vector<1x96xf32> to vector<8x96xf32>
    %37 = arith.addf %32, %36 : vector<8x96xf32>
    %38 = vector.extract_strided_slice %37 {offsets = [0, 0], sizes = [8, 32], strides = [1, 1]} : vector<8x96xf32> to vector<8x32xf32>
    %39 = vector.shape_cast %38 : vector<8x32xf32> to vector<8x2x16xf32>
    %40 = tpu.transpose %39, [1, 0, 2] : vector<8x2x16xf32> -> vector<2x8x16xf32>
    %41 = arith.truncf %40 : vector<2x8x16xf32> to vector<2x8x16xbf16>
    %c0_15 = arith.constant 0 : index
    %c0_16 = arith.constant 0 : index
    %c0_17 = arith.constant 0 : index
    %c0_18 = arith.constant 0 : index
    %42 = vector.load %arg7[%c0_15, %c0_16, %c0_17, %c0_18] : memref<1x2x8x16xbf16, #tpu.memory_space<vmem>>, vector<1x2x8x16xbf16>
    %43 = vector.shape_cast %42 : vector<1x2x8x16xbf16> to vector<2x8x16xbf16>
    %44 = vector.shape_cast %41 : vector<2x8x16xbf16> to vector<1x2x8x16xbf16>
    tpu.vector_store %arg7[%c0_15, %c0_16, %c0_17, %c0_18], %44 {strides = array<i32>} : memref<1x2x8x16xbf16, #tpu.memory_space<vmem>>, vector<1x2x8x16xbf16>,
    %45 = vector.extract_strided_slice %37 {offsets = [0, 32], sizes = [8, 32], strides = [1, 1]} : vector<8x96xf32> to vector<8x32xf32>
    %46 = vector.shape_cast %45 : vector<8x32xf32> to vector<8x2x16xf32>
    %47 = tpu.transpose %46, [1, 0, 2] : vector<8x2x16xf32> -> vector<2x8x16xf32>
    %48 = arith.truncf %47 : vector<2x8x16xf32> to vector<2x8x16xbf16>
    %c0_19 = arith.constant 0 : index
    %c0_20 = arith.constant 0 : index
    %c0_21 = arith.constant 0 : index
    %c0_22 = arith.constant 0 : index
    %49 = vector.load %arg8[%c0_19, %c0_20, %c0_21, %c0_22] : memref<1x2x8x16xbf16, #tpu.memory_space<vmem>>, vector<1x2x8x16xbf16>
    %50 = vector.shape_cast %49 : vector<1x2x8x16xbf16> to vector<2x8x16xbf16>
    %51 = vector.shape_cast %48 : vector<2x8x16xbf16> to vector<1x2x8x16xbf16>
    tpu.vector_store %arg8[%c0_19, %c0_20, %c0_21, %c0_22], %51 {strides = array<i32>} : memref<1x2x8x16xbf16, #tpu.memory_space<vmem>>, vector<1x2x8x16xbf16>,
    %52 = vector.extract_strided_slice %37 {offsets = [0, 64], sizes = [8, 32], strides = [1, 1]} : vector<8x96xf32> to vector<8x32xf32>
    %53 = vector.shape_cast %52 : vector<8x32xf32> to vector<8x2x16xf32>
    %54 = tpu.transpose %53, [1, 0, 2] : vector<8x2x16xf32> -> vector<2x8x16xf32>
    %55 = arith.truncf %54 : vector<2x8x16xf32> to vector<2x8x16xbf16>
    %c0_23 = arith.constant 0 : index
    %c0_24 = arith.constant 0 : index
    %c0_25 = arith.constant 0 : index
    %c0_26 = arith.constant 0 : index
    %56 = vector.load %arg9[%c0_23, %c0_24, %c0_25, %c0_26] : memref<1x2x8x16xbf16, #tpu.memory_space<vmem>>, vector<1x2x8x16xbf16>
    %57 = vector.shape_cast %56 : vector<1x2x8x16xbf16> to vector<2x8x16xbf16>
    %58 = vector.shape_cast %55 : vector<2x8x16xbf16> to vector<1x2x8x16xbf16>
    tpu.vector_store %arg9[%c0_23, %c0_24, %c0_25, %c0_26], %58 {strides = array<i32>} : memref<1x2x8x16xbf16, #tpu.memory_space<vmem>>, vector<1x2x8x16xbf16>,
    return
  }
  func.func @transform_0(%arg0: i32, %arg1: i32) -> (i32, i32, i32) {
    %c0_i32 = arith.constant 0 : i32
    %c0_i32_0 = arith.constant 0 : i32
    return %arg0, %arg1, %c0_i32 : i32, i32, i32
  }
  func.func @transform_1(%arg0: i32, %arg1: i32) -> (i32, i32) {
    %c0_i32 = arith.constant 0 : i32
    %c0_i32_0 = arith.constant 0 : i32
    %c0_i32_1 = arith.constant 0 : i32
    return %c0_i32, %c0_i32_0 : i32, i32
  }
  func.func @transform_2(%arg0: i32, %arg1: i32) -> (i32, i32) {
    %c0_i32 = arith.constant 0 : i32
    %c0_i32_0 = arith.constant 0 : i32
    %c0_i32_1 = arith.constant 0 : i32
    return %c0_i32, %c0_i32_0 : i32, i32
  }
  func.func @transform_3(%arg0: i32, %arg1: i32) -> (i32, i32) {
    %c0_i32 = arith.constant 0 : i32
    %c0_i32_0 = arith.constant 0 : i32
    %c0_i32_1 = arith.constant 0 : i32
    return %c0_i32, %c0_i32_0 : i32, i32
  }
  func.func @transform_4(%arg0: i32, %arg1: i32) -> (i32, i32) {
    %c0_i32 = arith.constant 0 : i32
    %c0_i32_0 = arith.constant 0 : i32
    %c0_i32_1 = arith.constant 0 : i32
    return %c0_i32, %c0_i32_0 : i32, i32
  }
  func.func @transform_5(%arg0: i32, %arg1: i32) -> (i32, i32, i32, i32) {
    %c0_i32 = arith.constant 0 : i32
    %c0_i32_0 = arith.constant 0 : i32
    %c0_i32_1 = arith.constant 0 : i32
    return %arg0, %c0_i32, %arg1, %c0_i32_0 : i32, i32, i32, i32
  }
  func.func @transform_6(%arg0: i32, %arg1: i32) -> (i32, i32, i32, i32) {
    %c0_i32 = arith.constant 0 : i32
    %c0_i32_0 = arith.constant 0 : i32
    %c0_i32_1 = arith.constant 0 : i32
    return %arg0, %c0_i32, %arg1, %c0_i32_0 : i32, i32, i32, i32
  }
  func.func @transform_7(%arg0: i32, %arg1: i32) -> (i32, i32, i32, i32) {
    %c0_i32 = arith.constant 0 : i32
    %c0_i32_0 = arith.constant 0 : i32
    %c0_i32_1 = arith.constant 0 : i32
    return %arg0, %c0_i32, %arg1, %c0_i32_0 : i32, i32, i32, i32
  }
}

module attributes {stable_mosaic.version = 11 : i64} {
  func.func @flash_attention_kernel(%arg0: i32, %arg1: i32, %arg2: i32, %arg3: memref<1x2x8x16xbf16, #tpu.memory_space<vmem>>, %arg4: memref<1x2x8x16xbf16, #tpu.memory_space<vmem>>, %arg5: memref<1x2x8x16xbf16, #tpu.memory_space<vmem>>, %arg6: memref<1x8x8xf32, #tpu.memory_space<vmem>>, %arg7: memref<1x8x32xf32, #tpu.memory_space<vmem>>, %arg8: memref<32x32xbf16, #tpu.memory_space<vmem>>, %arg9: memref<1x32xf32, #tpu.memory_space<vmem>>, %arg10: memref<1x8x32xf32, #tpu.memory_space<vmem>>, %arg11: memref<2x8x1xf32, #tpu.memory_space<vmem>>, %arg12: memref<2x8x1xf32, #tpu.memory_space<vmem>>, %arg13: memref<2x8x16xf32, #tpu.memory_space<vmem>>) attributes {dimension_semantics = [#tpu.dimension_semantics<parallel>, #tpu.dimension_semantics<parallel>, #tpu.dimension_semantics<arbitrary>], iteration_bounds = array<i64: 2, 1, 1>, scalar_prefetch = 0 : i64, scratch_operands = 3 : i64, tpu.core_type = #tpu.core_type<tc>, window_params = [{transform_indices = @transform_0, window_bounds = array<i64: 1, 2, 8, 16>}, {transform_indices = @transform_1, window_bounds = array<i64: 1, 2, 8, 16>}, {transform_indices = @transform_2, window_bounds = array<i64: 1, 2, 8, 16>}, {transform_indices = @transform_3, window_bounds = array<i64: 1, 8, 8>}, {transform_indices = @transform_4, window_bounds = array<i64: 1, 8, 32>}, {pipeline_mode = #tpu.pipeline_mode<synchronous>, transform_indices = @transform_5, window_bounds = array<i64: 32, 32>}, {pipeline_mode = #tpu.pipeline_mode<synchronous>, transform_indices = @transform_6, window_bounds = array<i64: 1, 32>}, {transform_indices = @transform_7, window_bounds = array<i64: 1, 8, 32>}]} {
    %c0_i32 = arith.constant 0 : i32
    %0 = arith.cmpi eq, %arg2, %c0_i32 : i32
    %1 = arith.extui %0 : i1 to i32
    %c0_i32_0 = arith.constant 0 : i32
    %2 = arith.cmpi ne, %1, %c0_i32_0 : i32
    scf.if %2 {
      %cst_39 = arith.constant -1.000000e+30 : f32
      %43 = vector.broadcast %cst_39 : f32 to vector<2x8x1xf32>
      %c0_40 = arith.constant 0 : index
      %c0_41 = arith.constant 0 : index
      %c0_42 = arith.constant 0 : index
      %44 = vector.load %arg11[%c0_40, %c0_41, %c0_42] : memref<2x8x1xf32, #tpu.memory_space<vmem>>, vector<2x8x1xf32>
      tpu.vector_store %arg11[%c0_40, %c0_41, %c0_42], %43 {strides = array<i32>} : memref<2x8x1xf32, #tpu.memory_space<vmem>>, vector<2x8x1xf32>,
      %cst_43 = arith.constant 0.000000e+00 : f32
      %45 = vector.broadcast %cst_43 : f32 to vector<2x8x1xf32>
      %c0_44 = arith.constant 0 : index
      %c0_45 = arith.constant 0 : index
      %c0_46 = arith.constant 0 : index
      %46 = vector.load %arg12[%c0_44, %c0_45, %c0_46] : memref<2x8x1xf32, #tpu.memory_space<vmem>>, vector<2x8x1xf32>
      tpu.vector_store %arg12[%c0_44, %c0_45, %c0_46], %45 {strides = array<i32>} : memref<2x8x1xf32, #tpu.memory_space<vmem>>, vector<2x8x1xf32>,
      %cst_47 = arith.constant 0.000000e+00 : f32
      %47 = vector.broadcast %cst_47 : f32 to vector<2x8x16xf32>
      %c0_48 = arith.constant 0 : index
      %c0_49 = arith.constant 0 : index
      %c0_50 = arith.constant 0 : index
      %48 = vector.load %arg13[%c0_48, %c0_49, %c0_50] : memref<2x8x16xf32, #tpu.memory_space<vmem>>, vector<2x8x16xf32>
      tpu.vector_store %arg13[%c0_48, %c0_49, %c0_50], %47 {strides = array<i32>} : memref<2x8x16xf32, #tpu.memory_space<vmem>>, vector<2x8x16xf32>,
    } else {
    }
    %c0 = arith.constant 0 : index
    %c0_1 = arith.constant 0 : index
    %c0_2 = arith.constant 0 : index
    %c0_3 = arith.constant 0 : index
    %3 = vector.load %arg3[%c0, %c0_1, %c0_2, %c0_3] : memref<1x2x8x16xbf16, #tpu.memory_space<vmem>>, vector<1x2x8x16xbf16>
    %4 = vector.shape_cast %3 : vector<1x2x8x16xbf16> to vector<2x8x16xbf16>
    %c0_4 = arith.constant 0 : index
    %c0_5 = arith.constant 0 : index
    %c0_6 = arith.constant 0 : index
    %c0_7 = arith.constant 0 : index
    %5 = vector.load %arg4[%c0_4, %c0_5, %c0_6, %c0_7] : memref<1x2x8x16xbf16, #tpu.memory_space<vmem>>, vector<1x2x8x16xbf16>
    %6 = vector.shape_cast %5 : vector<1x2x8x16xbf16> to vector<2x8x16xbf16>
    %c0_8 = arith.constant 0 : index
    %c0_9 = arith.constant 0 : index
    %c0_10 = arith.constant 0 : index
    %c0_11 = arith.constant 0 : index
    %7 = vector.load %arg5[%c0_8, %c0_9, %c0_10, %c0_11] : memref<1x2x8x16xbf16, #tpu.memory_space<vmem>>, vector<1x2x8x16xbf16>
    %8 = vector.shape_cast %7 : vector<1x2x8x16xbf16> to vector<2x8x16xbf16>
    "tpu.trace_start"() <{level = 10 : i32, message = "hqd,hkd->hqk"}> : () -> ()
    %cst = arith.constant dense<0.000000e+00> : vector<2x8x8xf32>
    %9 = tpu.matmul %4, %6, %cst {dimension_numbers = #tpu.dot_dimension_numbers<[2], [2], [1], [1], [0, 0, 0, 1, 1, 1], [0], [0]>} : vector<2x8x16xbf16>, vector<2x8x16xbf16>, vector<2x8x8xf32> -> vector<2x8x8xf32>
    "tpu.trace_stop"() : () -> ()
    %cst_12 = arith.constant 2.500000e-01 : f32
    %10 = vector.broadcast %cst_12 : f32 to vector<2x8x8xf32>
    %11 = arith.mulf %9, %10 : vector<2x8x8xf32>
    %c0_13 = arith.constant 0 : index
    %c0_14 = arith.constant 0 : index
    %c0_15 = arith.constant 0 : index
    %12 = vector.load %arg6[%c0_13, %c0_14, %c0_15] : memref<1x8x8xf32, #tpu.memory_space<vmem>>, vector<1x8x8xf32>
    %13 = vector.shape_cast %12 : vector<1x8x8xf32> to vector<8x8xf32>
    %14 = vector.shape_cast %13 : vector<8x8xf32> to vector<1x8x8xf32>
    %15 = vector.broadcast %14 : vector<1x8x8xf32> to vector<2x8x8xf32>
    %16 = arith.addf %11, %15 : vector<2x8x8xf32>
    %c0_16 = arith.constant 0 : index
    %c0_17 = arith.constant 0 : index
    %c0_18 = arith.constant 0 : index
    %17 = vector.load %arg11[%c0_16, %c0_17, %c0_18] : memref<2x8x1xf32, #tpu.memory_space<vmem>>, vector<2x8x1xf32>
    %cst_19 = arith.constant dense<0xFF800000> : vector<2x8xf32>
    %18 = vector.multi_reduction <maximumf>, %16, %cst_19 [2] : vector<2x8x8xf32> to vector<2x8xf32>
    %19 = vector.shape_cast %18 : vector<2x8xf32> to vector<2x8x1xf32>
    %20 = arith.maximumf %17, %19 : vector<2x8x1xf32>
    %21 = arith.subf %17, %20 : vector<2x8x1xf32>
    %22 = math.exp %21 : vector<2x8x1xf32>
    %23 = vector.broadcast %20 : vector<2x8x1xf32> to vector<2x8x8xf32>
    %24 = arith.subf %16, %23 : vector<2x8x8xf32>
    %25 = math.exp %24 : vector<2x8x8xf32>
    %c0_20 = arith.constant 0 : index
    %c0_21 = arith.constant 0 : index
    %c0_22 = arith.constant 0 : index
    %26 = vector.load %arg12[%c0_20, %c0_21, %c0_22] : memref<2x8x1xf32, #tpu.memory_space<vmem>>, vector<2x8x1xf32>
    %27 = arith.mulf %22, %26 : vector<2x8x1xf32>
    %cst_23 = arith.constant dense<0.000000e+00> : vector<2x8xf32>
    %28 = vector.multi_reduction <add>, %25, %cst_23 [2] : vector<2x8x8xf32> to vector<2x8xf32>
    %29 = vector.shape_cast %28 : vector<2x8xf32> to vector<2x8x1xf32>
    %30 = arith.addf %27, %29 : vector<2x8x1xf32>
    %c0_24 = arith.constant 0 : index
    %c0_25 = arith.constant 0 : index
    %c0_26 = arith.constant 0 : index
    %31 = vector.load %arg12[%c0_24, %c0_25, %c0_26] : memref<2x8x1xf32, #tpu.memory_space<vmem>>, vector<2x8x1xf32>
    tpu.vector_store %arg12[%c0_24, %c0_25, %c0_26], %30 {strides = array<i32>} : memref<2x8x1xf32, #tpu.memory_space<vmem>>, vector<2x8x1xf32>,
    %c0_27 = arith.constant 0 : index
    %c0_28 = arith.constant 0 : index
    %c0_29 = arith.constant 0 : index
    %32 = vector.load %arg13[%c0_27, %c0_28, %c0_29] : memref<2x8x16xf32, #tpu.memory_space<vmem>>, vector<2x8x16xf32>
    %33 = vector.broadcast %22 : vector<2x8x1xf32> to vector<2x8x16xf32>
    %34 = arith.mulf %33, %32 : vector<2x8x16xf32>
    %35 = arith.truncf %25 : vector<2x8x8xf32> to vector<2x8x8xbf16>
    "tpu.trace_start"() <{level = 10 : i32, message = "hqk,hkd->hqd"}> : () -> ()
    %cst_30 = arith.constant dense<0.000000e+00> : vector<2x8x16xf32>
    %36 = tpu.matmul %35, %8, %cst_30 {dimension_numbers = #tpu.dot_dimension_numbers<[2], [1], [1], [2], [0, 0, 0, 1, 1, 2], [0], [0]>} : vector<2x8x8xbf16>, vector<2x8x16xbf16>, vector<2x8x16xf32> -> vector<2x8x16xf32>
    "tpu.trace_stop"() : () -> ()
    %37 = arith.addf %34, %36 : vector<2x8x16xf32>
    %c0_31 = arith.constant 0 : index
    %c0_32 = arith.constant 0 : index
    %c0_33 = arith.constant 0 : index
    %38 = vector.load %arg13[%c0_31, %c0_32, %c0_33] : memref<2x8x16xf32, #tpu.memory_space<vmem>>, vector<2x8x16xf32>
    tpu.vector_store %arg13[%c0_31, %c0_32, %c0_33], %37 {strides = array<i32>} : memref<2x8x16xf32, #tpu.memory_space<vmem>>, vector<2x8x16xf32>,
    %c0_34 = arith.constant 0 : index
    %c0_35 = arith.constant 0 : index
    %c0_36 = arith.constant 0 : index
    %39 = vector.load %arg11[%c0_34, %c0_35, %c0_36] : memref<2x8x1xf32, #tpu.memory_space<vmem>>, vector<2x8x1xf32>
    tpu.vector_store %arg11[%c0_34, %c0_35, %c0_36], %20 {strides = array<i32>} : memref<2x8x1xf32, #tpu.memory_space<vmem>>, vector<2x8x1xf32>,
    %c0_i32_37 = arith.constant 0 : i32
    %40 = arith.cmpi eq, %arg2, %c0_i32_37 : i32
    %41 = arith.extui %40 : i1 to i32
    %c0_i32_38 = arith.constant 0 : i32
    %42 = arith.cmpi ne, %41, %c0_i32_38 : i32
    scf.if %42 {
      %c0_39 = arith.constant 0 : index
      %c0_40 = arith.constant 0 : index
      %c0_41 = arith.constant 0 : index
      %43 = vector.load %arg13[%c0_39, %c0_40, %c0_41] : memref<2x8x16xf32, #tpu.memory_space<vmem>>, vector<2x8x16xf32>
      %c0_42 = arith.constant 0 : index
      %c0_43 = arith.constant 0 : index
      %c0_44 = arith.constant 0 : index
      %44 = vector.load %arg12[%c0_42, %c0_43, %c0_44] : memref<2x8x1xf32, #tpu.memory_space<vmem>>, vector<2x8x1xf32>
      %45 = tpu.reciprocal %44 {approx = true} : vector<2x8x1xf32> -> vector<2x8x1xf32>
      %46 = vector.broadcast %45 : vector<2x8x1xf32> to vector<2x8x16xf32>
      %47 = arith.mulf %43, %46 : vector<2x8x16xf32>
      %48 = tpu.transpose %47, [1, 0, 2] : vector<2x8x16xf32> -> vector<8x2x16xf32>
      %49 = vector.shape_cast %48 : vector<8x2x16xf32> to vector<8x32xf32>
      %50 = arith.truncf %49 : vector<8x32xf32> to vector<8x32xbf16>
      %c0_45 = arith.constant 0 : index
      %c0_46 = arith.constant 0 : index
      %51 = vector.load %arg8[%c0_45, %c0_46] : memref<32x32xbf16, #tpu.memory_space<vmem>>, vector<32x32xbf16>
      %cst_47 = arith.constant dense<0.000000e+00> : vector<8x32xf32>
      %52 = tpu.matmul %50, %51, %cst_47 {dimension_numbers = #tpu.dot_dimension_numbers<[1], [0], [0], [1], [0, 0, 1, 1], [], []>} : vector<8x32xbf16>, vector<32x32xbf16>, vector<8x32xf32> -> vector<8x32xf32>
      %c0_48 = arith.constant 0 : index
      %c0_49 = arith.constant 0 : index
      %53 = vector.load %arg9[%c0_48, %c0_49] : memref<1x32xf32, #tpu.memory_space<vmem>>, vector<1x32xf32>
      %54 = vector.shape_cast %53 : vector<1x32xf32> to vector<32xf32>
      %55 = vector.shape_cast %54 : vector<32xf32> to vector<1x32xf32>
      %56 = vector.broadcast %55 : vector<1x32xf32> to vector<8x32xf32>
      %57 = arith.addf %52, %56 : vector<8x32xf32>
      %c0_50 = arith.constant 0 : index
      %c0_51 = arith.constant 0 : index
      %c0_52 = arith.constant 0 : index
      %58 = vector.load %arg7[%c0_50, %c0_51, %c0_52] : memref<1x8x32xf32, #tpu.memory_space<vmem>>, vector<1x8x32xf32>
      %59 = vector.shape_cast %58 : vector<1x8x32xf32> to vector<8x32xf32>
      %60 = arith.addf %57, %59 : vector<8x32xf32>
      %c0_53 = arith.constant 0 : index
      %c0_54 = arith.constant 0 : index
      %c0_55 = arith.constant 0 : index
      %61 = vector.load %arg10[%c0_53, %c0_54, %c0_55] : memref<1x8x32xf32, #tpu.memory_space<vmem>>, vector<1x8x32xf32>
      %62 = vector.shape_cast %61 : vector<1x8x32xf32> to vector<8x32xf32>
      %63 = vector.shape_cast %60 : vector<8x32xf32> to vector<1x8x32xf32>
      tpu.vector_store %arg10[%c0_53, %c0_54, %c0_55], %63 {strides = array<i32>} : memref<1x8x32xf32, #tpu.memory_space<vmem>>, vector<1x8x32xf32>,
    } else {
    }
    return
  }
  func.func @transform_0(%arg0: i32, %arg1: i32, %arg2: i32) -> (i32, i32, i32, i32) {
    %c0_i32 = arith.constant 0 : i32
    %c0_i32_0 = arith.constant 0 : i32
    %c0_i32_1 = arith.constant 0 : i32
    return %arg0, %c0_i32, %arg1, %c0_i32_0 : i32, i32, i32, i32
  }
  func.func @transform_1(%arg0: i32, %arg1: i32, %arg2: i32) -> (i32, i32, i32, i32) {
    %c0_i32 = arith.constant 0 : i32
    %c0_i32_0 = arith.constant 0 : i32
    %c0_i32_1 = arith.constant 0 : i32
    return %arg0, %c0_i32, %arg2, %c0_i32_0 : i32, i32, i32, i32
  }
  func.func @transform_2(%arg0: i32, %arg1: i32, %arg2: i32) -> (i32, i32, i32, i32) {
    %c0_i32 = arith.constant 0 : i32
    %c0_i32_0 = arith.constant 0 : i32
    %c0_i32_1 = arith.constant 0 : i32
    return %arg0, %c0_i32, %arg2, %c0_i32_0 : i32, i32, i32, i32
  }
  func.func @transform_3(%arg0: i32, %arg1: i32, %arg2: i32) -> (i32, i32, i32) {
    %c0_i32 = arith.constant 0 : i32
    return %arg0, %arg1, %arg2 : i32, i32, i32
  }
  func.func @transform_4(%arg0: i32, %arg1: i32, %arg2: i32) -> (i32, i32, i32) {
    %c0_i32 = arith.constant 0 : i32
    %c0_i32_0 = arith.constant 0 : i32
    return %arg0, %arg1, %c0_i32 : i32, i32, i32
  }
  func.func @transform_5(%arg0: i32, %arg1: i32, %arg2: i32) -> (i32, i32) {
    %c0_i32 = arith.constant 0 : i32
    %c0_i32_0 = arith.constant 0 : i32
    %c0_i32_1 = arith.constant 0 : i32
    return %c0_i32, %c0_i32_0 : i32, i32
  }
  func.func @transform_6(%arg0: i32, %arg1: i32, %arg2: i32) -> (i32, i32) {
    %c0_i32 = arith.constant 0 : i32
    %c0_i32_0 = arith.constant 0 : i32
    %c0_i32_1 = arith.constant 0 : i32
    return %c0_i32, %c0_i32_0 : i32, i32
  }
  func.func @transform_7(%arg0: i32, %arg1: i32, %arg2: i32) -> (i32, i32, i32) {
    %c0_i32 = arith.constant 0 : i32
    %c0_i32_0 = arith.constant 0 : i32
    return %arg0, %arg1, %c0_i32 : i32, i32, i32
  }
}

module attributes {stable_mosaic.version = 11 : i64} {
  func.func @fc_out_kernel(%arg0: i32, %arg1: i32, %arg2: i32, %arg3: memref<1x8x32xbf16, #tpu.memory_space<vmem>>, %arg4: memref<32x128xbf16, #tpu.memory_space<vmem>>, %arg5: memref<1x128xf32, #tpu.memory_space<vmem>>, %arg6: memref<1x8x128xf32, #tpu.memory_space<vmem>>) attributes {dimension_semantics = [#tpu.dimension_semantics<parallel>, #tpu.dimension_semantics<parallel>, #tpu.dimension_semantics<parallel>], iteration_bounds = array<i64: 2, 1, 1>, scalar_prefetch = 0 : i64, scratch_operands = 0 : i64, tpu.core_type = #tpu.core_type<tc>, window_params = [{transform_indices = @transform_0, window_bounds = array<i64: 1, 8, 32>}, {transform_indices = @transform_1, window_bounds = array<i64: 32, 128>}, {transform_indices = @transform_2, window_bounds = array<i64: 1, 128>}, {transform_indices = @transform_3, window_bounds = array<i64: 1, 8, 128>}]} {
    %c0 = arith.constant 0 : index
    %c0_0 = arith.constant 0 : index
    %c0_1 = arith.constant 0 : index
    %0 = vector.load %arg3[%c0, %c0_0, %c0_1] : memref<1x8x32xbf16, #tpu.memory_space<vmem>>, vector<1x8x32xbf16>
    %1 = vector.shape_cast %0 : vector<1x8x32xbf16> to vector<8x32xbf16>
    %c0_2 = arith.constant 0 : index
    %c0_3 = arith.constant 0 : index
    %2 = vector.load %arg4[%c0_2, %c0_3] : memref<32x128xbf16, #tpu.memory_space<vmem>>, vector<32x128xbf16>
    %cst = arith.constant dense<0.000000e+00> : vector<8x128xf32>
    %3 = tpu.matmul %1, %2, %cst {dimension_numbers = #tpu.dot_dimension_numbers<[1], [0], [0], [1], [0, 0, 1, 1], [], []>} : vector<8x32xbf16>, vector<32x128xbf16>, vector<8x128xf32> -> vector<8x128xf32>
    %c0_4 = arith.constant 0 : index
    %c0_5 = arith.constant 0 : index
    %4 = vector.load %arg5[%c0_4, %c0_5] : memref<1x128xf32, #tpu.memory_space<vmem>>, vector<1x128xf32>
    %5 = vector.shape_cast %4 : vector<1x128xf32> to vector<128xf32>
    %6 = vector.shape_cast %5 : vector<128xf32> to vector<1x128xf32>
    %7 = vector.broadcast %6 : vector<1x128xf32> to vector<8x128xf32>
    %8 = arith.addf %3, %7 : vector<8x128xf32>
    %c0_6 = arith.constant 0 : index
    %c0_7 = arith.constant 0 : index
    %c0_8 = arith.constant 0 : index
    %9 = vector.load %arg6[%c0_6, %c0_7, %c0_8] : memref<1x8x128xf32, #tpu.memory_space<vmem>>, vector<1x8x128xf32>
    %10 = vector.shape_cast %9 : vector<1x8x128xf32> to vector<8x128xf32>
    %11 = vector.shape_cast %8 : vector<8x128xf32> to vector<1x8x128xf32>
    tpu.vector_store %arg6[%c0_6, %c0_7, %c0_8], %11 {strides = array<i32>} : memref<1x8x128xf32, #tpu.memory_space<vmem>>, vector<1x8x128xf32>,
    return
  }
  func.func @transform_0(%arg0: i32, %arg1: i32, %arg2: i32) -> (i32, i32, i32) {
    %c0_i32 = arith.constant 0 : i32
    %c0_i32_0 = arith.constant 0 : i32
    return %arg0, %arg1, %c0_i32 : i32, i32, i32
  }
  func.func @transform_1(%arg0: i32, %arg1: i32, %arg2: i32) -> (i32, i32) {
    %c0_i32 = arith.constant 0 : i32
    %c0_i32_0 = arith.constant 0 : i32
    return %c0_i32, %arg2 : i32, i32
  }
  func.func @transform_2(%arg0: i32, %arg1: i32, %arg2: i32) -> (i32, i32) {
    %c0_i32 = arith.constant 0 : i32
    %c0_i32_0 = arith.constant 0 : i32
    return %c0_i32, %arg2 : i32, i32
  }
  func.func @transform_3(%arg0: i32, %arg1: i32, %arg2: i32) -> (i32, i32, i32) {
    %c0_i32 = arith.constant 0 : i32
    return %arg0, %arg1, %arg2 : i32, i32, i32
  }
}

</mosaic_0001>

<llo_original>
// kernel: tpu_custom_call.1
$region0: #{tpu_custom_call.1}
  #allocation0 [shape = 'u32[]', space=smem, size = 0x4, offset = 0x4, fixed_abs, tag = 'smem constant byte address 0x4 - core index']
  #allocation1 [shape = 'u32[144,128]{1,0:T(1,128)}', space=vmem, size = 0x12000, scoped, tag = 'internal scratch']
  %s0 = inlined_call_operand.hbm [shape: f32[8,128], index: 0, kind: input, shape index: {}]
  %s1 = inlined_call_operand.hbm [shape: f32[8,128], index: 1, kind: output, shape index: {}]
  %s2 = sld [smem:[#allocation0]]
  $region41: #{tpu_custom_call.1} parent=0
    _
  %s4 = ssub.s32 1, %s2
  %s5 = scalar_select 0, %s4, %s2
  $region1: #{tpu_custom_call.1} parent=0
    #allocation2 [shape = 'u8[4096]{0}', space=vmem, size = 0x1000, scoped, tag = 'input window, operand 0, single buffered']
    #allocation3 [shape = 's32[2]{0}', space=sflag, size = 0x8, scoped, tag = 'scoped memory for tpu_custom_call.1']
    #allocation4 [shape = 's32[2]{0}', space=sflag, size = 0x8, scoped, tag = 'scoped memory for tpu_custom_call.1']
    #allocation5 [shape = 'u8[4096]{0}', space=vmem, size = 0x1000, scoped, tag = 'output window, operand 0, single buffered']
    %6 = vsyncpa [#allocation3], 0
    %7 = vsyncpa [#allocation4], 0
    loop: start=0, step=1, limit=4
    $region2: #{tpu_custom_call.1} parent=1 // loop_pre_header
      _
    $region3: #{tpu_custom_call.1} parent=1 // loop_header
      %s9 = sphi 0, %s13
      %p10 = scmp.ge.s32.totalorder %s9, 4
      %s17 = sphi 0, %s17
      %s19 = sphi 0, %s17
      %s20 = sphi 0, %s19
      %s34 = sphi 0, %s20
      %s38 = sphi 0, %s38
      %s40 = sphi 0, %s38
      %s41 = sphi 0, %s40
      %s55 = sphi 0, %s41
    $region4: #{tpu_custom_call.1} parent=1 // loop_header_branch
      %12 = sbr.rel (%p10) target = $region8
    $region5: #{tpu_custom_call.1} parent=1 // loop_body
      %s14 = ssub.s32 %s9, 1
      %s15 = ssub.s32 %s9, 2
      %s16 = sadd.s32 %s9, 1
      %s18 = sadd.s32 %s17, 1
      %p21 = scmp.eq.s32.totalorder %s9, 1
      %p22 = scmp.ne.s32.totalorder %s17, %s19
      %p23 = scmp.eq.s32.totalorder %s9, 0
      %p24 = por %p22, %p23
      %p25 = scmp.ne.s32.totalorder %s17, %s19
      %p26 = scmp.eq.s32.totalorder %s14, 1
      %p27 = por %p25, %p26
      %p28 = scmp.ne.s32.totalorder %s19, %s20
      %p29 = scmp.eq.s32.totalorder %s14, 0
      %p30 = por %p28, %p29
      %p31 = scmp.ne.s32.totalorder %s19, %s20
      %p32 = scmp.eq.s32.totalorder %s15, 1
      %p33 = por %p31, %p32
      %p35 = scmp.ne.s32.totalorder %s20, %s34
      %p36 = scmp.eq.s32.totalorder %s15, 0
      %p37 = por %p35, %p36
      %s39 = sadd.s32 %s38, 1
      %p42 = scmp.eq.s32.totalorder %s9, 1
      %p43 = scmp.ne.s32.totalorder %s38, %s40
      %p44 = scmp.eq.s32.totalorder %s9, 0
      %p45 = por %p43, %p44
      %p46 = scmp.ne.s32.totalorder %s38, %s40
      %p47 = scmp.eq.s32.totalorder %s14, 1
      %p48 = por %p46, %p47
      %p49 = scmp.ne.s32.totalorder %s40, %s41
      %p50 = scmp.eq.s32.totalorder %s14, 0
      %p51 = por %p49, %p50
      %p52 = scmp.ne.s32.totalorder %s40, %s41
      %p53 = scmp.eq.s32.totalorder %s15, 1
      %p54 = por %p52, %p53
      %p56 = scmp.ne.s32.totalorder %s41, %s55
      %p57 = scmp.eq.s32.totalorder %s15, 0
      %p58 = por %p56, %p57
      %p59 = scmp.le.s32.totalorder 1, %s9
      %p60 = scmp.lt.s32.totalorder %s9, 3
      %p61 = pnand %p59, %p60
      %p62 = pneg %p61
      // Predicated region
      $region9: #{tpu_custom_call.1} parent=5 // pred_check
        _
      $region10: #{tpu_custom_call.1} parent=5 // pred_check_branch
        %64 = sbr.rel (%p61) target = $region12
      $region11: #{tpu_custom_call.1} parent=5 // pred_region
        %s65 = ssub.s32 %s9, 1
        // Predicated region
        $region13: #{tpu_custom_call.1} parent=11 // pred_check
          %p66 = pneg %p30
        $region14: #{tpu_custom_call.1} parent=11 // pred_check_branch
          %68 = sbr.rel (%p66) target = $region16
        $region15: #{tpu_custom_call.1} parent=11 // pred_region
          %s70 = ssub.s32 128, 128
          %71 = vsyncadd [#allocation3], %s70
          %s73 = sshll.u32 [#allocation2], 4
          %s74 = int_to_ptr.vmem [resolvable:$true] %s73
          %76 = dma.hbm_to_vmem [thread:$0]  %s0, 128, %s74, [#allocation3]
        $region16: #{tpu_custom_call.1} parent=11 // pred_fallthru
          _
      $region12: #{tpu_custom_call.1} parent=5 // pred_fallthru
        _
      %p77 = scmp.lt.s32.totalorder %s9, 2
      // Predicated region
      $region17: #{tpu_custom_call.1} parent=5 // pred_check
        %p78 = pneg %p77
      $region18: #{tpu_custom_call.1} parent=5 // pred_check_branch
        %80 = sbr.rel (%p78) target = $region20
      $region19: #{tpu_custom_call.1} parent=5 // pred_region
        _
      $region20: #{tpu_custom_call.1} parent=5 // pred_fallthru
        _
      %p81 = scmp.le.s32.totalorder 1, %s9
      %p82 = scmp.lt.s32.totalorder %s9, 3
      %p83 = pnand %p81, %p82
      %p84 = pneg %p83
      // Predicated region
      $region21: #{tpu_custom_call.1} parent=5 // pred_check
        _
      $region22: #{tpu_custom_call.1} parent=5 // pred_check_branch
        %86 = sbr.rel (%p83) target = $region24
      $region23: #{tpu_custom_call.1} parent=5 // pred_region
        %s87 = ssub.s32 %s9, 1
        // Predicated region
        $region25: #{tpu_custom_call.1} parent=23 // pred_check
          %p88 = pneg %p30
        $region26: #{tpu_custom_call.1} parent=23 // pred_check_branch
          %90 = sbr.rel (%p88) target = $region28
        $region27: #{tpu_custom_call.1} parent=23 // pred_region
          %91 = dma.done [#allocation3], 128
        $region28: #{tpu_custom_call.1} parent=23 // pred_fallthru
          _
        %p92 = pneg %p30
        %p93 = pneg %p27
        %p94 = pneg %p51
        %p95 = pneg %p48
        %v96 = vld [vmem:[#allocation2] sm:$0xff]
        %v97 = vadd.f32 %v96, 1.0
        %98 = vst [vmem:[#allocation5] sm:$0xff] %v97
        // Predicated region
        $region29: #{tpu_custom_call.1} parent=23 // pred_check
          %p99 = pneg %p48
        $region30: #{tpu_custom_call.1} parent=23 // pred_check_branch
          %101 = sbr.rel (%p99) target = $region32
        $region31: #{tpu_custom_call.1} parent=23 // pred_region
          %s103 = ssub.s32 128, 128
          %104 = vsyncadd [#allocation4], %s103
          %s106 = sshll.u32 [#allocation5], 4
          %s107 = int_to_ptr.vmem [resolvable:$true] %s106
          %109 = dma.vmem_to_hbm [thread:$0]  %s107, 128, %s1, [#allocation4]
        $region32: #{tpu_custom_call.1} parent=23 // pred_fallthru
          _
        // Predicated region
        $region33: #{tpu_custom_call.1} parent=23 // pred_check
          %p110 = pneg %p48
        $region34: #{tpu_custom_call.1} parent=23 // pred_check_branch
          %112 = sbr.rel (%p110) target = $region36
        $region35: #{tpu_custom_call.1} parent=23 // pred_region
          %113 = dma.done [#allocation4], 128
        $region36: #{tpu_custom_call.1} parent=23 // pred_fallthru
          _
      $region24: #{tpu_custom_call.1} parent=5 // pred_fallthru
        _
      %p114 = scmp.le.s32.totalorder 2, %s9
      // Predicated region
      $region37: #{tpu_custom_call.1} parent=5 // pred_check
        %p115 = pneg %p114
      $region38: #{tpu_custom_call.1} parent=5 // pred_check_branch
        %117 = sbr.rel (%p115) target = $region40
      $region39: #{tpu_custom_call.1} parent=5 // pred_region
        %s118 = ssub.s32 %s9, 2
      $region40: #{tpu_custom_call.1} parent=5 // pred_fallthru
        _
    $region6: #{tpu_custom_call.1} parent=1 // loop_footer
      %s13 = sadd.s32 1, %s9
    $region7: #{tpu_custom_call.1} parent=1 // loop_footer_branch
      %8 = sbr.rel target = $region3
    $region8: #{tpu_custom_call.1} parent=1 // loop_exit
      _
    %119 = vsyncpa [#allocation3], 1
    %s120 = scalar_lea.sflag [#allocation3], 1
    %121 = vsyncpa %s120, 1
    %122 = vsyncpa [#allocation4], 1
    %s123 = scalar_lea.sflag [#allocation4], 1
    %124 = vsyncpa %s123, 1

// kernel: transformer_forward.7
$region0: #{transformer_forward.7}
  #allocation0 [shape = 'u32[]', space=smem, size = 0x4, offset = 0x4, fixed_abs, tag = 'smem constant byte address 0x4 - core index']
  #allocation1 [shape = 'u32[144,128]{1,0:T(1,128)}', space=vmem, size = 0x12000, scoped, tag = 'internal scratch']
  %s0 = inlined_call_operand.vmem [shape: f32[2,8,32], index: 0, kind: input, shape index: {}]
  %s1 = inlined_call_operand.vmem [shape: f32[1,32], index: 1, kind: input, shape index: {}]
  %s2 = inlined_call_operand.vmem [shape: f32[1,32], index: 2, kind: input, shape index: {}]
  %s3 = inlined_call_operand.vmem [shape: bf16[32,96], index: 3, kind: input, shape index: {}]
  %s4 = inlined_call_operand.vmem [shape: f32[1,96], index: 4, kind: input, shape index: {}]
  %s5 = inlined_call_operand.vmem [shape: bf16[2,1,8,32], index: 5, kind: output, shape index: {0}]
  %s6 = inlined_call_operand.vmem [shape: bf16[2,1,8,32], index: 6, kind: output, shape index: {1}]
  %s7 = inlined_call_operand.vmem [shape: bf16[2,1,8,32], index: 7, kind: output, shape index: {2}]
  %8 = xla_tuple %s5, %s6, %s7
  %s9 = sld [smem:[#allocation0]]
  $region69: #{transformer_forward.7} parent=0
    _
  %s11 = ssub.s32 1, %s9
  %s12 = scalar_select 0, %s11, %s9
  loop: start=0, step=1, limit=4
  $region2: #{transformer_forward.7} parent=0 // loop_pre_header
    _
  $region3: #{transformer_forward.7} parent=0 // loop_header
    %s14 = sphi 0, %s18
    %p15 = scmp.ge.s32.totalorder %s14, 4
    %s21 = sphi 0, %s33
    %s22 = sphi 0, %s29
    %s23 = sphi 0, %s21
    %s24 = sphi 0, %s22
    %s25 = sphi 0, %s23
    %s26 = sphi 0, %s24
    %s38 = sphi 0, %s40
    %s41 = sphi 0, %s38
    %s42 = sphi 0, %s41
    %s58 = sphi 0, %s42
    %s62 = sphi 0, %s62
    %s64 = sphi 0, %s62
    %s65 = sphi 0, %s64
    %s79 = sphi 0, %s65
    %s83 = sphi 0, %s83
    %s85 = sphi 0, %s83
    %s86 = sphi 0, %s85
    %s100 = sphi 0, %s86
    %s104 = sphi 0, %s104
    %s106 = sphi 0, %s104
    %s107 = sphi 0, %s106
    %s121 = sphi 0, %s107
    %s125 = sphi 0, %s125
    %s127 = sphi 0, %s125
    %s128 = sphi 0, %s127
    %s142 = sphi 0, %s128
    %s150 = sphi 0, %s152
    %s153 = sphi 0, %s150
    %s154 = sphi 0, %s153
    %s170 = sphi 0, %s154
    %s178 = sphi 0, %s180
    %s181 = sphi 0, %s178
    %s182 = sphi 0, %s181
    %s198 = sphi 0, %s182
    %s206 = sphi 0, %s208
    %s209 = sphi 0, %s206
    %s210 = sphi 0, %s209
    %s226 = sphi 0, %s210
  $region4: #{transformer_forward.7} parent=0 // loop_header_branch
    %17 = sbr.rel (%p15) target = $region8
  $region5: #{transformer_forward.7} parent=0 // loop_body
    %s19 = ssub.s32 %s14, 1
    %s20 = ssub.s32 %s14, 2
    %s27 = sadd.s32 1, %s22
    %p28 = scmp.ge.s32.totalorder %s27, 1
    %s29 = scalar_select %p28, 0, %s27
    %s30 = sadd.s32 1, %s21
    %s31 = scalar_select %p28, %s30, %s21
    %p32 = scmp.ge.s32.totalorder %s31, 2
    %s33 = scalar_select %p32, 0, %s31
    %s34 = ssub.s32 %s21, %s33
    %s35 = ssub.s32 %s22, %s29
    %s36 = sor.u32 %s34, %s35
    %p37 = scmp.eq.s32.totalorder %s36, 0
    %s39 = sadd.s32 %s38, 1
    %s40 = scalar_select %p37, %s38, %s39
    %p43 = pneg %p37
    %p44 = scmp.eq.s32.totalorder %s14, 1
    %p45 = por %p43, %p44
    %p46 = scmp.ne.s32.totalorder %s38, %s41
    %p47 = scmp.eq.s32.totalorder %s14, 0
    %p48 = por %p46, %p47
    %p49 = scmp.ne.s32.totalorder %s38, %s41
    %p50 = scmp.eq.s32.totalorder %s19, 1
    %p51 = por %p49, %p50
    %p52 = scmp.ne.s32.totalorder %s41, %s42
    %p53 = scmp.eq.s32.totalorder %s19, 0
    %p54 = por %p52, %p53
    %p55 = scmp.ne.s32.totalorder %s41, %s42
    %p56 = scmp.eq.s32.totalorder %s20, 1
    %p57 = por %p55, %p56
    %p59 = scmp.ne.s32.totalorder %s42, %s58
    %p60 = scmp.eq.s32.totalorder %s20, 0
    %p61 = por %p59, %p60
    %s63 = sadd.s32 %s62, 1
    %p66 = scmp.eq.s32.totalorder %s14, 1
    %p67 = scmp.ne.s32.totalorder %s62, %s64
    %p68 = scmp.eq.s32.totalorder %s14, 0
    %p69 = por %p67, %p68
    %p70 = scmp.ne.s32.totalorder %s62, %s64
    %p71 = scmp.eq.s32.totalorder %s19, 1
    %p72 = por %p70, %p71
    %p73 = scmp.ne.s32.totalorder %s64, %s65
    %p74 = scmp.eq.s32.totalorder %s19, 0
    %p75 = por %p73, %p74
    %p76 = scmp.ne.s32.totalorder %s64, %s65
    %p77 = scmp.eq.s32.totalorder %s20, 1
    %p78 = por %p76, %p77
    %p80 = scmp.ne.s32.totalorder %s65, %s79
    %p81 = scmp.eq.s32.totalorder %s20, 0
    %p82 = por %p80, %p81
    %s84 = sadd.s32 %s83, 1
    %p87 = scmp.eq.s32.totalorder %s14, 1
    %p88 = scmp.ne.s32.totalorder %s83, %s85
    %p89 = scmp.eq.s32.totalorder %s14, 0
    %p90 = por %p88, %p89
    %p91 = scmp.ne.s32.totalorder %s83, %s85
    %p92 = scmp.eq.s32.totalorder %s19, 1
    %p93 = por %p91, %p92
    %p94 = scmp.ne.s32.totalorder %s85, %s86
    %p95 = scmp.eq.s32.totalorder %s19, 0
    %p96 = por %p94, %p95
    %p97 = scmp.ne.s32.totalorder %s85, %s86
    %p98 = scmp.eq.s32.totalorder %s20, 1
    %p99 = por %p97, %p98
    %p101 = scmp.ne.s32.totalorder %s86, %s100
    %p102 = scmp.eq.s32.totalorder %s20, 0
    %p103 = por %p101, %p102
    %s105 = sadd.s32 %s104, 1
    %p108 = scmp.eq.s32.totalorder %s14, 1
    %p109 = scmp.ne.s32.totalorder %s104, %s106
    %p110 = scmp.eq.s32.totalorder %s14, 0
    %p111 = por %p109, %p110
    %p112 = scmp.ne.s32.totalorder %s104, %s106
    %p113 = scmp.eq.s32.totalorder %s19, 1
    %p114 = por %p112, %p113
    %p115 = scmp.ne.s32.totalorder %s106, %s107
    %p116 = scmp.eq.s32.totalorder %s19, 0
    %p117 = por %p115, %p116
    %p118 = scmp.ne.s32.totalorder %s106, %s107
    %p119 = scmp.eq.s32.totalorder %s20, 1
    %p120 = por %p118, %p119
    %p122 = scmp.ne.s32.totalorder %s107, %s121
    %p123 = scmp.eq.s32.totalorder %s20, 0
    %p124 = por %p122, %p123
    %s126 = sadd.s32 %s125, 1
    %p129 = scmp.eq.s32.totalorder %s14, 1
    %p130 = scmp.ne.s32.totalorder %s125, %s127
    %p131 = scmp.eq.s32.totalorder %s14, 0
    %p132 = por %p130, %p131
    %p133 = scmp.ne.s32.totalorder %s125, %s127
    %p134 = scmp.eq.s32.totalorder %s19, 1
    %p135 = por %p133, %p134
    %p136 = scmp.ne.s32.totalorder %s127, %s128
    %p137 = scmp.eq.s32.totalorder %s19, 0
    %p138 = por %p136, %p137
    %p139 = scmp.ne.s32.totalorder %s127, %s128
    %p140 = scmp.eq.s32.totalorder %s20, 1
    %p141 = por %p139, %p140
    %p143 = scmp.ne.s32.totalorder %s128, %s142
    %p144 = scmp.eq.s32.totalorder %s20, 0
    %p145 = por %p143, %p144
    %s146 = ssub.s32 %s21, %s33
    %s147 = ssub.s32 %s22, %s29
    %s148 = sor.u32 %s146, %s147
    %p149 = scmp.eq.s32.totalorder %s148, 0
    %s151 = sadd.s32 %s150, 1
    %s152 = scalar_select %p149, %s150, %s151
    %p155 = pneg %p149
    %p156 = scmp.eq.s32.totalorder %s14, 1
    %p157 = por %p155, %p156
    %p158 = scmp.ne.s32.totalorder %s150, %s153
    %p159 = scmp.eq.s32.totalorder %s14, 0
    %p160 = por %p158, %p159
    %p161 = scmp.ne.s32.totalorder %s150, %s153
    %p162 = scmp.eq.s32.totalorder %s19, 1
    %p163 = por %p161, %p162
    %p164 = scmp.ne.s32.totalorder %s153, %s154
    %p165 = scmp.eq.s32.totalorder %s19, 0
    %p166 = por %p164, %p165
    %p167 = scmp.ne.s32.totalorder %s153, %s154
    %p168 = scmp.eq.s32.totalorder %s20, 1
    %p169 = por %p167, %p168
    %p171 = scmp.ne.s32.totalorder %s154, %s170
    %p172 = scmp.eq.s32.totalorder %s20, 0
    %p173 = por %p171, %p172
    %s174 = ssub.s32 %s21, %s33
    %s175 = ssub.s32 %s22, %s29
    %s176 = sor.u32 %s174, %s175
    %p177 = scmp.eq.s32.totalorder %s176, 0
    %s179 = sadd.s32 %s178, 1
    %s180 = scalar_select %p177, %s178, %s179
    %p183 = pneg %p177
    %p184 = scmp.eq.s32.totalorder %s14, 1
    %p185 = por %p183, %p184
    %p186 = scmp.ne.s32.totalorder %s178, %s181
    %p187 = scmp.eq.s32.totalorder %s14, 0
    %p188 = por %p186, %p187
    %p189 = scmp.ne.s32.totalorder %s178, %s181
    %p190 = scmp.eq.s32.totalorder %s19, 1
    %p191 = por %p189, %p190
    %p192 = scmp.ne.s32.totalorder %s181, %s182
    %p193 = scmp.eq.s32.totalorder %s19, 0
    %p194 = por %p192, %p193
    %p195 = scmp.ne.s32.totalorder %s181, %s182
    %p196 = scmp.eq.s32.totalorder %s20, 1
    %p197 = por %p195, %p196
    %p199 = scmp.ne.s32.totalorder %s182, %s198
    %p200 = scmp.eq.s32.totalorder %s20, 0
    %p201 = por %p199, %p200
    %s202 = ssub.s32 %s21, %s33
    %s203 = ssub.s32 %s22, %s29
    %s204 = sor.u32 %s202, %s203
    %p205 = scmp.eq.s32.totalorder %s204, 0
    %s207 = sadd.s32 %s206, 1
    %s208 = scalar_select %p205, %s206, %s207
    %p211 = pneg %p205
    %p212 = scmp.eq.s32.totalorder %s14, 1
    %p213 = por %p211, %p212
    %p214 = scmp.ne.s32.totalorder %s206, %s209
    %p215 = scmp.eq.s32.totalorder %s14, 0
    %p216 = por %p214, %p215
    %p217 = scmp.ne.s32.totalorder %s206, %s209
    %p218 = scmp.eq.s32.totalorder %s19, 1
    %p219 = por %p217, %p218
    %p220 = scmp.ne.s32.totalorder %s209, %s210
    %p221 = scmp.eq.s32.totalorder %s19, 0
    %p222 = por %p220, %p221
    %p223 = scmp.ne.s32.totalorder %s209, %s210
    %p224 = scmp.eq.s32.totalorder %s20, 1
    %p225 = por %p223, %p224
    %p227 = scmp.ne.s32.totalorder %s210, %s226
    %p228 = scmp.eq.s32.totalorder %s20, 0
    %p229 = por %p227, %p228
    %p230 = scmp.le.s32.totalorder 1, %s14
    %p231 = scmp.lt.s32.totalorder %s14, 3
    %p232 = pnand %p230, %p231
    %p233 = pneg %p232
    // Predicated region
    $region9: #{transformer_forward.7} parent=5 // pred_check
      _
    $region10: #{transformer_forward.7} parent=5 // pred_check_branch
      %235 = sbr.rel (%p232) target = $region12
    $region11: #{transformer_forward.7} parent=5 // pred_region
      %s236 = ssub.s32 %s14, 1
      // Predicated region
      $region13: #{transformer_forward.7} parent=11 // pred_check
        %p237 = pneg %p75
      $region14: #{transformer_forward.7} parent=11 // pred_check_branch
        %239 = sbr.rel (%p237) target = $region16
      $region15: #{transformer_forward.7} parent=11 // pred_region
        _
      $region16: #{transformer_forward.7} parent=11 // pred_fallthru
        _
      // Predicated region
      $region17: #{transformer_forward.7} parent=11 // pred_check
        %p240 = pneg %p96
      $region18: #{transformer_forward.7} parent=11 // pred_check_branch
        %242 = sbr.rel (%p240) target = $region20
      $region19: #{transformer_forward.7} parent=11 // pred_region
        _
      $region20: #{transformer_forward.7} parent=11 // pred_fallthru
        _
      // Predicated region
      $region21: #{transformer_forward.7} parent=11 // pred_check
        %p243 = pneg %p117
      $region22: #{transformer_forward.7} parent=11 // pred_check_branch
        %245 = sbr.rel (%p243) target = $region24
      $region23: #{transformer_forward.7} parent=11 // pred_region
        _
      $region24: #{transformer_forward.7} parent=11 // pred_fallthru
        _
      // Predicated region
      $region25: #{transformer_forward.7} parent=11 // pred_check
        %p246 = pneg %p138
      $region26: #{transformer_forward.7} parent=11 // pred_check_branch
        %248 = sbr.rel (%p246) target = $region28
      $region27: #{transformer_forward.7} parent=11 // pred_region
        _
      $region28: #{transformer_forward.7} parent=11 // pred_fallthru
        _
    $region12: #{transformer_forward.7} parent=5 // pred_fallthru
      _
    %p249 = scmp.lt.s32.totalorder %s14, 2
    // Predicated region
    $region29: #{transformer_forward.7} parent=5 // pred_check
      %p250 = pneg %p249
    $region30: #{transformer_forward.7} parent=5 // pred_check_branch
      %252 = sbr.rel (%p250) target = $region32
    $region31: #{transformer_forward.7} parent=5 // pred_region
      // Predicated region
      $region33: #{transformer_forward.7} parent=31 // pred_check
        %p253 = pneg %p48
      $region34: #{transformer_forward.7} parent=31 // pred_check_branch
        %255 = sbr.rel (%p253) target = $region36
      $region35: #{transformer_forward.7} parent=31 // pred_region
        %p256 = scmp.lt.s32.totalorder %s21, 1
        %s257 = scalar_select %p256, %s21, 1
        %p258 = scmp.lt.s32.totalorder %s22, 0
        %s259 = scalar_select %p258, %s22, 0
        %s260 = sadd.s32 %s259, %s257
        %s261 = smul.addr %s260, 8
        %s262 = scalar_lea.vmem %s0, %s261
      $region36: #{transformer_forward.7} parent=31 // pred_fallthru
        _
    $region32: #{transformer_forward.7} parent=5 // pred_fallthru
      _
    %p263 = scmp.le.s32.totalorder 1, %s14
    %p264 = scmp.lt.s32.totalorder %s14, 3
    %p265 = pnand %p263, %p264
    %p266 = pneg %p265
    // Predicated region
    $region37: #{transformer_forward.7} parent=5 // pred_check
      _
    $region38: #{transformer_forward.7} parent=5 // pred_check_branch
      %268 = sbr.rel (%p265) target = $region40
    $region39: #{transformer_forward.7} parent=5 // pred_region
      %s269 = ssub.s32 %s14, 1
      %p270 = scmp.lt.s32.totalorder %s23, 1
      %s271 = scalar_select %p270, %s23, 1
      %p272 = scmp.lt.s32.totalorder %s24, 0
      %s273 = scalar_select %p272, %s24, 0
      %s274 = sadd.s32 %s273, %s271
      %s275 = smul.addr %s274, 8
      %s276 = scalar_lea.vmem %s0, %s275
      %p277 = pneg %p54
      %p278 = pneg %p51
      %p279 = pneg %p75
      %p280 = pneg %p72
      %p281 = pneg %p96
      %p282 = pneg %p93
      %p283 = pneg %p117
      %p284 = pneg %p114
      %p285 = pneg %p138
      %p286 = pneg %p135
      %p287 = pneg %p166
      %p288 = pneg %p163
      %p289 = scmp.lt.s32.totalorder %s23, 1
      %s290 = scalar_select %p289, %s23, 1
      %p291 = scmp.lt.s32.totalorder %s24, 0
      %s292 = scalar_select %p291, %s24, 0
      %s293 = sadd.s32 %s292, %s290
      %s294 = smul.addr %s293, 4
      %s295 = scalar_lea.vmem %s5, %s294
      %p296 = pneg %p194
      %p297 = pneg %p191
      %p298 = scmp.lt.s32.totalorder %s23, 1
      %s299 = scalar_select %p298, %s23, 1
      %p300 = scmp.lt.s32.totalorder %s24, 0
      %s301 = scalar_select %p300, %s24, 0
      %s302 = sadd.s32 %s301, %s299
      %s303 = smul.addr %s302, 4
      %s304 = scalar_lea.vmem %s6, %s303
      %p305 = pneg %p222
      %p306 = pneg %p219
      %p307 = scmp.lt.s32.totalorder %s23, 1
      %s308 = scalar_select %p307, %s23, 1
      %p309 = scmp.lt.s32.totalorder %s24, 0
      %s310 = scalar_select %p309, %s24, 0
      %s311 = sadd.s32 %s310, %s308
      %s312 = smul.addr %s311, 4
      %s313 = scalar_lea.vmem %s7, %s312
      %p314 = scmp.lt.s32.totalorder %s23, 1
      %s315 = scalar_select %p314, %s23, 1
      %p316 = scmp.lt.s32.totalorder %s24, 0
      %s317 = scalar_select %p316, %s24, 0
      %s318 = sadd.s32 %s317, %s315
      %s319 = smul.addr %s318, 8
      %s320 = scalar_lea.vmem %s0, %s319
      %p321 = scmp.lt.s32.totalorder %s23, 1
      %s322 = scalar_select %p321, %s23, 1
      %p323 = scmp.lt.s32.totalorder %s24, 0
      %s324 = scalar_select %p323, %s24, 0
      %s325 = sadd.s32 %s324, %s322
      %s326 = smul.addr %s325, 4
      %s327 = scalar_lea.vmem %s5, %s326
      %p328 = scmp.lt.s32.totalorder %s23, 1
      %s329 = scalar_select %p328, %s23, 1
      %p330 = scmp.lt.s32.totalorder %s24, 0
      %s331 = scalar_select %p330, %s24, 0
      %s332 = sadd.s32 %s331, %s329
      %s333 = smul.addr %s332, 4
      %s334 = scalar_lea.vmem %s6, %s333
      %p335 = scmp.lt.s32.totalorder %s23, 1
      %s336 = scalar_select %p335, %s23, 1
      %p337 = scmp.lt.s32.totalorder %s24, 0
      %s338 = scalar_select %p337, %s24, 0
      %s339 = sadd.s32 %s338, %s336
      %s340 = smul.addr %s339, 4
      %s341 = scalar_lea.vmem %s7, %s340
      %v343 = vld [vmem:[%s320] sm:$0xff]
      %v344 = vld [vmem:[%s1] sm:$0x1]
      %v345 = vld [vmem:[%s2] sm:$0x1]
      %vm346 = vcmask 261120
      %v347 = vsel %vm346, %v343, 0.0
      %348 = vadd.xlane.f32.xlu0 %v347
      %v349 = vpop.xlane.xlu0 %348
      %v350 = vrcp.pop 32.0
      %v351 = vmul.f32 %v349, %v350
      %v352 = vsub.f32 %v343, %v351
      %v353 = vmul.f32 %v352, %v352
      %v354 = vsel %vm346, %v353, 0.0
      %355 = vadd.xlane.f32.xlu0 %v354
      %v356 = vpop.xlane.xlu0 %355
      %v357 = vmul.f32 %v356, %v350
      %v358 = vadd.f32 %v357, 1e-05
      %v359 = vrsqrt.pop %v358
      %v360 = vmul.f32 %v352, %v359
      %v362 = vlaneseq
      %v363 = vshrl.u32 %v362, 7
      %v364 = vsub.s32 0, %v363
      %v365 = vrot.slane %v344, %v364
      %v367 = vmul.f32 %v360, %v365
      %v369 = vlaneseq
      %v370 = vshrl.u32 %v369, 7
      %v371 = vsub.s32 0, %v370
      %v372 = vrot.slane %v345, %v371
      %v374 = vadd.f32 %v367, %v372
      %v375 = vpack.c.bf16 %v374, %v374
      %v376 = vld [vmem:[%s3] sm:$0xf]
      %v377 = vld [vmem:[%s3 + $0x4] sm:$0xf]
      %v378 = vld [vmem:[%s3 + $0x8] sm:$0xf]
      %v379 = vld [vmem:[%s3 + $0xc] sm:$0xf]
      %v380 = vld [vmem:[%s4] sm:$0x1]
      %v382 = vlaneseq
      %v383 = vshrl.u32 %v382, 7
      %v384 = vsub.s32 0, %v383
      %v385 = vrot.slane %v380, %v384
      %v391 = vunpack.c.l.b16 %v376
      %v392 = vunpack.c.l.b16 %v377
      %v393 = vunpack.c.l.b16 %v378
      %v394 = vunpack.c.l.b16 %v379
      %v395 = vpack.c.b16 %v392, %v391
      %v396 = vpack.c.b16 %v394, %v393
      %v400 = vsel %vm346, %v375, 0
      %402 = vmatprep.subr.bf16.mxu0 0
      %403 = vmatpush1.bf16.msra.mxu0 0
      %404 = vmatprep.subr.bf16.mxu0 0
      %405 = vmatpush1.bf16.msra.mxu0 0
      %406 = vmatprep.subr.bf16.mxu0 0
      %407 = vmatpush1.bf16.msra.mxu0 0
      %408 = vmatprep.subr.bf16.mxu0 0
      %409 = vmatpush1.bf16.msra.mxu0 0
      %410 = vmatprep.subr.bf16.mxu0 0
      %411 = vmatpush1.bf16.msra.mxu0 0
      %412 = vmatprep.subr.bf16.mxu0 0
      %413 = vmatpush1.bf16.msra.mxu0 0
      %414 = vmatprep.subr.bf16.mxu0 0
      %415 = vmatpush1.bf16.msra.mxu0 %v396
      %416 = vmatprep.subr.bf16.mxu0 0
      %417 = vmatpush1.bf16.msra.mxu0 %v395
      %418 = vmatprep.subr.bf16.mxu0 0
      %419 = vmatpush2.bf16.msra.mxu0 0
      %420 = vmatprep.subr.bf16.mxu0 0
      %421 = vmatpush2.bf16.msra.mxu0 0
      %422 = vmatprep.subr.bf16.mxu0 0
      %423 = vmatpush2.bf16.msra.mxu0 0
      %424 = vmatprep.subr.bf16.mxu0 0
      %425 = vmatpush2.bf16.msra.mxu0 0
      %426 = vmatprep.subr.bf16.mxu0 0
      %427 = vmatpush2.bf16.msra.mxu0 0
      %428 = vmatprep.subr.bf16.mxu0 0
      %429 = vmatpush2.bf16.msra.mxu0 0
      %430 = vmatprep.subr.bf16.mxu0 0
      %431 = vmatpush2.bf16.msra.mxu0 0
      %432 = vmatprep.subr.bf16.mxu0 0
      %433 = vmatpush2.bf16.msra.mxu0 0
      %434 = vmatprep.mubr.bf16.mxu0 0
      %435 = vmatmul.mubr.bf16.gmra.mxu0 %v400
      %v436 = vpop.f32.mrf.mxu0
      %v437 = vadd.f32 %v385, %v436
      %v438 = vpop.f32.mrf.mxu0
      %v439 = vpop.f32.mrf.mxu0
      %v440 = vpop.f32.mrf.mxu0
      %441 = vdwg.mxu0
      %v443 = vcombine.high %v437, %v437
      %v445 = vunpack.c.l.s4 1966171168
      %v446 = vunpack.c.0.s8 %v445
      %v447 = vlaneseq
      %v448 = vshrl.u32 %v447, 7
      %v449 = vsub.s32 %v446, %v448
      %v450 = vrot.slane %v437, %v449
      %v452 = vunpack.c.l.s4 1966171168
      %v453 = vunpack.c.0.s8 %v452
      %v454 = vlaneseq
      %v455 = vshrl.u32 %v454, 7
      %v456 = vsub.s32 %v453, %v455
      %v457 = vrot.slane %v443, %v456
      %v458 = vcombine.high %v450, %v450
      %v459 = vcombine.high %v457, %v457
      %v461 = vunpack.c.l.s4 1966171168
      %v462 = vunpack.c.0.s8 %v461
      %v463 = vlaneseq
      %v464 = vshrl.u32 %v463, 7
      %v465 = vsub.s32 %v462, %v464
      %v466 = vrot.slane %v450, %v465
      %v468 = vunpack.c.l.s4 1966171168
      %v469 = vunpack.c.0.s8 %v468
      %v470 = vlaneseq
      %v471 = vshrl.u32 %v470, 7
      %v472 = vsub.s32 %v469, %v471
      %v473 = vrot.slane %v457, %v472
      %v475 = vunpack.c.l.s4 1966171168
      %v476 = vunpack.c.0.s8 %v475
      %v477 = vlaneseq
      %v478 = vshrl.u32 %v477, 7
      %v479 = vsub.s32 %v476, %v478
      %v480 = vrot.slane %v458, %v479
      %v482 = vunpack.c.l.s4 1966171168
      %v483 = vunpack.c.0.s8 %v482
      %v484 = vlaneseq
      %v485 = vshrl.u32 %v484, 7
      %v486 = vsub.s32 %v483, %v485
      %v487 = vrot.slane %v459, %v486
      %v488 = vcombine.high %v466, %v466
      %v489 = vcombine.high %v473, %v473
      %v490 = vcombine.high %v480, %v480
      %v491 = vcombine.high %v487, %v487
      %v492 = vcombine.low %v466, %v480
      %v493 = vcombine.low %v488, %v490
      %v494 = vcombine.low %v473, %v487
      %v495 = vcombine.low %v489, %v491
      %v497 = vunpack.c.l.s4 1966171168
      %v498 = vunpack.c.0.s8 %v497
      %v499 = vlaneseq
      %v500 = vshrl.u32 %v499, 7
      %v501 = vsub.s32 %v498, %v500
      %v502 = vrot.slane %v492, %v501
      %v504 = vunpack.c.l.s4 1966171168
      %v505 = vunpack.c.0.s8 %v504
      %v506 = vlaneseq
      %v507 = vshrl.u32 %v506, 7
      %v508 = vsub.s32 %v505, %v507
      %v509 = vrot.slane %v493, %v508
      %v511 = vunpack.c.l.s4 1966171168
      %v512 = vunpack.c.0.s8 %v511
      %v513 = vlaneseq
      %v514 = vshrl.u32 %v513, 7
      %v515 = vsub.s32 %v512, %v514
      %v516 = vrot.slane %v494, %v515
      %v518 = vunpack.c.l.s4 1966171168
      %v519 = vunpack.c.0.s8 %v518
      %v520 = vlaneseq
      %v521 = vshrl.u32 %v520, 7
      %v522 = vsub.s32 %v519, %v521
      %v523 = vrot.slane %v495, %v522
      %v524 = vcombine.low %v502, %v509
      %v525 = vcombine.low %v516, %v523
      %v527 = vunpack.c.l.s4 1966171168
      %v528 = vunpack.c.0.s8 %v527
      %v529 = vlaneseq
      %v530 = vshrl.u32 %v529, 7
      %v531 = vsub.s32 %v528, %v530
      %v532 = vrot.slane %v524, %v531
      %v534 = vunpack.c.l.s4 1966171168
      %v535 = vunpack.c.0.s8 %v534
      %v536 = vlaneseq
      %v537 = vshrl.u32 %v536, 7
      %v538 = vsub.s32 %v535, %v537
      %v539 = vrot.slane %v525, %v538
      %v540 = vcombine.low %v532, %v539
      %v542 = vpack.c.bf16 %v540, %v540
      %vm543 = vcmask 257024
      %544 = vst.msk [vmem:[%s327] sm:$0xf] %vm543, %v542
      %545 = vrot.lane.b32.xlu0 %v466, 96
      %v546 = vpop.permute.xlu0 %545
      %547 = vrot.lane.b32.xlu0 %v480, 96
      %v548 = vpop.permute.xlu0 %547
      %549 = vrot.lane.b32.xlu0 %v488, 96
      %v550 = vpop.permute.xlu0 %549
      %551 = vrot.lane.b32.xlu0 %v490, 96
      %v552 = vpop.permute.xlu0 %551
      %553 = vrot.lane.b32.xlu0 %v473, 96
      %v554 = vpop.permute.xlu0 %553
      %555 = vrot.lane.b32.xlu0 %v487, 96
      %v556 = vpop.permute.xlu0 %555
      %557 = vrot.lane.b32.xlu0 %v489, 96
      %v558 = vpop.permute.xlu0 %557
      %559 = vrot.lane.b32.xlu0 %v491, 96
      %v560 = vpop.permute.xlu0 %559
      %v561 = vcombine.low %v546, %v548
      %v562 = vcombine.low %v550, %v552
      %v563 = vcombine.low %v554, %v556
      %v564 = vcombine.low %v558, %v560
      %v566 = vunpack.c.l.s4 1966171168
      %v567 = vunpack.c.0.s8 %v566
      %v568 = vlaneseq
      %v569 = vshrl.u32 %v568, 7
      %v570 = vsub.s32 %v567, %v569
      %v571 = vrot.slane %v561, %v570
      %v573 = vunpack.c.l.s4 1966171168
      %v574 = vunpack.c.0.s8 %v573
      %v575 = vlaneseq
      %v576 = vshrl.u32 %v575, 7
      %v577 = vsub.s32 %v574, %v576
      %v578 = vrot.slane %v562, %v577
      %v580 = vunpack.c.l.s4 1966171168
      %v581 = vunpack.c.0.s8 %v580
      %v582 = vlaneseq
      %v583 = vshrl.u32 %v582, 7
      %v584 = vsub.s32 %v581, %v583
      %v585 = vrot.slane %v563, %v584
      %v587 = vunpack.c.l.s4 1966171168
      %v588 = vunpack.c.0.s8 %v587
      %v589 = vlaneseq
      %v590 = vshrl.u32 %v589, 7
      %v591 = vsub.s32 %v588, %v590
      %v592 = vrot.slane %v564, %v591
      %v593 = vcombine.low %v571, %v578
      %v594 = vcombine.low %v585, %v592
      %v596 = vunpack.c.l.s4 1966171168
      %v597 = vunpack.c.0.s8 %v596
      %v598 = vlaneseq
      %v599 = vshrl.u32 %v598, 7
      %v600 = vsub.s32 %v597, %v599
      %v601 = vrot.slane %v593, %v600
      %v603 = vunpack.c.l.s4 1966171168
      %v604 = vunpack.c.0.s8 %v603
      %v605 = vlaneseq
      %v606 = vshrl.u32 %v605, 7
      %v607 = vsub.s32 %v604, %v606
      %v608 = vrot.slane %v594, %v607
      %v609 = vcombine.low %v601, %v608
      %v611 = vpack.c.bf16 %v609, %v609
      %612 = vst.msk [vmem:[%s334] sm:$0xf] %vm543, %v611
      %613 = vrot.lane.b32.xlu0 %v466, 64
      %v614 = vpop.permute.xlu0 %613
      %615 = vrot.lane.b32.xlu0 %v480, 64
      %v616 = vpop.permute.xlu0 %615
      %617 = vrot.lane.b32.xlu0 %v488, 64
      %v618 = vpop.permute.xlu0 %617
      %619 = vrot.lane.b32.xlu0 %v490, 64
      %v620 = vpop.permute.xlu0 %619
      %621 = vrot.lane.b32.xlu0 %v473, 64
      %v622 = vpop.permute.xlu0 %621
      %623 = vrot.lane.b32.xlu0 %v487, 64
      %v624 = vpop.permute.xlu0 %623
      %625 = vrot.lane.b32.xlu0 %v489, 64
      %v626 = vpop.permute.xlu0 %625
      %627 = vrot.lane.b32.xlu0 %v491, 64
      %v628 = vpop.permute.xlu0 %627
      %v629 = vcombine.low %v614, %v616
      %v630 = vcombine.low %v618, %v620
      %v631 = vcombine.low %v622, %v624
      %v632 = vcombine.low %v626, %v628
      %v634 = vunpack.c.l.s4 1966171168
      %v635 = vunpack.c.0.s8 %v634
      %v636 = vlaneseq
      %v637 = vshrl.u32 %v636, 7
      %v638 = vsub.s32 %v635, %v637
      %v639 = vrot.slane %v629, %v638
      %v641 = vunpack.c.l.s4 1966171168
      %v642 = vunpack.c.0.s8 %v641
      %v643 = vlaneseq
      %v644 = vshrl.u32 %v643, 7
      %v645 = vsub.s32 %v642, %v644
      %v646 = vrot.slane %v630, %v645
      %v648 = vunpack.c.l.s4 1966171168
      %v649 = vunpack.c.0.s8 %v648
      %v650 = vlaneseq
      %v651 = vshrl.u32 %v650, 7
      %v652 = vsub.s32 %v649, %v651
      %v653 = vrot.slane %v631, %v652
      %v655 = vunpack.c.l.s4 1966171168
      %v656 = vunpack.c.0.s8 %v655
      %v657 = vlaneseq
      %v658 = vshrl.u32 %v657, 7
      %v659 = vsub.s32 %v656, %v658
      %v660 = vrot.slane %v632, %v659
      %v661 = vcombine.low %v639, %v646
      %v662 = vcombine.low %v653, %v660
      %v664 = vunpack.c.l.s4 1966171168
      %v665 = vunpack.c.0.s8 %v664
      %v666 = vlaneseq
      %v667 = vshrl.u32 %v666, 7
      %v668 = vsub.s32 %v665, %v667
      %v669 = vrot.slane %v661, %v668
      %v671 = vunpack.c.l.s4 1966171168
      %v672 = vunpack.c.0.s8 %v671
      %v673 = vlaneseq
      %v674 = vshrl.u32 %v673, 7
      %v675 = vsub.s32 %v672, %v674
      %v676 = vrot.slane %v662, %v675
      %v677 = vcombine.low %v669, %v676
      %v679 = vpack.c.bf16 %v677, %v677
      %680 = vst.msk [vmem:[%s341] sm:$0xf] %vm543, %v679
      %p681 = scmp.lt.s32.totalorder %s23, 1
      %s682 = scalar_select %p681, %s23, 1
      %p683 = scmp.lt.s32.totalorder %s24, 0
      %s684 = scalar_select %p683, %s24, 0
      %s685 = sadd.s32 %s684, %s682
      %s686 = smul.addr %s685, 4
      %s687 = scalar_lea.vmem %s5, %s686
      %p688 = scmp.lt.s32.totalorder %s23, 1
      %s689 = scalar_select %p688, %s23, 1
      %p690 = scmp.lt.s32.totalorder %s24, 0
      %s691 = scalar_select %p690, %s24, 0
      %s692 = sadd.s32 %s691, %s689
      %s693 = smul.addr %s692, 4
      %s694 = scalar_lea.vmem %s6, %s693
      %p695 = scmp.lt.s32.totalorder %s23, 1
      %s696 = scalar_select %p695, %s23, 1
      %p697 = scmp.lt.s32.totalorder %s24, 0
      %s698 = scalar_select %p697, %s24, 0
      %s699 = sadd.s32 %s698, %s696
      %s700 = smul.addr %s699, 4
      %s701 = scalar_lea.vmem %s7, %s700
      // Predicated region
      $region41: #{transformer_forward.7} parent=39 // pred_check
        %p702 = pneg %p163
      $region42: #{transformer_forward.7} parent=39 // pred_check_branch
        %704 = sbr.rel (%p702) target = $region44
      $region43: #{transformer_forward.7} parent=39 // pred_region
        _
      $region44: #{transformer_forward.7} parent=39 // pred_fallthru
        _
      // Predicated region
      $region45: #{transformer_forward.7} parent=39 // pred_check
        %p705 = pneg %p191
      $region46: #{transformer_forward.7} parent=39 // pred_check_branch
        %707 = sbr.rel (%p705) target = $region48
      $region47: #{transformer_forward.7} parent=39 // pred_region
        _
      $region48: #{transformer_forward.7} parent=39 // pred_fallthru
        _
      // Predicated region
      $region49: #{transformer_forward.7} parent=39 // pred_check
        %p708 = pneg %p219
      $region50: #{transformer_forward.7} parent=39 // pred_check_branch
        %710 = sbr.rel (%p708) target = $region52
      $region51: #{transformer_forward.7} parent=39 // pred_region
        _
      $region52: #{transformer_forward.7} parent=39 // pred_fallthru
        _
    $region40: #{transformer_forward.7} parent=5 // pred_fallthru
      _
    %p711 = scmp.le.s32.totalorder 2, %s14
    // Predicated region
    $region53: #{transformer_forward.7} parent=5 // pred_check
      %p712 = pneg %p711
    $region54: #{transformer_forward.7} parent=5 // pred_check_branch
      %714 = sbr.rel (%p712) target = $region56
    $region55: #{transformer_forward.7} parent=5 // pred_region
      %s715 = ssub.s32 %s14, 2
      // Predicated region
      $region57: #{transformer_forward.7} parent=55 // pred_check
        %p716 = pneg %p169
      $region58: #{transformer_forward.7} parent=55 // pred_check_branch
        %718 = sbr.rel (%p716) target = $region60
      $region59: #{transformer_forward.7} parent=55 // pred_region
        %p719 = scmp.lt.s32.totalorder %s25, 1
        %s720 = scalar_select %p719, %s25, 1
        %p721 = scmp.lt.s32.totalorder %s26, 0
        %s722 = scalar_select %p721, %s26, 0
        %s723 = sadd.s32 %s722, %s720
        %s724 = smul.addr %s723, 4
        %s725 = scalar_lea.vmem %s5, %s724
      $region60: #{transformer_forward.7} parent=55 // pred_fallthru
        _
      // Predicated region
      $region61: #{transformer_forward.7} parent=55 // pred_check
        %p726 = pneg %p197
      $region62: #{transformer_forward.7} parent=55 // pred_check_branch
        %728 = sbr.rel (%p726) target = $region64
      $region63: #{transformer_forward.7} parent=55 // pred_region
        %p729 = scmp.lt.s32.totalorder %s25, 1
        %s730 = scalar_select %p729, %s25, 1
        %p731 = scmp.lt.s32.totalorder %s26, 0
        %s732 = scalar_select %p731, %s26, 0
        %s733 = sadd.s32 %s732, %s730
        %s734 = smul.addr %s733, 4
        %s735 = scalar_lea.vmem %s6, %s734
      $region64: #{transformer_forward.7} parent=55 // pred_fallthru
        _
      // Predicated region
      $region65: #{transformer_forward.7} parent=55 // pred_check
        %p736 = pneg %p225
      $region66: #{transformer_forward.7} parent=55 // pred_check_branch
        %738 = sbr.rel (%p736) target = $region68
      $region67: #{transformer_forward.7} parent=55 // pred_region
        %p739 = scmp.lt.s32.totalorder %s25, 1
        %s740 = scalar_select %p739, %s25, 1
        %p741 = scmp.lt.s32.totalorder %s26, 0
        %s742 = scalar_select %p741, %s26, 0
        %s743 = sadd.s32 %s742, %s740
        %s744 = smul.addr %s743, 4
        %s745 = scalar_lea.vmem %s7, %s744
      $region68: #{transformer_forward.7} parent=55 // pred_fallthru
        _
    $region56: #{transformer_forward.7} parent=5 // pred_fallthru
      _
  $region6: #{transformer_forward.7} parent=0 // loop_footer
    %s18 = sadd.s32 1, %s14
  $region7: #{transformer_forward.7} parent=0 // loop_footer_branch
    %13 = sbr.rel target = $region3
  $region8: #{transformer_forward.7} parent=0 // loop_exit
    _

// kernel: transformer_forward.9
$region0: #{transformer_forward.9}
  #allocation0 [shape = 'u32[]', space=smem, size = 0x4, offset = 0x4, fixed_abs, tag = 'smem constant byte address 0x4 - core index']
  #allocation1 [shape = 'u32[144,128]{1,0:T(1,128)}', space=vmem, size = 0x12000, scoped, tag = 'internal scratch']
  %s0 = inlined_call_operand.vmem [shape: f32[2,8,32], index: 0, kind: input, shape index: {}]
  %s1 = inlined_call_operand.vmem [shape: f32[1,32], index: 1, kind: input, shape index: {}]
  %s2 = inlined_call_operand.vmem [shape: f32[1,32], index: 2, kind: input, shape index: {}]
  %s3 = inlined_call_operand.vmem [shape: bf16[32,128], index: 3, kind: input, shape index: {}]
  %s4 = inlined_call_operand.vmem [shape: f32[1,128], index: 4, kind: input, shape index: {}]
  %s5 = inlined_call_operand.vmem [shape: bf16[128,32], index: 5, kind: input, shape index: {}]
  %s6 = inlined_call_operand.vmem [shape: f32[1,32], index: 6, kind: input, shape index: {}]
  %s7 = inlined_call_operand.vmem [shape: f32[2,8,32], index: 7, kind: output, shape index: {}]
  %s8 = sld [smem:[#allocation0]]
  $region61: #{transformer_forward.9} parent=0
    _
  %s10 = ssub.s32 1, %s8
  %s11 = scalar_select 0, %s10, %s8
  loop: start=0, step=1, limit=4
  $region2: #{transformer_forward.9} parent=0 // loop_pre_header
    _
  $region3: #{transformer_forward.9} parent=0 // loop_header
    %s13 = sphi 0, %s17
    %p14 = scmp.ge.s32.totalorder %s13, 4
    %s20 = sphi 0, %s32
    %s21 = sphi 0, %s28
    %s22 = sphi 0, %s20
    %s23 = sphi 0, %s21
    %s24 = sphi 0, %s22
    %s25 = sphi 0, %s23
    %s37 = sphi 0, %s39
    %s40 = sphi 0, %s37
    %s41 = sphi 0, %s40
    %s57 = sphi 0, %s41
    %s61 = sphi 0, %s61
    %s63 = sphi 0, %s61
    %s64 = sphi 0, %s63
    %s78 = sphi 0, %s64
    %s82 = sphi 0, %s82
    %s84 = sphi 0, %s82
    %s85 = sphi 0, %s84
    %s99 = sphi 0, %s85
    %s103 = sphi 0, %s103
    %s105 = sphi 0, %s103
    %s106 = sphi 0, %s105
    %s120 = sphi 0, %s106
    %s124 = sphi 0, %s124
    %s126 = sphi 0, %s124
    %s127 = sphi 0, %s126
    %s141 = sphi 0, %s127
    %s145 = sphi 0, %s145
    %s147 = sphi 0, %s145
    %s148 = sphi 0, %s147
    %s162 = sphi 0, %s148
    %s166 = sphi 0, %s166
    %s168 = sphi 0, %s166
    %s169 = sphi 0, %s168
    %s183 = sphi 0, %s169
    %s191 = sphi 0, %s193
    %s194 = sphi 0, %s191
    %s195 = sphi 0, %s194
    %s211 = sphi 0, %s195
  $region4: #{transformer_forward.9} parent=0 // loop_header_branch
    %16 = sbr.rel (%p14) target = $region8
  $region5: #{transformer_forward.9} parent=0 // loop_body
    %s18 = ssub.s32 %s13, 1
    %s19 = ssub.s32 %s13, 2
    %s26 = sadd.s32 1, %s21
    %p27 = scmp.ge.s32.totalorder %s26, 1
    %s28 = scalar_select %p27, 0, %s26
    %s29 = sadd.s32 1, %s20
    %s30 = scalar_select %p27, %s29, %s20
    %p31 = scmp.ge.s32.totalorder %s30, 2
    %s32 = scalar_select %p31, 0, %s30
    %s33 = ssub.s32 %s20, %s32
    %s34 = ssub.s32 %s21, %s28
    %s35 = sor.u32 %s33, %s34
    %p36 = scmp.eq.s32.totalorder %s35, 0
    %s38 = sadd.s32 %s37, 1
    %s39 = scalar_select %p36, %s37, %s38
    %p42 = pneg %p36
    %p43 = scmp.eq.s32.totalorder %s13, 1
    %p44 = por %p42, %p43
    %p45 = scmp.ne.s32.totalorder %s37, %s40
    %p46 = scmp.eq.s32.totalorder %s13, 0
    %p47 = por %p45, %p46
    %p48 = scmp.ne.s32.totalorder %s37, %s40
    %p49 = scmp.eq.s32.totalorder %s18, 1
    %p50 = por %p48, %p49
    %p51 = scmp.ne.s32.totalorder %s40, %s41
    %p52 = scmp.eq.s32.totalorder %s18, 0
    %p53 = por %p51, %p52
    %p54 = scmp.ne.s32.totalorder %s40, %s41
    %p55 = scmp.eq.s32.totalorder %s19, 1
    %p56 = por %p54, %p55
    %p58 = scmp.ne.s32.totalorder %s41, %s57
    %p59 = scmp.eq.s32.totalorder %s19, 0
    %p60 = por %p58, %p59
    %s62 = sadd.s32 %s61, 1
    %p65 = scmp.eq.s32.totalorder %s13, 1
    %p66 = scmp.ne.s32.totalorder %s61, %s63
    %p67 = scmp.eq.s32.totalorder %s13, 0
    %p68 = por %p66, %p67
    %p69 = scmp.ne.s32.totalorder %s61, %s63
    %p70 = scmp.eq.s32.totalorder %s18, 1
    %p71 = por %p69, %p70
    %p72 = scmp.ne.s32.totalorder %s63, %s64
    %p73 = scmp.eq.s32.totalorder %s18, 0
    %p74 = por %p72, %p73
    %p75 = scmp.ne.s32.totalorder %s63, %s64
    %p76 = scmp.eq.s32.totalorder %s19, 1
    %p77 = por %p75, %p76
    %p79 = scmp.ne.s32.totalorder %s64, %s78
    %p80 = scmp.eq.s32.totalorder %s19, 0
    %p81 = por %p79, %p80
    %s83 = sadd.s32 %s82, 1
    %p86 = scmp.eq.s32.totalorder %s13, 1
    %p87 = scmp.ne.s32.totalorder %s82, %s84
    %p88 = scmp.eq.s32.totalorder %s13, 0
    %p89 = por %p87, %p88
    %p90 = scmp.ne.s32.totalorder %s82, %s84
    %p91 = scmp.eq.s32.totalorder %s18, 1
    %p92 = por %p90, %p91
    %p93 = scmp.ne.s32.totalorder %s84, %s85
    %p94 = scmp.eq.s32.totalorder %s18, 0
    %p95 = por %p93, %p94
    %p96 = scmp.ne.s32.totalorder %s84, %s85
    %p97 = scmp.eq.s32.totalorder %s19, 1
    %p98 = por %p96, %p97
    %p100 = scmp.ne.s32.totalorder %s85, %s99
    %p101 = scmp.eq.s32.totalorder %s19, 0
    %p102 = por %p100, %p101
    %s104 = sadd.s32 %s103, 1
    %p107 = scmp.eq.s32.totalorder %s13, 1
    %p108 = scmp.ne.s32.totalorder %s103, %s105
    %p109 = scmp.eq.s32.totalorder %s13, 0
    %p110 = por %p108, %p109
    %p111 = scmp.ne.s32.totalorder %s103, %s105
    %p112 = scmp.eq.s32.totalorder %s18, 1
    %p113 = por %p111, %p112
    %p114 = scmp.ne.s32.totalorder %s105, %s106
    %p115 = scmp.eq.s32.totalorder %s18, 0
    %p116 = por %p114, %p115
    %p117 = scmp.ne.s32.totalorder %s105, %s106
    %p118 = scmp.eq.s32.totalorder %s19, 1
    %p119 = por %p117, %p118
    %p121 = scmp.ne.s32.totalorder %s106, %s120
    %p122 = scmp.eq.s32.totalorder %s19, 0
    %p123 = por %p121, %p122
    %s125 = sadd.s32 %s124, 1
    %p128 = scmp.eq.s32.totalorder %s13, 1
    %p129 = scmp.ne.s32.totalorder %s124, %s126
    %p130 = scmp.eq.s32.totalorder %s13, 0
    %p131 = por %p129, %p130
    %p132 = scmp.ne.s32.totalorder %s124, %s126
    %p133 = scmp.eq.s32.totalorder %s18, 1
    %p134 = por %p132, %p133
    %p135 = scmp.ne.s32.totalorder %s126, %s127
    %p136 = scmp.eq.s32.totalorder %s18, 0
    %p137 = por %p135, %p136
    %p138 = scmp.ne.s32.totalorder %s126, %s127
    %p139 = scmp.eq.s32.totalorder %s19, 1
    %p140 = por %p138, %p139
    %p142 = scmp.ne.s32.totalorder %s127, %s141
    %p143 = scmp.eq.s32.totalorder %s19, 0
    %p144 = por %p142, %p143
    %s146 = sadd.s32 %s145, 1
    %p149 = scmp.eq.s32.totalorder %s13, 1
    %p150 = scmp.ne.s32.totalorder %s145, %s147
    %p151 = scmp.eq.s32.totalorder %s13, 0
    %p152 = por %p150, %p151
    %p153 = scmp.ne.s32.totalorder %s145, %s147
    %p154 = scmp.eq.s32.totalorder %s18, 1
    %p155 = por %p153, %p154
    %p156 = scmp.ne.s32.totalorder %s147, %s148
    %p157 = scmp.eq.s32.totalorder %s18, 0
    %p158 = por %p156, %p157
    %p159 = scmp.ne.s32.totalorder %s147, %s148
    %p160 = scmp.eq.s32.totalorder %s19, 1
    %p161 = por %p159, %p160
    %p163 = scmp.ne.s32.totalorder %s148, %s162
    %p164 = scmp.eq.s32.totalorder %s19, 0
    %p165 = por %p163, %p164
    %s167 = sadd.s32 %s166, 1
    %p170 = scmp.eq.s32.totalorder %s13, 1
    %p171 = scmp.ne.s32.totalorder %s166, %s168
    %p172 = scmp.eq.s32.totalorder %s13, 0
    %p173 = por %p171, %p172
    %p174 = scmp.ne.s32.totalorder %s166, %s168
    %p175 = scmp.eq.s32.totalorder %s18, 1
    %p176 = por %p174, %p175
    %p177 = scmp.ne.s32.totalorder %s168, %s169
    %p178 = scmp.eq.s32.totalorder %s18, 0
    %p179 = por %p177, %p178
    %p180 = scmp.ne.s32.totalorder %s168, %s169
    %p181 = scmp.eq.s32.totalorder %s19, 1
    %p182 = por %p180, %p181
    %p184 = scmp.ne.s32.totalorder %s169, %s183
    %p185 = scmp.eq.s32.totalorder %s19, 0
    %p186 = por %p184, %p185
    %s187 = ssub.s32 %s20, %s32
    %s188 = ssub.s32 %s21, %s28
    %s189 = sor.u32 %s187, %s188
    %p190 = scmp.eq.s32.totalorder %s189, 0
    %s192 = sadd.s32 %s191, 1
    %s193 = scalar_select %p190, %s191, %s192
    %p196 = pneg %p190
    %p197 = scmp.eq.s32.totalorder %s13, 1
    %p198 = por %p196, %p197
    %p199 = scmp.ne.s32.totalorder %s191, %s194
    %p200 = scmp.eq.s32.totalorder %s13, 0
    %p201 = por %p199, %p200
    %p202 = scmp.ne.s32.totalorder %s191, %s194
    %p203 = scmp.eq.s32.totalorder %s18, 1
    %p204 = por %p202, %p203
    %p205 = scmp.ne.s32.totalorder %s194, %s195
    %p206 = scmp.eq.s32.totalorder %s18, 0
    %p207 = por %p205, %p206
    %p208 = scmp.ne.s32.totalorder %s194, %s195
    %p209 = scmp.eq.s32.totalorder %s19, 1
    %p210 = por %p208, %p209
    %p212 = scmp.ne.s32.totalorder %s195, %s211
    %p213 = scmp.eq.s32.totalorder %s19, 0
    %p214 = por %p212, %p213
    %p215 = scmp.le.s32.totalorder 1, %s13
    %p216 = scmp.lt.s32.totalorder %s13, 3
    %p217 = pnand %p215, %p216
    %p218 = pneg %p217
    // Predicated region
    $region9: #{transformer_forward.9} parent=5 // pred_check
      _
    $region10: #{transformer_forward.9} parent=5 // pred_check_branch
      %220 = sbr.rel (%p217) target = $region12
    $region11: #{transformer_forward.9} parent=5 // pred_region
      %s221 = ssub.s32 %s13, 1
      // Predicated region
      $region13: #{transformer_forward.9} parent=11 // pred_check
        %p222 = pneg %p74
      $region14: #{transformer_forward.9} parent=11 // pred_check_branch
        %224 = sbr.rel (%p222) target = $region16
      $region15: #{transformer_forward.9} parent=11 // pred_region
        _
      $region16: #{transformer_forward.9} parent=11 // pred_fallthru
        _
      // Predicated region
      $region17: #{transformer_forward.9} parent=11 // pred_check
        %p225 = pneg %p95
      $region18: #{transformer_forward.9} parent=11 // pred_check_branch
        %227 = sbr.rel (%p225) target = $region20
      $region19: #{transformer_forward.9} parent=11 // pred_region
        _
      $region20: #{transformer_forward.9} parent=11 // pred_fallthru
        _
      // Predicated region
      $region21: #{transformer_forward.9} parent=11 // pred_check
        %p228 = pneg %p116
      $region22: #{transformer_forward.9} parent=11 // pred_check_branch
        %230 = sbr.rel (%p228) target = $region24
      $region23: #{transformer_forward.9} parent=11 // pred_region
        _
      $region24: #{transformer_forward.9} parent=11 // pred_fallthru
        _
      // Predicated region
      $region25: #{transformer_forward.9} parent=11 // pred_check
        %p231 = pneg %p137
      $region26: #{transformer_forward.9} parent=11 // pred_check_branch
        %233 = sbr.rel (%p231) target = $region28
      $region27: #{transformer_forward.9} parent=11 // pred_region
        _
      $region28: #{transformer_forward.9} parent=11 // pred_fallthru
        _
      // Predicated region
      $region29: #{transformer_forward.9} parent=11 // pred_check
        %p234 = pneg %p158
      $region30: #{transformer_forward.9} parent=11 // pred_check_branch
        %236 = sbr.rel (%p234) target = $region32
      $region31: #{transformer_forward.9} parent=11 // pred_region
        _
      $region32: #{transformer_forward.9} parent=11 // pred_fallthru
        _
      // Predicated region
      $region33: #{transformer_forward.9} parent=11 // pred_check
        %p237 = pneg %p179
      $region34: #{transformer_forward.9} parent=11 // pred_check_branch
        %239 = sbr.rel (%p237) target = $region36
      $region35: #{transformer_forward.9} parent=11 // pred_region
        _
      $region36: #{transformer_forward.9} parent=11 // pred_fallthru
        _
    $region12: #{transformer_forward.9} parent=5 // pred_fallthru
      _
    %p240 = scmp.lt.s32.totalorder %s13, 2
    // Predicated region
    $region37: #{transformer_forward.9} parent=5 // pred_check
      %p241 = pneg %p240
    $region38: #{transformer_forward.9} parent=5 // pred_check_branch
      %243 = sbr.rel (%p241) target = $region40
    $region39: #{transformer_forward.9} parent=5 // pred_region
      // Predicated region
      $region41: #{transformer_forward.9} parent=39 // pred_check
        %p244 = pneg %p47
      $region42: #{transformer_forward.9} parent=39 // pred_check_branch
        %246 = sbr.rel (%p244) target = $region44
      $region43: #{transformer_forward.9} parent=39 // pred_region
        %p247 = scmp.lt.s32.totalorder %s20, 1
        %s248 = scalar_select %p247, %s20, 1
        %p249 = scmp.lt.s32.totalorder %s21, 0
        %s250 = scalar_select %p249, %s21, 0
        %s251 = sadd.s32 %s250, %s248
        %s252 = smul.addr %s251, 8
        %s253 = scalar_lea.vmem %s0, %s252
      $region44: #{transformer_forward.9} parent=39 // pred_fallthru
        _
    $region40: #{transformer_forward.9} parent=5 // pred_fallthru
      _
    %p254 = scmp.le.s32.totalorder 1, %s13
    %p255 = scmp.lt.s32.totalorder %s13, 3
    %p256 = pnand %p254, %p255
    %p257 = pneg %p256
    // Predicated region
    $region45: #{transformer_forward.9} parent=5 // pred_check
      _
    $region46: #{transformer_forward.9} parent=5 // pred_check_branch
      %259 = sbr.rel (%p256) target = $region48
    $region47: #{transformer_forward.9} parent=5 // pred_region
      %s260 = ssub.s32 %s13, 1
      %p261 = scmp.lt.s32.totalorder %s22, 1
      %s262 = scalar_select %p261, %s22, 1
      %p263 = scmp.lt.s32.totalorder %s23, 0
      %s264 = scalar_select %p263, %s23, 0
      %s265 = sadd.s32 %s264, %s262
      %s266 = smul.addr %s265, 8
      %s267 = scalar_lea.vmem %s0, %s266
      %p268 = pneg %p53
      %p269 = pneg %p50
      %p270 = pneg %p74
      %p271 = pneg %p71
      %p272 = pneg %p95
      %p273 = pneg %p92
      %p274 = pneg %p116
      %p275 = pneg %p113
      %p276 = pneg %p137
      %p277 = pneg %p134
      %p278 = pneg %p158
      %p279 = pneg %p155
      %p280 = pneg %p179
      %p281 = pneg %p176
      %p282 = pneg %p207
      %p283 = pneg %p204
      %p284 = scmp.lt.s32.totalorder %s22, 1
      %s285 = scalar_select %p284, %s22, 1
      %p286 = scmp.lt.s32.totalorder %s23, 0
      %s287 = scalar_select %p286, %s23, 0
      %s288 = sadd.s32 %s287, %s285
      %s289 = smul.addr %s288, 8
      %s290 = scalar_lea.vmem %s7, %s289
      %p291 = scmp.lt.s32.totalorder %s22, 1
      %s292 = scalar_select %p291, %s22, 1
      %p293 = scmp.lt.s32.totalorder %s23, 0
      %s294 = scalar_select %p293, %s23, 0
      %s295 = sadd.s32 %s294, %s292
      %s296 = smul.addr %s295, 8
      %s297 = scalar_lea.vmem %s0, %s296
      %p298 = scmp.lt.s32.totalorder %s22, 1
      %s299 = scalar_select %p298, %s22, 1
      %p300 = scmp.lt.s32.totalorder %s23, 0
      %s301 = scalar_select %p300, %s23, 0
      %s302 = sadd.s32 %s301, %s299
      %s303 = smul.addr %s302, 8
      %s304 = scalar_lea.vmem %s7, %s303
      %v306 = vld [vmem:[%s297] sm:$0xff]
      %v307 = vld [vmem:[%s1] sm:$0x1]
      %v308 = vld [vmem:[%s2] sm:$0x1]
      %vm309 = vcmask 261120
      %v310 = vsel %vm309, %v306, 0.0
      %311 = vadd.xlane.f32.xlu0 %v310
      %v312 = vpop.xlane.xlu0 %311
      %v313 = vrcp.pop 32.0
      %v314 = vmul.f32 %v312, %v313
      %v315 = vsub.f32 %v306, %v314
      %v316 = vmul.f32 %v315, %v315
      %v317 = vsel %vm309, %v316, 0.0
      %318 = vadd.xlane.f32.xlu0 %v317
      %v319 = vpop.xlane.xlu0 %318
      %v320 = vmul.f32 %v319, %v313
      %v321 = vadd.f32 %v320, 1e-05
      %v322 = vrsqrt.pop %v321
      %v323 = vmul.f32 %v315, %v322
      %v325 = vlaneseq
      %v326 = vshrl.u32 %v325, 7
      %v327 = vsub.s32 0, %v326
      %v328 = vrot.slane %v307, %v327
      %v330 = vmul.f32 %v323, %v328
      %v332 = vlaneseq
      %v333 = vshrl.u32 %v332, 7
      %v334 = vsub.s32 0, %v333
      %v335 = vrot.slane %v308, %v334
      %v337 = vadd.f32 %v330, %v335
      %v338 = vpack.c.bf16 %v337, %v337
      %v339 = vld [vmem:[%s3] sm:$0xf]
      %v340 = vld [vmem:[%s3 + $0x4] sm:$0xf]
      %v341 = vld [vmem:[%s3 + $0x8] sm:$0xf]
      %v342 = vld [vmem:[%s3 + $0xc] sm:$0xf]
      %v343 = vld [vmem:[%s4] sm:$0x1]
      %v345 = vlaneseq
      %v346 = vshrl.u32 %v345, 7
      %v347 = vsub.s32 0, %v346
      %v348 = vrot.slane %v343, %v347
      %v354 = vunpack.c.l.b16 %v339
      %v355 = vunpack.c.l.b16 %v340
      %v356 = vunpack.c.l.b16 %v341
      %v357 = vunpack.c.l.b16 %v342
      %v358 = vpack.c.b16 %v355, %v354
      %v359 = vpack.c.b16 %v357, %v356
      %v363 = vsel %vm309, %v338, 0
      %365 = vmatprep.subr.bf16.mxu0 0
      %366 = vmatpush1.bf16.msra.mxu0 0
      %367 = vmatprep.subr.bf16.mxu0 0
      %368 = vmatpush1.bf16.msra.mxu0 0
      %369 = vmatprep.subr.bf16.mxu0 0
      %370 = vmatpush1.bf16.msra.mxu0 0
      %371 = vmatprep.subr.bf16.mxu0 0
      %372 = vmatpush1.bf16.msra.mxu0 0
      %373 = vmatprep.subr.bf16.mxu0 0
      %374 = vmatpush1.bf16.msra.mxu0 0
      %375 = vmatprep.subr.bf16.mxu0 0
      %376 = vmatpush1.bf16.msra.mxu0 0
      %377 = vmatprep.subr.bf16.mxu0 0
      %378 = vmatpush1.bf16.msra.mxu0 %v359
      %379 = vmatprep.subr.bf16.mxu0 0
      %380 = vmatpush1.bf16.msra.mxu0 %v358
      %381 = vmatprep.subr.bf16.mxu0 0
      %382 = vmatpush2.bf16.msra.mxu0 0
      %383 = vmatprep.subr.bf16.mxu0 0
      %384 = vmatpush2.bf16.msra.mxu0 0
      %385 = vmatprep.subr.bf16.mxu0 0
      %386 = vmatpush2.bf16.msra.mxu0 0
      %387 = vmatprep.subr.bf16.mxu0 0
      %388 = vmatpush2.bf16.msra.mxu0 0
      %389 = vmatprep.subr.bf16.mxu0 0
      %390 = vmatpush2.bf16.msra.mxu0 0
      %391 = vmatprep.subr.bf16.mxu0 0
      %392 = vmatpush2.bf16.msra.mxu0 0
      %393 = vmatprep.subr.bf16.mxu0 0
      %394 = vmatpush2.bf16.msra.mxu0 0
      %395 = vmatprep.subr.bf16.mxu0 0
      %396 = vmatpush2.bf16.msra.mxu0 0
      %397 = vmatprep.mubr.bf16.mxu0 0
      %398 = vmatmul.mubr.bf16.gmra.mxu0 %v363
      %v399 = vpop.f32.mrf.mxu0
      %v400 = vadd.f32 %v348, %v399
      %v401 = vpop.f32.mrf.mxu0
      %v402 = vpop.f32.mrf.mxu0
      %v403 = vpop.f32.mrf.mxu0
      %404 = vdwg.mxu0
      %v405 = vmax.f32 %v400, 0.0
      %v406 = vld [vmem:[%s6] sm:$0x1]
      %v408 = vlaneseq
      %v409 = vshrl.u32 %v408, 7
      %v410 = vsub.s32 0, %v409
      %v411 = vrot.slane %v406, %v410
      %v413 = vadd.f32 %v306, %v411
      %v414 = vpack.c.bf16 %v405, %v405
      %v415 = vld [vmem:[%s5] sm:$0xf]
      %v416 = vld [vmem:[%s5 + $0x4] sm:$0xf]
      %v417 = vld [vmem:[%s5 + $0x8] sm:$0xf]
      %v418 = vld [vmem:[%s5 + $0xc] sm:$0xf]
      %v419 = vld [vmem:[%s5 + $0x10] sm:$0xf]
      %v420 = vld [vmem:[%s5 + $0x14] sm:$0xf]
      %v421 = vld [vmem:[%s5 + $0x18] sm:$0xf]
      %v422 = vld [vmem:[%s5 + $0x1c] sm:$0xf]
      %v423 = vld [vmem:[%s5 + $0x20] sm:$0xf]
      %v424 = vld [vmem:[%s5 + $0x24] sm:$0xf]
      %v425 = vld [vmem:[%s5 + $0x28] sm:$0xf]
      %v426 = vld [vmem:[%s5 + $0x2c] sm:$0xf]
      %v427 = vld [vmem:[%s5 + $0x30] sm:$0xf]
      %v428 = vld [vmem:[%s5 + $0x34] sm:$0xf]
      %v429 = vld [vmem:[%s5 + $0x38] sm:$0xf]
      %v430 = vld [vmem:[%s5 + $0x3c] sm:$0xf]
      %v447 = vunpack.c.l.b16 %v415
      %v448 = vunpack.c.l.b16 %v416
      %v449 = vunpack.c.l.b16 %v417
      %v450 = vunpack.c.l.b16 %v418
      %v451 = vunpack.c.l.b16 %v419
      %v452 = vunpack.c.l.b16 %v420
      %v453 = vunpack.c.l.b16 %v421
      %v454 = vunpack.c.l.b16 %v422
      %v455 = vunpack.c.l.b16 %v423
      %v456 = vunpack.c.l.b16 %v424
      %v457 = vunpack.c.l.b16 %v425
      %v458 = vunpack.c.l.b16 %v426
      %v459 = vunpack.c.l.b16 %v427
      %v460 = vunpack.c.l.b16 %v428
      %v461 = vunpack.c.l.b16 %v429
      %v462 = vunpack.c.l.b16 %v430
      %v463 = vpack.c.b16 %v448, %v447
      %v464 = vpack.c.b16 %v450, %v449
      %v465 = vpack.c.b16 %v452, %v451
      %v466 = vpack.c.b16 %v454, %v453
      %v467 = vpack.c.b16 %v456, %v455
      %v468 = vpack.c.b16 %v458, %v457
      %v469 = vpack.c.b16 %v460, %v459
      %v470 = vpack.c.b16 %v462, %v461
      %479 = vmatprep.subr.bf16.mxu0 0
      %480 = vmatpush1.bf16.msra.mxu0 %v470
      %481 = vmatprep.subr.bf16.mxu0 0
      %482 = vmatpush1.bf16.msra.mxu0 %v469
      %483 = vmatprep.subr.bf16.mxu0 0
      %484 = vmatpush1.bf16.msra.mxu0 %v468
      %485 = vmatprep.subr.bf16.mxu0 0
      %486 = vmatpush1.bf16.msra.mxu0 %v467
      %487 = vmatprep.subr.bf16.mxu0 0
      %488 = vmatpush1.bf16.msra.mxu0 %v466
      %489 = vmatprep.subr.bf16.mxu0 0
      %490 = vmatpush1.bf16.msra.mxu0 %v465
      %491 = vmatprep.subr.bf16.mxu0 0
      %492 = vmatpush1.bf16.msra.mxu0 %v464
      %493 = vmatprep.subr.bf16.mxu0 0
      %494 = vmatpush1.bf16.msra.mxu0 %v463
      %495 = vmatprep.subr.bf16.mxu0 0
      %496 = vmatpush2.bf16.msra.mxu0 0
      %497 = vmatprep.subr.bf16.mxu0 0
      %498 = vmatpush2.bf16.msra.mxu0 0
      %499 = vmatprep.subr.bf16.mxu0 0
      %500 = vmatpush2.bf16.msra.mxu0 0
      %501 = vmatprep.subr.bf16.mxu0 0
      %502 = vmatpush2.bf16.msra.mxu0 0
      %503 = vmatprep.subr.bf16.mxu0 0
      %504 = vmatpush2.bf16.msra.mxu0 0
      %505 = vmatprep.subr.bf16.mxu0 0
      %506 = vmatpush2.bf16.msra.mxu0 0
      %507 = vmatprep.subr.bf16.mxu0 0
      %508 = vmatpush2.bf16.msra.mxu0 0
      %509 = vmatprep.subr.bf16.mxu0 0
      %510 = vmatpush2.bf16.msra.mxu0 0
      %511 = vmatprep.mubr.bf16.mxu0 0
      %512 = vmatmul.mubr.bf16.gmra.mxu0 %v414
      %v513 = vpop.f32.mrf.mxu0
      %v514 = vadd.f32 0.0, %v513
      %v515 = vpop.f32.mrf.mxu0
      %v516 = vpop.f32.mrf.mxu0
      %v517 = vpop.f32.mrf.mxu0
      %518 = vdwg.mxu0
      %v519 = vadd.f32 %v413, %v514
      %520 = vst.msk [vmem:[%s304] sm:$0xff] %vm309, %v519
      %p521 = scmp.lt.s32.totalorder %s22, 1
      %s522 = scalar_select %p521, %s22, 1
      %p523 = scmp.lt.s32.totalorder %s23, 0
      %s524 = scalar_select %p523, %s23, 0
      %s525 = sadd.s32 %s524, %s522
      %s526 = smul.addr %s525, 8
      %s527 = scalar_lea.vmem %s7, %s526
      // Predicated region
      $region49: #{transformer_forward.9} parent=47 // pred_check
        %p528 = pneg %p204
      $region50: #{transformer_forward.9} parent=47 // pred_check_branch
        %530 = sbr.rel (%p528) target = $region52
      $region51: #{transformer_forward.9} parent=47 // pred_region
        _
      $region52: #{transformer_forward.9} parent=47 // pred_fallthru
        _
    $region48: #{transformer_forward.9} parent=5 // pred_fallthru
      _
    %p531 = scmp.le.s32.totalorder 2, %s13
    // Predicated region
    $region53: #{transformer_forward.9} parent=5 // pred_check
      %p532 = pneg %p531
    $region54: #{transformer_forward.9} parent=5 // pred_check_branch
      %534 = sbr.rel (%p532) target = $region56
    $region55: #{transformer_forward.9} parent=5 // pred_region
      %s535 = ssub.s32 %s13, 2
      // Predicated region
      $region57: #{transformer_forward.9} parent=55 // pred_check
        %p536 = pneg %p210
      $region58: #{transformer_forward.9} parent=55 // pred_check_branch
        %538 = sbr.rel (%p536) target = $region60
      $region59: #{transformer_forward.9} parent=55 // pred_region
        %p539 = scmp.lt.s32.totalorder %s24, 1
        %s540 = scalar_select %p539, %s24, 1
        %p541 = scmp.lt.s32.totalorder %s25, 0
        %s542 = scalar_select %p541, %s25, 0
        %s543 = sadd.s32 %s542, %s540
        %s544 = smul.addr %s543, 8
        %s545 = scalar_lea.vmem %s7, %s544
      $region60: #{transformer_forward.9} parent=55 // pred_fallthru
        _
    $region56: #{transformer_forward.9} parent=5 // pred_fallthru
      _
  $region6: #{transformer_forward.9} parent=0 // loop_footer
    %s17 = sadd.s32 1, %s13
  $region7: #{transformer_forward.9} parent=0 // loop_footer_branch
    %12 = sbr.rel target = $region3
  $region8: #{transformer_forward.9} parent=0 // loop_exit
    _

// kernel: transformer_forward.10
$region0: #{transformer_forward.10}
  #allocation0 [shape = 'u32[]', space=smem, size = 0x4, offset = 0x4, fixed_abs, tag = 'smem constant byte address 0x4 - core index']
  #allocation1 [shape = 'u32[144,128]{1,0:T(1,128)}', space=vmem, size = 0x12000, scoped, tag = 'internal scratch']
  %s0 = inlined_call_operand.vmem [shape: f32[2,8,32], index: 0, kind: input, shape index: {}]
  %s1 = inlined_call_operand.vmem [shape: f32[1,32], index: 1, kind: input, shape index: {}]
  %s2 = inlined_call_operand.vmem [shape: f32[1,32], index: 2, kind: input, shape index: {}]
  %s3 = inlined_call_operand.vmem [shape: bf16[32,96], index: 3, kind: input, shape index: {}]
  %s4 = inlined_call_operand.vmem [shape: f32[1,96], index: 4, kind: input, shape index: {}]
  %s5 = inlined_call_operand.vmem [shape: bf16[2,2,8,16], index: 5, kind: output, shape index: {0}]
  %s6 = inlined_call_operand.vmem [shape: bf16[2,2,8,16], index: 6, kind: output, shape index: {1}]
  %s7 = inlined_call_operand.vmem [shape: bf16[2,2,8,16], index: 7, kind: output, shape index: {2}]
  %8 = xla_tuple %s5, %s6, %s7
  %s9 = sld [smem:[#allocation0]]
  $region69: #{transformer_forward.10} parent=0
    _
  %s11 = ssub.s32 1, %s9
  %s12 = scalar_select 0, %s11, %s9
  loop: start=0, step=1, limit=4
  $region2: #{transformer_forward.10} parent=0 // loop_pre_header
    _
  $region3: #{transformer_forward.10} parent=0 // loop_header
    %s14 = sphi 0, %s18
    %p15 = scmp.ge.s32.totalorder %s14, 4
    %s21 = sphi 0, %s33
    %s22 = sphi 0, %s29
    %s23 = sphi 0, %s21
    %s24 = sphi 0, %s22
    %s25 = sphi 0, %s23
    %s26 = sphi 0, %s24
    %s38 = sphi 0, %s40
    %s41 = sphi 0, %s38
    %s42 = sphi 0, %s41
    %s58 = sphi 0, %s42
    %s62 = sphi 0, %s62
    %s64 = sphi 0, %s62
    %s65 = sphi 0, %s64
    %s79 = sphi 0, %s65
    %s83 = sphi 0, %s83
    %s85 = sphi 0, %s83
    %s86 = sphi 0, %s85
    %s100 = sphi 0, %s86
    %s104 = sphi 0, %s104
    %s106 = sphi 0, %s104
    %s107 = sphi 0, %s106
    %s121 = sphi 0, %s107
    %s125 = sphi 0, %s125
    %s127 = sphi 0, %s125
    %s128 = sphi 0, %s127
    %s142 = sphi 0, %s128
    %s150 = sphi 0, %s152
    %s153 = sphi 0, %s150
    %s154 = sphi 0, %s153
    %s170 = sphi 0, %s154
    %s178 = sphi 0, %s180
    %s181 = sphi 0, %s178
    %s182 = sphi 0, %s181
    %s198 = sphi 0, %s182
    %s206 = sphi 0, %s208
    %s209 = sphi 0, %s206
    %s210 = sphi 0, %s209
    %s226 = sphi 0, %s210
  $region4: #{transformer_forward.10} parent=0 // loop_header_branch
    %17 = sbr.rel (%p15) target = $region8
  $region5: #{transformer_forward.10} parent=0 // loop_body
    %s19 = ssub.s32 %s14, 1
    %s20 = ssub.s32 %s14, 2
    %s27 = sadd.s32 1, %s22
    %p28 = scmp.ge.s32.totalorder %s27, 1
    %s29 = scalar_select %p28, 0, %s27
    %s30 = sadd.s32 1, %s21
    %s31 = scalar_select %p28, %s30, %s21
    %p32 = scmp.ge.s32.totalorder %s31, 2
    %s33 = scalar_select %p32, 0, %s31
    %s34 = ssub.s32 %s21, %s33
    %s35 = ssub.s32 %s22, %s29
    %s36 = sor.u32 %s34, %s35
    %p37 = scmp.eq.s32.totalorder %s36, 0
    %s39 = sadd.s32 %s38, 1
    %s40 = scalar_select %p37, %s38, %s39
    %p43 = pneg %p37
    %p44 = scmp.eq.s32.totalorder %s14, 1
    %p45 = por %p43, %p44
    %p46 = scmp.ne.s32.totalorder %s38, %s41
    %p47 = scmp.eq.s32.totalorder %s14, 0
    %p48 = por %p46, %p47
    %p49 = scmp.ne.s32.totalorder %s38, %s41
    %p50 = scmp.eq.s32.totalorder %s19, 1
    %p51 = por %p49, %p50
    %p52 = scmp.ne.s32.totalorder %s41, %s42
    %p53 = scmp.eq.s32.totalorder %s19, 0
    %p54 = por %p52, %p53
    %p55 = scmp.ne.s32.totalorder %s41, %s42
    %p56 = scmp.eq.s32.totalorder %s20, 1
    %p57 = por %p55, %p56
    %p59 = scmp.ne.s32.totalorder %s42, %s58
    %p60 = scmp.eq.s32.totalorder %s20, 0
    %p61 = por %p59, %p60
    %s63 = sadd.s32 %s62, 1
    %p66 = scmp.eq.s32.totalorder %s14, 1
    %p67 = scmp.ne.s32.totalorder %s62, %s64
    %p68 = scmp.eq.s32.totalorder %s14, 0
    %p69 = por %p67, %p68
    %p70 = scmp.ne.s32.totalorder %s62, %s64
    %p71 = scmp.eq.s32.totalorder %s19, 1
    %p72 = por %p70, %p71
    %p73 = scmp.ne.s32.totalorder %s64, %s65
    %p74 = scmp.eq.s32.totalorder %s19, 0
    %p75 = por %p73, %p74
    %p76 = scmp.ne.s32.totalorder %s64, %s65
    %p77 = scmp.eq.s32.totalorder %s20, 1
    %p78 = por %p76, %p77
    %p80 = scmp.ne.s32.totalorder %s65, %s79
    %p81 = scmp.eq.s32.totalorder %s20, 0
    %p82 = por %p80, %p81
    %s84 = sadd.s32 %s83, 1
    %p87 = scmp.eq.s32.totalorder %s14, 1
    %p88 = scmp.ne.s32.totalorder %s83, %s85
    %p89 = scmp.eq.s32.totalorder %s14, 0
    %p90 = por %p88, %p89
    %p91 = scmp.ne.s32.totalorder %s83, %s85
    %p92 = scmp.eq.s32.totalorder %s19, 1
    %p93 = por %p91, %p92
    %p94 = scmp.ne.s32.totalorder %s85, %s86
    %p95 = scmp.eq.s32.totalorder %s19, 0
    %p96 = por %p94, %p95
    %p97 = scmp.ne.s32.totalorder %s85, %s86
    %p98 = scmp.eq.s32.totalorder %s20, 1
    %p99 = por %p97, %p98
    %p101 = scmp.ne.s32.totalorder %s86, %s100
    %p102 = scmp.eq.s32.totalorder %s20, 0
    %p103 = por %p101, %p102
    %s105 = sadd.s32 %s104, 1
    %p108 = scmp.eq.s32.totalorder %s14, 1
    %p109 = scmp.ne.s32.totalorder %s104, %s106
    %p110 = scmp.eq.s32.totalorder %s14, 0
    %p111 = por %p109, %p110
    %p112 = scmp.ne.s32.totalorder %s104, %s106
    %p113 = scmp.eq.s32.totalorder %s19, 1
    %p114 = por %p112, %p113
    %p115 = scmp.ne.s32.totalorder %s106, %s107
    %p116 = scmp.eq.s32.totalorder %s19, 0
    %p117 = por %p115, %p116
    %p118 = scmp.ne.s32.totalorder %s106, %s107
    %p119 = scmp.eq.s32.totalorder %s20, 1
    %p120 = por %p118, %p119
    %p122 = scmp.ne.s32.totalorder %s107, %s121
    %p123 = scmp.eq.s32.totalorder %s20, 0
    %p124 = por %p122, %p123
    %s126 = sadd.s32 %s125, 1
    %p129 = scmp.eq.s32.totalorder %s14, 1
    %p130 = scmp.ne.s32.totalorder %s125, %s127
    %p131 = scmp.eq.s32.totalorder %s14, 0
    %p132 = por %p130, %p131
    %p133 = scmp.ne.s32.totalorder %s125, %s127
    %p134 = scmp.eq.s32.totalorder %s19, 1
    %p135 = por %p133, %p134
    %p136 = scmp.ne.s32.totalorder %s127, %s128
    %p137 = scmp.eq.s32.totalorder %s19, 0
    %p138 = por %p136, %p137
    %p139 = scmp.ne.s32.totalorder %s127, %s128
    %p140 = scmp.eq.s32.totalorder %s20, 1
    %p141 = por %p139, %p140
    %p143 = scmp.ne.s32.totalorder %s128, %s142
    %p144 = scmp.eq.s32.totalorder %s20, 0
    %p145 = por %p143, %p144
    %s146 = ssub.s32 %s21, %s33
    %s147 = ssub.s32 %s22, %s29
    %s148 = sor.u32 %s146, %s147
    %p149 = scmp.eq.s32.totalorder %s148, 0
    %s151 = sadd.s32 %s150, 1
    %s152 = scalar_select %p149, %s150, %s151
    %p155 = pneg %p149
    %p156 = scmp.eq.s32.totalorder %s14, 1
    %p157 = por %p155, %p156
    %p158 = scmp.ne.s32.totalorder %s150, %s153
    %p159 = scmp.eq.s32.totalorder %s14, 0
    %p160 = por %p158, %p159
    %p161 = scmp.ne.s32.totalorder %s150, %s153
    %p162 = scmp.eq.s32.totalorder %s19, 1
    %p163 = por %p161, %p162
    %p164 = scmp.ne.s32.totalorder %s153, %s154
    %p165 = scmp.eq.s32.totalorder %s19, 0
    %p166 = por %p164, %p165
    %p167 = scmp.ne.s32.totalorder %s153, %s154
    %p168 = scmp.eq.s32.totalorder %s20, 1
    %p169 = por %p167, %p168
    %p171 = scmp.ne.s32.totalorder %s154, %s170
    %p172 = scmp.eq.s32.totalorder %s20, 0
    %p173 = por %p171, %p172
    %s174 = ssub.s32 %s21, %s33
    %s175 = ssub.s32 %s22, %s29
    %s176 = sor.u32 %s174, %s175
    %p177 = scmp.eq.s32.totalorder %s176, 0
    %s179 = sadd.s32 %s178, 1
    %s180 = scalar_select %p177, %s178, %s179
    %p183 = pneg %p177
    %p184 = scmp.eq.s32.totalorder %s14, 1
    %p185 = por %p183, %p184
    %p186 = scmp.ne.s32.totalorder %s178, %s181
    %p187 = scmp.eq.s32.totalorder %s14, 0
    %p188 = por %p186, %p187
    %p189 = scmp.ne.s32.totalorder %s178, %s181
    %p190 = scmp.eq.s32.totalorder %s19, 1
    %p191 = por %p189, %p190
    %p192 = scmp.ne.s32.totalorder %s181, %s182
    %p193 = scmp.eq.s32.totalorder %s19, 0
    %p194 = por %p192, %p193
    %p195 = scmp.ne.s32.totalorder %s181, %s182
    %p196 = scmp.eq.s32.totalorder %s20, 1
    %p197 = por %p195, %p196
    %p199 = scmp.ne.s32.totalorder %s182, %s198
    %p200 = scmp.eq.s32.totalorder %s20, 0
    %p201 = por %p199, %p200
    %s202 = ssub.s32 %s21, %s33
    %s203 = ssub.s32 %s22, %s29
    %s204 = sor.u32 %s202, %s203
    %p205 = scmp.eq.s32.totalorder %s204, 0
    %s207 = sadd.s32 %s206, 1
    %s208 = scalar_select %p205, %s206, %s207
    %p211 = pneg %p205
    %p212 = scmp.eq.s32.totalorder %s14, 1
    %p213 = por %p211, %p212
    %p214 = scmp.ne.s32.totalorder %s206, %s209
    %p215 = scmp.eq.s32.totalorder %s14, 0
    %p216 = por %p214, %p215
    %p217 = scmp.ne.s32.totalorder %s206, %s209
    %p218 = scmp.eq.s32.totalorder %s19, 1
    %p219 = por %p217, %p218
    %p220 = scmp.ne.s32.totalorder %s209, %s210
    %p221 = scmp.eq.s32.totalorder %s19, 0
    %p222 = por %p220, %p221
    %p223 = scmp.ne.s32.totalorder %s209, %s210
    %p224 = scmp.eq.s32.totalorder %s20, 1
    %p225 = por %p223, %p224
    %p227 = scmp.ne.s32.totalorder %s210, %s226
    %p228 = scmp.eq.s32.totalorder %s20, 0
    %p229 = por %p227, %p228
    %p230 = scmp.le.s32.totalorder 1, %s14
    %p231 = scmp.lt.s32.totalorder %s14, 3
    %p232 = pnand %p230, %p231
    %p233 = pneg %p232
    // Predicated region
    $region9: #{transformer_forward.10} parent=5 // pred_check
      _
    $region10: #{transformer_forward.10} parent=5 // pred_check_branch
      %235 = sbr.rel (%p232) target = $region12
    $region11: #{transformer_forward.10} parent=5 // pred_region
      %s236 = ssub.s32 %s14, 1
      // Predicated region
      $region13: #{transformer_forward.10} parent=11 // pred_check
        %p237 = pneg %p75
      $region14: #{transformer_forward.10} parent=11 // pred_check_branch
        %239 = sbr.rel (%p237) target = $region16
      $region15: #{transformer_forward.10} parent=11 // pred_region
        _
      $region16: #{transformer_forward.10} parent=11 // pred_fallthru
        _
      // Predicated region
      $region17: #{transformer_forward.10} parent=11 // pred_check
        %p240 = pneg %p96
      $region18: #{transformer_forward.10} parent=11 // pred_check_branch
        %242 = sbr.rel (%p240) target = $region20
      $region19: #{transformer_forward.10} parent=11 // pred_region
        _
      $region20: #{transformer_forward.10} parent=11 // pred_fallthru
        _
      // Predicated region
      $region21: #{transformer_forward.10} parent=11 // pred_check
        %p243 = pneg %p117
      $region22: #{transformer_forward.10} parent=11 // pred_check_branch
        %245 = sbr.rel (%p243) target = $region24
      $region23: #{transformer_forward.10} parent=11 // pred_region
        _
      $region24: #{transformer_forward.10} parent=11 // pred_fallthru
        _
      // Predicated region
      $region25: #{transformer_forward.10} parent=11 // pred_check
        %p246 = pneg %p138
      $region26: #{transformer_forward.10} parent=11 // pred_check_branch
        %248 = sbr.rel (%p246) target = $region28
      $region27: #{transformer_forward.10} parent=11 // pred_region
        _
      $region28: #{transformer_forward.10} parent=11 // pred_fallthru
        _
    $region12: #{transformer_forward.10} parent=5 // pred_fallthru
      _
    %p249 = scmp.lt.s32.totalorder %s14, 2
    // Predicated region
    $region29: #{transformer_forward.10} parent=5 // pred_check
      %p250 = pneg %p249
    $region30: #{transformer_forward.10} parent=5 // pred_check_branch
      %252 = sbr.rel (%p250) target = $region32
    $region31: #{transformer_forward.10} parent=5 // pred_region
      // Predicated region
      $region33: #{transformer_forward.10} parent=31 // pred_check
        %p253 = pneg %p48
      $region34: #{transformer_forward.10} parent=31 // pred_check_branch
        %255 = sbr.rel (%p253) target = $region36
      $region35: #{transformer_forward.10} parent=31 // pred_region
        %p256 = scmp.lt.s32.totalorder %s21, 1
        %s257 = scalar_select %p256, %s21, 1
        %p258 = scmp.lt.s32.totalorder %s22, 0
        %s259 = scalar_select %p258, %s22, 0
        %s260 = sadd.s32 %s259, %s257
        %s261 = smul.addr %s260, 8
        %s262 = scalar_lea.vmem %s0, %s261
      $region36: #{transformer_forward.10} parent=31 // pred_fallthru
        _
    $region32: #{transformer_forward.10} parent=5 // pred_fallthru
      _
    %p263 = scmp.le.s32.totalorder 1, %s14
    %p264 = scmp.lt.s32.totalorder %s14, 3
    %p265 = pnand %p263, %p264
    %p266 = pneg %p265
    // Predicated region
    $region37: #{transformer_forward.10} parent=5 // pred_check
      _
    $region38: #{transformer_forward.10} parent=5 // pred_check_branch
      %268 = sbr.rel (%p265) target = $region40
    $region39: #{transformer_forward.10} parent=5 // pred_region
      %s269 = ssub.s32 %s14, 1
      %p270 = scmp.lt.s32.totalorder %s23, 1
      %s271 = scalar_select %p270, %s23, 1
      %p272 = scmp.lt.s32.totalorder %s24, 0
      %s273 = scalar_select %p272, %s24, 0
      %s274 = sadd.s32 %s273, %s271
      %s275 = smul.addr %s274, 8
      %s276 = scalar_lea.vmem %s0, %s275
      %p277 = pneg %p54
      %p278 = pneg %p51
      %p279 = pneg %p75
      %p280 = pneg %p72
      %p281 = pneg %p96
      %p282 = pneg %p93
      %p283 = pneg %p117
      %p284 = pneg %p114
      %p285 = pneg %p138
      %p286 = pneg %p135
      %p287 = pneg %p166
      %p288 = pneg %p163
      %p289 = scmp.lt.s32.totalorder %s23, 1
      %s290 = scalar_select %p289, %s23, 1
      %p291 = scmp.lt.s32.totalorder %s24, 0
      %s292 = scalar_select %p291, %s24, 0
      %s293 = smul.addr %s290, 2
      %s294 = sadd.s32 %s292, %s293
      %s295 = smul.addr %s294, 4
      %s296 = scalar_lea.vmem %s5, %s295
      %p297 = pneg %p194
      %p298 = pneg %p191
      %p299 = scmp.lt.s32.totalorder %s23, 1
      %s300 = scalar_select %p299, %s23, 1
      %p301 = scmp.lt.s32.totalorder %s24, 0
      %s302 = scalar_select %p301, %s24, 0
      %s303 = smul.addr %s300, 2
      %s304 = sadd.s32 %s302, %s303
      %s305 = smul.addr %s304, 4
      %s306 = scalar_lea.vmem %s6, %s305
      %p307 = pneg %p222
      %p308 = pneg %p219
      %p309 = scmp.lt.s32.totalorder %s23, 1
      %s310 = scalar_select %p309, %s23, 1
      %p311 = scmp.lt.s32.totalorder %s24, 0
      %s312 = scalar_select %p311, %s24, 0
      %s313 = smul.addr %s310, 2
      %s314 = sadd.s32 %s312, %s313
      %s315 = smul.addr %s314, 4
      %s316 = scalar_lea.vmem %s7, %s315
      %p317 = scmp.lt.s32.totalorder %s23, 1
      %s318 = scalar_select %p317, %s23, 1
      %p319 = scmp.lt.s32.totalorder %s24, 0
      %s320 = scalar_select %p319, %s24, 0
      %s321 = sadd.s32 %s320, %s318
      %s322 = smul.addr %s321, 8
      %s323 = scalar_lea.vmem %s0, %s322
      %p324 = scmp.lt.s32.totalorder %s23, 1
      %s325 = scalar_select %p324, %s23, 1
      %p326 = scmp.lt.s32.totalorder %s24, 0
      %s327 = scalar_select %p326, %s24, 0
      %s328 = smul.addr %s325, 2
      %s329 = sadd.s32 %s327, %s328
      %s330 = smul.addr %s329, 4
      %s331 = scalar_lea.vmem %s5, %s330
      %p332 = scmp.lt.s32.totalorder %s23, 1
      %s333 = scalar_select %p332, %s23, 1
      %p334 = scmp.lt.s32.totalorder %s24, 0
      %s335 = scalar_select %p334, %s24, 0
      %s336 = smul.addr %s333, 2
      %s337 = sadd.s32 %s335, %s336
      %s338 = smul.addr %s337, 4
      %s339 = scalar_lea.vmem %s6, %s338
      %p340 = scmp.lt.s32.totalorder %s23, 1
      %s341 = scalar_select %p340, %s23, 1
      %p342 = scmp.lt.s32.totalorder %s24, 0
      %s343 = scalar_select %p342, %s24, 0
      %s344 = smul.addr %s341, 2
      %s345 = sadd.s32 %s343, %s344
      %s346 = smul.addr %s345, 4
      %s347 = scalar_lea.vmem %s7, %s346
      %v349 = vld [vmem:[%s323] sm:$0xff]
      %v350 = vld [vmem:[%s1] sm:$0x1]
      %v351 = vld [vmem:[%s2] sm:$0x1]
      %vm352 = vcmask 261120
      %v353 = vsel %vm352, %v349, 0.0
      %354 = vadd.xlane.f32.xlu0 %v353
      %v355 = vpop.xlane.xlu0 %354
      %v356 = vrcp.pop 32.0
      %v357 = vmul.f32 %v355, %v356
      %v358 = vsub.f32 %v349, %v357
      %v359 = vmul.f32 %v358, %v358
      %v360 = vsel %vm352, %v359, 0.0
      %361 = vadd.xlane.f32.xlu0 %v360
      %v362 = vpop.xlane.xlu0 %361
      %v363 = vmul.f32 %v362, %v356
      %v364 = vadd.f32 %v363, 1e-05
      %v365 = vrsqrt.pop %v364
      %v366 = vmul.f32 %v358, %v365
      %v368 = vlaneseq
      %v369 = vshrl.u32 %v368, 7
      %v370 = vsub.s32 0, %v369
      %v371 = vrot.slane %v350, %v370
      %v373 = vmul.f32 %v366, %v371
      %v375 = vlaneseq
      %v376 = vshrl.u32 %v375, 7
      %v377 = vsub.s32 0, %v376
      %v378 = vrot.slane %v351, %v377
      %v380 = vadd.f32 %v373, %v378
      %v381 = vpack.c.bf16 %v380, %v380
      %v382 = vld [vmem:[%s3] sm:$0xf]
      %v383 = vld [vmem:[%s3 + $0x4] sm:$0xf]
      %v384 = vld [vmem:[%s3 + $0x8] sm:$0xf]
      %v385 = vld [vmem:[%s3 + $0xc] sm:$0xf]
      %v386 = vld [vmem:[%s4] sm:$0x1]
      %v388 = vlaneseq
      %v389 = vshrl.u32 %v388, 7
      %v390 = vsub.s32 0, %v389
      %v391 = vrot.slane %v386, %v390
      %v397 = vunpack.c.l.b16 %v382
      %v398 = vunpack.c.l.b16 %v383
      %v399 = vunpack.c.l.b16 %v384
      %v400 = vunpack.c.l.b16 %v385
      %v401 = vpack.c.b16 %v398, %v397
      %v402 = vpack.c.b16 %v400, %v399
      %v406 = vsel %vm352, %v381, 0
      %408 = vmatprep.subr.bf16.mxu0 0
      %409 = vmatpush1.bf16.msra.mxu0 0
      %410 = vmatprep.subr.bf16.mxu0 0
      %411 = vmatpush1.bf16.msra.mxu0 0
      %412 = vmatprep.subr.bf16.mxu0 0
      %413 = vmatpush1.bf16.msra.mxu0 0
      %414 = vmatprep.subr.bf16.mxu0 0
      %415 = vmatpush1.bf16.msra.mxu0 0
      %416 = vmatprep.subr.bf16.mxu0 0
      %417 = vmatpush1.bf16.msra.mxu0 0
      %418 = vmatprep.subr.bf16.mxu0 0
      %419 = vmatpush1.bf16.msra.mxu0 0
      %420 = vmatprep.subr.bf16.mxu0 0
      %421 = vmatpush1.bf16.msra.mxu0 %v402
      %422 = vmatprep.subr.bf16.mxu0 0
      %423 = vmatpush1.bf16.msra.mxu0 %v401
      %424 = vmatprep.subr.bf16.mxu0 0
      %425 = vmatpush2.bf16.msra.mxu0 0
      %426 = vmatprep.subr.bf16.mxu0 0
      %427 = vmatpush2.bf16.msra.mxu0 0
      %428 = vmatprep.subr.bf16.mxu0 0
      %429 = vmatpush2.bf16.msra.mxu0 0
      %430 = vmatprep.subr.bf16.mxu0 0
      %431 = vmatpush2.bf16.msra.mxu0 0
      %432 = vmatprep.subr.bf16.mxu0 0
      %433 = vmatpush2.bf16.msra.mxu0 0
      %434 = vmatprep.subr.bf16.mxu0 0
      %435 = vmatpush2.bf16.msra.mxu0 0
      %436 = vmatprep.subr.bf16.mxu0 0
      %437 = vmatpush2.bf16.msra.mxu0 0
      %438 = vmatprep.subr.bf16.mxu0 0
      %439 = vmatpush2.bf16.msra.mxu0 0
      %440 = vmatprep.mubr.bf16.mxu0 0
      %441 = vmatmul.mubr.bf16.gmra.mxu0 %v406
      %v442 = vpop.f32.mrf.mxu0
      %v443 = vadd.f32 %v391, %v442
      %v444 = vpop.f32.mrf.mxu0
      %v445 = vpop.f32.mrf.mxu0
      %v446 = vpop.f32.mrf.mxu0
      %447 = vdwg.mxu0
      %449 = vrot.lane.b32.xlu0 %v443, 112
      %v450 = vpop.permute.xlu0 %449
      %v452 = vcombine.high %v443, 0.0
      %v454 = vunpack.c.l.s4 1983009808
      %v455 = vunpack.c.0.s8 %v454
      %v456 = vlaneseq
      %v457 = vshrl.u32 %v456, 7
      %v458 = vsub.s32 %v455, %v457
      %v459 = vrot.slane %v443, %v458
      %v461 = vunpack.c.l.s4 1983009808
      %v462 = vunpack.c.0.s8 %v461
      %v463 = vlaneseq
      %v464 = vshrl.u32 %v463, 7
      %v465 = vsub.s32 %v462, %v464
      %v466 = vrot.slane %v452, %v465
      %v467 = vcombine.high %v450, 0.0
      %v469 = vunpack.c.l.s4 1983009808
      %v470 = vunpack.c.0.s8 %v469
      %v471 = vlaneseq
      %v472 = vshrl.u32 %v471, 7
      %v473 = vsub.s32 %v470, %v472
      %v474 = vrot.slane %v450, %v473
      %v476 = vunpack.c.l.s4 1983009808
      %v477 = vunpack.c.0.s8 %v476
      %v478 = vlaneseq
      %v479 = vshrl.u32 %v478, 7
      %v480 = vsub.s32 %v477, %v479
      %v481 = vrot.slane %v467, %v480
      %v482 = vcombine.low %v459, %v474
      %v483 = vcombine.high %v459, %v474
      %v485 = vunpack.c.l.s4 1934713408
      %v486 = vunpack.c.0.s8 %v485
      %v487 = vlaneseq
      %v488 = vshrl.u32 %v487, 7
      %v489 = vsub.s32 %v486, %v488
      %v490 = vrot.slane %v482, %v489
      %v492 = vunpack.c.l.s4 1934713408
      %v493 = vunpack.c.0.s8 %v492
      %v494 = vlaneseq
      %v495 = vshrl.u32 %v494, 7
      %v496 = vsub.s32 %v493, %v495
      %v497 = vrot.slane %v483, %v496
      %v498 = vcombine.low %v466, %v481
      %v499 = vcombine.high %v466, %v481
      %v501 = vunpack.c.l.s4 1934713408
      %v502 = vunpack.c.0.s8 %v501
      %v503 = vlaneseq
      %v504 = vshrl.u32 %v503, 7
      %v505 = vsub.s32 %v502, %v504
      %v506 = vrot.slane %v498, %v505
      %v508 = vunpack.c.l.s4 1934713408
      %v509 = vunpack.c.0.s8 %v508
      %v510 = vlaneseq
      %v511 = vshrl.u32 %v510, 7
      %v512 = vsub.s32 %v509, %v511
      %v513 = vrot.slane %v499, %v512
      %v514 = vcombine.high %v490, 0.0
      %v515 = vcombine.high %v497, 0.0
      %v516 = vcombine.high %v506, 0.0
      %v517 = vcombine.high %v513, 0.0
      %v518 = vcombine.low %v490, %v497
      %v520 = vunpack.c.l.s4 1983009808
      %v521 = vunpack.c.0.s8 %v520
      %v522 = vlaneseq
      %v523 = vshrl.u32 %v522, 7
      %v524 = vsub.s32 %v521, %v523
      %v525 = vrot.slane %v518, %v524
      %v526 = vcombine.low %v514, %v515
      %v528 = vunpack.c.l.s4 1983009808
      %v529 = vunpack.c.0.s8 %v528
      %v530 = vlaneseq
      %v531 = vshrl.u32 %v530, 7
      %v532 = vsub.s32 %v529, %v531
      %v533 = vrot.slane %v526, %v532
      %v534 = vcombine.low %v506, %v513
      %v536 = vunpack.c.l.s4 1983009808
      %v537 = vunpack.c.0.s8 %v536
      %v538 = vlaneseq
      %v539 = vshrl.u32 %v538, 7
      %v540 = vsub.s32 %v537, %v539
      %v541 = vrot.slane %v534, %v540
      %v542 = vcombine.low %v516, %v517
      %v544 = vunpack.c.l.s4 1983009808
      %v545 = vunpack.c.0.s8 %v544
      %v546 = vlaneseq
      %v547 = vshrl.u32 %v546, 7
      %v548 = vsub.s32 %v545, %v547
      %v549 = vrot.slane %v542, %v548
      %v550 = vcombine.low %v525, %v533
      %v552 = vunpack.c.l.s4 1934713408
      %v553 = vunpack.c.0.s8 %v552
      %v554 = vlaneseq
      %v555 = vshrl.u32 %v554, 7
      %v556 = vsub.s32 %v553, %v555
      %v557 = vrot.slane %v550, %v556
      %v558 = vcombine.low %v541, %v549
      %v560 = vunpack.c.l.s4 1934713408
      %v561 = vunpack.c.0.s8 %v560
      %v562 = vlaneseq
      %v563 = vshrl.u32 %v562, 7
      %v564 = vsub.s32 %v561, %v563
      %v565 = vrot.slane %v558, %v564
      %v566 = vcombine.low %v557, %v565
      %v567 = vcombine.high %v557, %v565
      %v568 = vpack.c.bf16 %v566, %v566
      %v569 = vpack.c.bf16 %v567, %v567
      %vm570 = vcmask 125952
      %571 = vst.msk [vmem:[%s331] sm:$0xf] %vm570, %v568
      %572 = vst.msk [vmem:[%s331 + $0x4] sm:$0xf] %vm570, %v569
      %573 = vrot.lane.b32.xlu0 %v443, 96
      %v574 = vpop.permute.xlu0 %573
      %575 = vrot.lane.b32.xlu0 %v450, 96
      %v576 = vpop.permute.xlu0 %575
      %v579 = vcombine.high %v574, 0.0
      %v581 = vunpack.c.l.s4 1983009808
      %v582 = vunpack.c.0.s8 %v581
      %v583 = vlaneseq
      %v584 = vshrl.u32 %v583, 7
      %v585 = vsub.s32 %v582, %v584
      %v586 = vrot.slane %v574, %v585
      %v588 = vunpack.c.l.s4 1983009808
      %v589 = vunpack.c.0.s8 %v588
      %v590 = vlaneseq
      %v591 = vshrl.u32 %v590, 7
      %v592 = vsub.s32 %v589, %v591
      %v593 = vrot.slane %v579, %v592
      %v594 = vcombine.high %v576, 0.0
      %v596 = vunpack.c.l.s4 1983009808
      %v597 = vunpack.c.0.s8 %v596
      %v598 = vlaneseq
      %v599 = vshrl.u32 %v598, 7
      %v600 = vsub.s32 %v597, %v599
      %v601 = vrot.slane %v576, %v600
      %v603 = vunpack.c.l.s4 1983009808
      %v604 = vunpack.c.0.s8 %v603
      %v605 = vlaneseq
      %v606 = vshrl.u32 %v605, 7
      %v607 = vsub.s32 %v604, %v606
      %v608 = vrot.slane %v594, %v607
      %v609 = vcombine.low %v586, %v601
      %v610 = vcombine.high %v586, %v601
      %v612 = vunpack.c.l.s4 1934713408
      %v613 = vunpack.c.0.s8 %v612
      %v614 = vlaneseq
      %v615 = vshrl.u32 %v614, 7
      %v616 = vsub.s32 %v613, %v615
      %v617 = vrot.slane %v609, %v616
      %v619 = vunpack.c.l.s4 1934713408
      %v620 = vunpack.c.0.s8 %v619
      %v621 = vlaneseq
      %v622 = vshrl.u32 %v621, 7
      %v623 = vsub.s32 %v620, %v622
      %v624 = vrot.slane %v610, %v623
      %v625 = vcombine.low %v593, %v608
      %v626 = vcombine.high %v593, %v608
      %v628 = vunpack.c.l.s4 1934713408
      %v629 = vunpack.c.0.s8 %v628
      %v630 = vlaneseq
      %v631 = vshrl.u32 %v630, 7
      %v632 = vsub.s32 %v629, %v631
      %v633 = vrot.slane %v625, %v632
      %v635 = vunpack.c.l.s4 1934713408
      %v636 = vunpack.c.0.s8 %v635
      %v637 = vlaneseq
      %v638 = vshrl.u32 %v637, 7
      %v639 = vsub.s32 %v636, %v638
      %v640 = vrot.slane %v626, %v639
      %v641 = vcombine.high %v617, 0.0
      %v642 = vcombine.high %v624, 0.0
      %v643 = vcombine.high %v633, 0.0
      %v644 = vcombine.high %v640, 0.0
      %v645 = vcombine.low %v617, %v624
      %v647 = vunpack.c.l.s4 1983009808
      %v648 = vunpack.c.0.s8 %v647
      %v649 = vlaneseq
      %v650 = vshrl.u32 %v649, 7
      %v651 = vsub.s32 %v648, %v650
      %v652 = vrot.slane %v645, %v651
      %v653 = vcombine.low %v641, %v642
      %v655 = vunpack.c.l.s4 1983009808
      %v656 = vunpack.c.0.s8 %v655
      %v657 = vlaneseq
      %v658 = vshrl.u32 %v657, 7
      %v659 = vsub.s32 %v656, %v658
      %v660 = vrot.slane %v653, %v659
      %v661 = vcombine.low %v633, %v640
      %v663 = vunpack.c.l.s4 1983009808
      %v664 = vunpack.c.0.s8 %v663
      %v665 = vlaneseq
      %v666 = vshrl.u32 %v665, 7
      %v667 = vsub.s32 %v664, %v666
      %v668 = vrot.slane %v661, %v667
      %v669 = vcombine.low %v643, %v644
      %v671 = vunpack.c.l.s4 1983009808
      %v672 = vunpack.c.0.s8 %v671
      %v673 = vlaneseq
      %v674 = vshrl.u32 %v673, 7
      %v675 = vsub.s32 %v672, %v674
      %v676 = vrot.slane %v669, %v675
      %v677 = vcombine.low %v652, %v660
      %v679 = vunpack.c.l.s4 1934713408
      %v680 = vunpack.c.0.s8 %v679
      %v681 = vlaneseq
      %v682 = vshrl.u32 %v681, 7
      %v683 = vsub.s32 %v680, %v682
      %v684 = vrot.slane %v677, %v683
      %v685 = vcombine.low %v668, %v676
      %v687 = vunpack.c.l.s4 1934713408
      %v688 = vunpack.c.0.s8 %v687
      %v689 = vlaneseq
      %v690 = vshrl.u32 %v689, 7
      %v691 = vsub.s32 %v688, %v690
      %v692 = vrot.slane %v685, %v691
      %v693 = vcombine.low %v684, %v692
      %v694 = vcombine.high %v684, %v692
      %v695 = vpack.c.bf16 %v693, %v693
      %v696 = vpack.c.bf16 %v694, %v694
      %697 = vst.msk [vmem:[%s339] sm:$0xf] %vm570, %v695
      %698 = vst.msk [vmem:[%s339 + $0x4] sm:$0xf] %vm570, %v696
      %699 = vrot.lane.b32.xlu0 %v443, 64
      %v700 = vpop.permute.xlu0 %699
      %701 = vrot.lane.b32.xlu0 %v450, 64
      %v702 = vpop.permute.xlu0 %701
      %v705 = vcombine.high %v700, 0.0
      %v707 = vunpack.c.l.s4 1983009808
      %v708 = vunpack.c.0.s8 %v707
      %v709 = vlaneseq
      %v710 = vshrl.u32 %v709, 7
      %v711 = vsub.s32 %v708, %v710
      %v712 = vrot.slane %v700, %v711
      %v714 = vunpack.c.l.s4 1983009808
      %v715 = vunpack.c.0.s8 %v714
      %v716 = vlaneseq
      %v717 = vshrl.u32 %v716, 7
      %v718 = vsub.s32 %v715, %v717
      %v719 = vrot.slane %v705, %v718
      %v720 = vcombine.high %v702, 0.0
      %v722 = vunpack.c.l.s4 1983009808
      %v723 = vunpack.c.0.s8 %v722
      %v724 = vlaneseq
      %v725 = vshrl.u32 %v724, 7
      %v726 = vsub.s32 %v723, %v725
      %v727 = vrot.slane %v702, %v726
      %v729 = vunpack.c.l.s4 1983009808
      %v730 = vunpack.c.0.s8 %v729
      %v731 = vlaneseq
      %v732 = vshrl.u32 %v731, 7
      %v733 = vsub.s32 %v730, %v732
      %v734 = vrot.slane %v720, %v733
      %v735 = vcombine.low %v712, %v727
      %v736 = vcombine.high %v712, %v727
      %v738 = vunpack.c.l.s4 1934713408
      %v739 = vunpack.c.0.s8 %v738
      %v740 = vlaneseq
      %v741 = vshrl.u32 %v740, 7
      %v742 = vsub.s32 %v739, %v741
      %v743 = vrot.slane %v735, %v742
      %v745 = vunpack.c.l.s4 1934713408
      %v746 = vunpack.c.0.s8 %v745
      %v747 = vlaneseq
      %v748 = vshrl.u32 %v747, 7
      %v749 = vsub.s32 %v746, %v748
      %v750 = vrot.slane %v736, %v749
      %v751 = vcombine.low %v719, %v734
      %v752 = vcombine.high %v719, %v734
      %v754 = vunpack.c.l.s4 1934713408
      %v755 = vunpack.c.0.s8 %v754
      %v756 = vlaneseq
      %v757 = vshrl.u32 %v756, 7
      %v758 = vsub.s32 %v755, %v757
      %v759 = vrot.slane %v751, %v758
      %v761 = vunpack.c.l.s4 1934713408
      %v762 = vunpack.c.0.s8 %v761
      %v763 = vlaneseq
      %v764 = vshrl.u32 %v763, 7
      %v765 = vsub.s32 %v762, %v764
      %v766 = vrot.slane %v752, %v765
      %v767 = vcombine.high %v743, 0.0
      %v768 = vcombine.high %v750, 0.0
      %v769 = vcombine.high %v759, 0.0
      %v770 = vcombine.high %v766, 0.0
      %v771 = vcombine.low %v743, %v750
      %v773 = vunpack.c.l.s4 1983009808
      %v774 = vunpack.c.0.s8 %v773
      %v775 = vlaneseq
      %v776 = vshrl.u32 %v775, 7
      %v777 = vsub.s32 %v774, %v776
      %v778 = vrot.slane %v771, %v777
      %v779 = vcombine.low %v767, %v768
      %v781 = vunpack.c.l.s4 1983009808
      %v782 = vunpack.c.0.s8 %v781
      %v783 = vlaneseq
      %v784 = vshrl.u32 %v783, 7
      %v785 = vsub.s32 %v782, %v784
      %v786 = vrot.slane %v779, %v785
      %v787 = vcombine.low %v759, %v766
      %v789 = vunpack.c.l.s4 1983009808
      %v790 = vunpack.c.0.s8 %v789
      %v791 = vlaneseq
      %v792 = vshrl.u32 %v791, 7
      %v793 = vsub.s32 %v790, %v792
      %v794 = vrot.slane %v787, %v793
      %v795 = vcombine.low %v769, %v770
      %v797 = vunpack.c.l.s4 1983009808
      %v798 = vunpack.c.0.s8 %v797
      %v799 = vlaneseq
      %v800 = vshrl.u32 %v799, 7
      %v801 = vsub.s32 %v798, %v800
      %v802 = vrot.slane %v795, %v801
      %v803 = vcombine.low %v778, %v786
      %v805 = vunpack.c.l.s4 1934713408
      %v806 = vunpack.c.0.s8 %v805
      %v807 = vlaneseq
      %v808 = vshrl.u32 %v807, 7
      %v809 = vsub.s32 %v806, %v808
      %v810 = vrot.slane %v803, %v809
      %v811 = vcombine.low %v794, %v802
      %v813 = vunpack.c.l.s4 1934713408
      %v814 = vunpack.c.0.s8 %v813
      %v815 = vlaneseq
      %v816 = vshrl.u32 %v815, 7
      %v817 = vsub.s32 %v814, %v816
      %v818 = vrot.slane %v811, %v817
      %v819 = vcombine.low %v810, %v818
      %v820 = vcombine.high %v810, %v818
      %v821 = vpack.c.bf16 %v819, %v819
      %v822 = vpack.c.bf16 %v820, %v820
      %823 = vst.msk [vmem:[%s347] sm:$0xf] %vm570, %v821
      %824 = vst.msk [vmem:[%s347 + $0x4] sm:$0xf] %vm570, %v822
      %p825 = scmp.lt.s32.totalorder %s23, 1
      %s826 = scalar_select %p825, %s23, 1
      %p827 = scmp.lt.s32.totalorder %s24, 0
      %s828 = scalar_select %p827, %s24, 0
      %s829 = smul.addr %s826, 2
      %s830 = sadd.s32 %s828, %s829
      %s831 = smul.addr %s830, 4
      %s832 = scalar_lea.vmem %s5, %s831
      %p833 = scmp.lt.s32.totalorder %s23, 1
      %s834 = scalar_select %p833, %s23, 1
      %p835 = scmp.lt.s32.totalorder %s24, 0
      %s836 = scalar_select %p835, %s24, 0
      %s837 = smul.addr %s834, 2
      %s838 = sadd.s32 %s836, %s837
      %s839 = smul.addr %s838, 4
      %s840 = scalar_lea.vmem %s6, %s839
      %p841 = scmp.lt.s32.totalorder %s23, 1
      %s842 = scalar_select %p841, %s23, 1
      %p843 = scmp.lt.s32.totalorder %s24, 0
      %s844 = scalar_select %p843, %s24, 0
      %s845 = smul.addr %s842, 2
      %s846 = sadd.s32 %s844, %s845
      %s847 = smul.addr %s846, 4
      %s848 = scalar_lea.vmem %s7, %s847
      // Predicated region
      $region41: #{transformer_forward.10} parent=39 // pred_check
        %p849 = pneg %p163
      $region42: #{transformer_forward.10} parent=39 // pred_check_branch
        %851 = sbr.rel (%p849) target = $region44
      $region43: #{transformer_forward.10} parent=39 // pred_region
        _
      $region44: #{transformer_forward.10} parent=39 // pred_fallthru
        _
      // Predicated region
      $region45: #{transformer_forward.10} parent=39 // pred_check
        %p852 = pneg %p191
      $region46: #{transformer_forward.10} parent=39 // pred_check_branch
        %854 = sbr.rel (%p852) target = $region48
      $region47: #{transformer_forward.10} parent=39 // pred_region
        _
      $region48: #{transformer_forward.10} parent=39 // pred_fallthru
        _
      // Predicated region
      $region49: #{transformer_forward.10} parent=39 // pred_check
        %p855 = pneg %p219
      $region50: #{transformer_forward.10} parent=39 // pred_check_branch
        %857 = sbr.rel (%p855) target = $region52
      $region51: #{transformer_forward.10} parent=39 // pred_region
        _
      $region52: #{transformer_forward.10} parent=39 // pred_fallthru
        _
    $region40: #{transformer_forward.10} parent=5 // pred_fallthru
      _
    %p858 = scmp.le.s32.totalorder 2, %s14
    // Predicated region
    $region53: #{transformer_forward.10} parent=5 // pred_check
      %p859 = pneg %p858
    $region54: #{transformer_forward.10} parent=5 // pred_check_branch
      %861 = sbr.rel (%p859) target = $region56
    $region55: #{transformer_forward.10} parent=5 // pred_region
      %s862 = ssub.s32 %s14, 2
      // Predicated region
      $region57: #{transformer_forward.10} parent=55 // pred_check
        %p863 = pneg %p169
      $region58: #{transformer_forward.10} parent=55 // pred_check_branch
        %865 = sbr.rel (%p863) target = $region60
      $region59: #{transformer_forward.10} parent=55 // pred_region
        %p866 = scmp.lt.s32.totalorder %s25, 1
        %s867 = scalar_select %p866, %s25, 1
        %p868 = scmp.lt.s32.totalorder %s26, 0
        %s869 = scalar_select %p868, %s26, 0
        %s870 = smul.addr %s867, 2
        %s871 = sadd.s32 %s869, %s870
        %s872 = smul.addr %s871, 4
        %s873 = scalar_lea.vmem %s5, %s872
      $region60: #{transformer_forward.10} parent=55 // pred_fallthru
        _
      // Predicated region
      $region61: #{transformer_forward.10} parent=55 // pred_check
        %p874 = pneg %p197
      $region62: #{transformer_forward.10} parent=55 // pred_check_branch
        %876 = sbr.rel (%p874) target = $region64
      $region63: #{transformer_forward.10} parent=55 // pred_region
        %p877 = scmp.lt.s32.totalorder %s25, 1
        %s878 = scalar_select %p877, %s25, 1
        %p879 = scmp.lt.s32.totalorder %s26, 0
        %s880 = scalar_select %p879, %s26, 0
        %s881 = smul.addr %s878, 2
        %s882 = sadd.s32 %s880, %s881
        %s883 = smul.addr %s882, 4
        %s884 = scalar_lea.vmem %s6, %s883
      $region64: #{transformer_forward.10} parent=55 // pred_fallthru
        _
      // Predicated region
      $region65: #{transformer_forward.10} parent=55 // pred_check
        %p885 = pneg %p225
      $region66: #{transformer_forward.10} parent=55 // pred_check_branch
        %887 = sbr.rel (%p885) target = $region68
      $region67: #{transformer_forward.10} parent=55 // pred_region
        %p888 = scmp.lt.s32.totalorder %s25, 1
        %s889 = scalar_select %p888, %s25, 1
        %p890 = scmp.lt.s32.totalorder %s26, 0
        %s891 = scalar_select %p890, %s26, 0
        %s892 = smul.addr %s889, 2
        %s893 = sadd.s32 %s891, %s892
        %s894 = smul.addr %s893, 4
        %s895 = scalar_lea.vmem %s7, %s894
      $region68: #{transformer_forward.10} parent=55 // pred_fallthru
        _
    $region56: #{transformer_forward.10} parent=5 // pred_fallthru
      _
  $region6: #{transformer_forward.10} parent=0 // loop_footer
    %s18 = sadd.s32 1, %s14
  $region7: #{transformer_forward.10} parent=0 // loop_footer_branch
    %13 = sbr.rel target = $region3
  $region8: #{transformer_forward.10} parent=0 // loop_exit
    _

// kernel: transformer_forward.8
$region0: #{transformer_forward.8}
  #allocation0 [shape = 'u32[]', space=smem, size = 0x4, offset = 0x4, fixed_abs, tag = 'smem constant byte address 0x4 - core index']
  #allocation1 [shape = 'u32[144,128]{1,0:T(1,128)}', space=vmem, size = 0x12000, scoped, tag = 'internal scratch']
  #allocation2 [shape = 'f32[1,8,1]{2,1,0:T(8,128)}', space=vmem, size = 0x1000, scoped, tag = 'scratch operand']
  #allocation3 [shape = 'f32[1,8,1]{2,1,0:T(8,128)}', space=vmem, size = 0x1000, scoped, tag = 'scratch operand']
  #allocation4 [shape = 'f32[1,8,32]{2,1,0:T(8,128)}', space=vmem, size = 0x1000, scoped, tag = 'scratch operand']
  %s0 = inlined_call_operand.vmem [shape: bf16[2,1,8,32], index: 0, kind: input, shape index: {}]
  %s1 = inlined_call_operand.vmem [shape: bf16[2,1,8,32], index: 1, kind: input, shape index: {}]
  %s2 = inlined_call_operand.vmem [shape: bf16[2,1,8,32], index: 2, kind: input, shape index: {}]
  %s3 = inlined_call_operand.vmem [shape: f32[2,8,8], index: 3, kind: input, shape index: {}]
  %s4 = inlined_call_operand.vmem [shape: f32[2,8,32], index: 4, kind: input, shape index: {}]
  %s5 = inlined_call_operand.vmem [shape: bf16[32,32], index: 5, kind: input, shape index: {}]
  %s6 = inlined_call_operand.vmem [shape: f32[1,32], index: 6, kind: input, shape index: {}]
  %s7 = inlined_call_operand.vmem [shape: f32[2,8,32], index: 7, kind: output, shape index: {}]
  %s8 = sld [smem:[#allocation0]]
  $region69: #{transformer_forward.8} parent=0
    _
  %s10 = ssub.s32 1, %s8
  %s11 = scalar_select 0, %s10, %s8
  loop: start=0, step=1, limit=4
  $region2: #{transformer_forward.8} parent=0 // loop_pre_header
    _
  $region3: #{transformer_forward.8} parent=0 // loop_header
    %s13 = sphi 0, %s17
    %p14 = scmp.ge.s32.totalorder %s13, 4
    %s20 = sphi 0, %s39
    %s21 = sphi 0, %s35
    %s22 = sphi 0, %s31
    %s23 = sphi 0, %s20
    %s24 = sphi 0, %s21
    %s25 = sphi 0, %s22
    %s26 = sphi 0, %s23
    %s27 = sphi 0, %s24
    %s28 = sphi 0, %s25
    %s44 = sphi 0, %s46
    %s47 = sphi 0, %s44
    %s48 = sphi 0, %s47
    %s64 = sphi 0, %s48
    %s72 = sphi 0, %s74
    %s75 = sphi 0, %s72
    %s76 = sphi 0, %s75
    %s92 = sphi 0, %s76
    %s100 = sphi 0, %s102
    %s103 = sphi 0, %s100
    %s104 = sphi 0, %s103
    %s120 = sphi 0, %s104
    %s130 = sphi 0, %s132
    %s133 = sphi 0, %s130
    %s134 = sphi 0, %s133
    %s150 = sphi 0, %s134
    %s158 = sphi 0, %s160
    %s161 = sphi 0, %s158
    %s162 = sphi 0, %s161
    %s178 = sphi 0, %s162
    %s182 = sphi 0, %s182
    %s184 = sphi 0, %s182
    %s185 = sphi 0, %s184
    %s199 = sphi 0, %s185
    %s203 = sphi 0, %s203
    %s205 = sphi 0, %s203
    %s206 = sphi 0, %s205
    %s220 = sphi 0, %s206
    %s228 = sphi 0, %s230
    %s231 = sphi 0, %s228
    %s232 = sphi 0, %s231
    %s248 = sphi 0, %s232
  $region4: #{transformer_forward.8} parent=0 // loop_header_branch
    %16 = sbr.rel (%p14) target = $region8
  $region5: #{transformer_forward.8} parent=0 // loop_body
    %s18 = ssub.s32 %s13, 1
    %s19 = ssub.s32 %s13, 2
    %s29 = sadd.s32 1, %s22
    %p30 = scmp.ge.s32.totalorder %s29, 1
    %s31 = scalar_select %p30, 0, %s29
    %s32 = sadd.s32 1, %s21
    %s33 = scalar_select %p30, %s32, %s21
    %p34 = scmp.ge.s32.totalorder %s33, 1
    %s35 = scalar_select %p34, 0, %s33
    %s36 = sadd.s32 1, %s20
    %s37 = scalar_select %p34, %s36, %s20
    %p38 = scmp.ge.s32.totalorder %s37, 2
    %s39 = scalar_select %p38, 0, %s37
    %s40 = ssub.s32 %s20, %s39
    %s41 = ssub.s32 %s21, %s35
    %s42 = sor.u32 %s40, %s41
    %p43 = scmp.eq.s32.totalorder %s42, 0
    %s45 = sadd.s32 %s44, 1
    %s46 = scalar_select %p43, %s44, %s45
    %p49 = pneg %p43
    %p50 = scmp.eq.s32.totalorder %s13, 1
    %p51 = por %p49, %p50
    %p52 = scmp.ne.s32.totalorder %s44, %s47
    %p53 = scmp.eq.s32.totalorder %s13, 0
    %p54 = por %p52, %p53
    %p55 = scmp.ne.s32.totalorder %s44, %s47
    %p56 = scmp.eq.s32.totalorder %s18, 1
    %p57 = por %p55, %p56
    %p58 = scmp.ne.s32.totalorder %s47, %s48
    %p59 = scmp.eq.s32.totalorder %s18, 0
    %p60 = por %p58, %p59
    %p61 = scmp.ne.s32.totalorder %s47, %s48
    %p62 = scmp.eq.s32.totalorder %s19, 1
    %p63 = por %p61, %p62
    %p65 = scmp.ne.s32.totalorder %s48, %s64
    %p66 = scmp.eq.s32.totalorder %s19, 0
    %p67 = por %p65, %p66
    %s68 = ssub.s32 %s20, %s39
    %s69 = ssub.s32 %s22, %s31
    %s70 = sor.u32 %s68, %s69
    %p71 = scmp.eq.s32.totalorder %s70, 0
    %s73 = sadd.s32 %s72, 1
    %s74 = scalar_select %p71, %s72, %s73
    %p77 = pneg %p71
    %p78 = scmp.eq.s32.totalorder %s13, 1
    %p79 = por %p77, %p78
    %p80 = scmp.ne.s32.totalorder %s72, %s75
    %p81 = scmp.eq.s32.totalorder %s13, 0
    %p82 = por %p80, %p81
    %p83 = scmp.ne.s32.totalorder %s72, %s75
    %p84 = scmp.eq.s32.totalorder %s18, 1
    %p85 = por %p83, %p84
    %p86 = scmp.ne.s32.totalorder %s75, %s76
    %p87 = scmp.eq.s32.totalorder %s18, 0
    %p88 = por %p86, %p87
    %p89 = scmp.ne.s32.totalorder %s75, %s76
    %p90 = scmp.eq.s32.totalorder %s19, 1
    %p91 = por %p89, %p90
    %p93 = scmp.ne.s32.totalorder %s76, %s92
    %p94 = scmp.eq.s32.totalorder %s19, 0
    %p95 = por %p93, %p94
    %s96 = ssub.s32 %s20, %s39
    %s97 = ssub.s32 %s22, %s31
    %s98 = sor.u32 %s96, %s97
    %p99 = scmp.eq.s32.totalorder %s98, 0
    %s101 = sadd.s32 %s100, 1
    %s102 = scalar_select %p99, %s100, %s101
    %p105 = pneg %p99
    %p106 = scmp.eq.s32.totalorder %s13, 1
    %p107 = por %p105, %p106
    %p108 = scmp.ne.s32.totalorder %s100, %s103
    %p109 = scmp.eq.s32.totalorder %s13, 0
    %p110 = por %p108, %p109
    %p111 = scmp.ne.s32.totalorder %s100, %s103
    %p112 = scmp.eq.s32.totalorder %s18, 1
    %p113 = por %p111, %p112
    %p114 = scmp.ne.s32.totalorder %s103, %s104
    %p115 = scmp.eq.s32.totalorder %s18, 0
    %p116 = por %p114, %p115
    %p117 = scmp.ne.s32.totalorder %s103, %s104
    %p118 = scmp.eq.s32.totalorder %s19, 1
    %p119 = por %p117, %p118
    %p121 = scmp.ne.s32.totalorder %s104, %s120
    %p122 = scmp.eq.s32.totalorder %s19, 0
    %p123 = por %p121, %p122
    %s124 = ssub.s32 %s20, %s39
    %s125 = ssub.s32 %s21, %s35
    %s126 = sor.u32 %s124, %s125
    %s127 = ssub.s32 %s22, %s31
    %s128 = sor.u32 %s126, %s127
    %p129 = scmp.eq.s32.totalorder %s128, 0
    %s131 = sadd.s32 %s130, 1
    %s132 = scalar_select %p129, %s130, %s131
    %p135 = pneg %p129
    %p136 = scmp.eq.s32.totalorder %s13, 1
    %p137 = por %p135, %p136
    %p138 = scmp.ne.s32.totalorder %s130, %s133
    %p139 = scmp.eq.s32.totalorder %s13, 0
    %p140 = por %p138, %p139
    %p141 = scmp.ne.s32.totalorder %s130, %s133
    %p142 = scmp.eq.s32.totalorder %s18, 1
    %p143 = por %p141, %p142
    %p144 = scmp.ne.s32.totalorder %s133, %s134
    %p145 = scmp.eq.s32.totalorder %s18, 0
    %p146 = por %p144, %p145
    %p147 = scmp.ne.s32.totalorder %s133, %s134
    %p148 = scmp.eq.s32.totalorder %s19, 1
    %p149 = por %p147, %p148
    %p151 = scmp.ne.s32.totalorder %s134, %s150
    %p152 = scmp.eq.s32.totalorder %s19, 0
    %p153 = por %p151, %p152
    %s154 = ssub.s32 %s20, %s39
    %s155 = ssub.s32 %s21, %s35
    %s156 = sor.u32 %s154, %s155
    %p157 = scmp.eq.s32.totalorder %s156, 0
    %s159 = sadd.s32 %s158, 1
    %s160 = scalar_select %p157, %s158, %s159
    %p163 = pneg %p157
    %p164 = scmp.eq.s32.totalorder %s13, 1
    %p165 = por %p163, %p164
    %p166 = scmp.ne.s32.totalorder %s158, %s161
    %p167 = scmp.eq.s32.totalorder %s13, 0
    %p168 = por %p166, %p167
    %p169 = scmp.ne.s32.totalorder %s158, %s161
    %p170 = scmp.eq.s32.totalorder %s18, 1
    %p171 = por %p169, %p170
    %p172 = scmp.ne.s32.totalorder %s161, %s162
    %p173 = scmp.eq.s32.totalorder %s18, 0
    %p174 = por %p172, %p173
    %p175 = scmp.ne.s32.totalorder %s161, %s162
    %p176 = scmp.eq.s32.totalorder %s19, 1
    %p177 = por %p175, %p176
    %p179 = scmp.ne.s32.totalorder %s162, %s178
    %p180 = scmp.eq.s32.totalorder %s19, 0
    %p181 = por %p179, %p180
    %s183 = sadd.s32 %s182, 1
    %p186 = scmp.eq.s32.totalorder %s13, 1
    %p187 = scmp.ne.s32.totalorder %s182, %s184
    %p188 = scmp.eq.s32.totalorder %s13, 0
    %p189 = por %p187, %p188
    %p190 = scmp.ne.s32.totalorder %s182, %s184
    %p191 = scmp.eq.s32.totalorder %s18, 1
    %p192 = por %p190, %p191
    %p193 = scmp.ne.s32.totalorder %s184, %s185
    %p194 = scmp.eq.s32.totalorder %s18, 0
    %p195 = por %p193, %p194
    %p196 = scmp.ne.s32.totalorder %s184, %s185
    %p197 = scmp.eq.s32.totalorder %s19, 1
    %p198 = por %p196, %p197
    %p200 = scmp.ne.s32.totalorder %s185, %s199
    %p201 = scmp.eq.s32.totalorder %s19, 0
    %p202 = por %p200, %p201
    %s204 = sadd.s32 %s203, 1
    %p207 = scmp.eq.s32.totalorder %s13, 1
    %p208 = scmp.ne.s32.totalorder %s203, %s205
    %p209 = scmp.eq.s32.totalorder %s13, 0
    %p210 = por %p208, %p209
    %p211 = scmp.ne.s32.totalorder %s203, %s205
    %p212 = scmp.eq.s32.totalorder %s18, 1
    %p213 = por %p211, %p212
    %p214 = scmp.ne.s32.totalorder %s205, %s206
    %p215 = scmp.eq.s32.totalorder %s18, 0
    %p216 = por %p214, %p215
    %p217 = scmp.ne.s32.totalorder %s205, %s206
    %p218 = scmp.eq.s32.totalorder %s19, 1
    %p219 = por %p217, %p218
    %p221 = scmp.ne.s32.totalorder %s206, %s220
    %p222 = scmp.eq.s32.totalorder %s19, 0
    %p223 = por %p221, %p222
    %s224 = ssub.s32 %s20, %s39
    %s225 = ssub.s32 %s21, %s35
    %s226 = sor.u32 %s224, %s225
    %p227 = scmp.eq.s32.totalorder %s226, 0
    %s229 = sadd.s32 %s228, 1
    %s230 = scalar_select %p227, %s228, %s229
    %p233 = pneg %p227
    %p234 = scmp.eq.s32.totalorder %s13, 1
    %p235 = por %p233, %p234
    %p236 = scmp.ne.s32.totalorder %s228, %s231
    %p237 = scmp.eq.s32.totalorder %s13, 0
    %p238 = por %p236, %p237
    %p239 = scmp.ne.s32.totalorder %s228, %s231
    %p240 = scmp.eq.s32.totalorder %s18, 1
    %p241 = por %p239, %p240
    %p242 = scmp.ne.s32.totalorder %s231, %s232
    %p243 = scmp.eq.s32.totalorder %s18, 0
    %p244 = por %p242, %p243
    %p245 = scmp.ne.s32.totalorder %s231, %s232
    %p246 = scmp.eq.s32.totalorder %s19, 1
    %p247 = por %p245, %p246
    %p249 = scmp.ne.s32.totalorder %s232, %s248
    %p250 = scmp.eq.s32.totalorder %s19, 0
    %p251 = por %p249, %p250
    %p252 = scmp.le.s32.totalorder 1, %s13
    %p253 = scmp.lt.s32.totalorder %s13, 3
    %p254 = pnand %p252, %p253
    %p255 = pneg %p254
    // Predicated region
    $region9: #{transformer_forward.8} parent=5 // pred_check
      _
    $region10: #{transformer_forward.8} parent=5 // pred_check_branch
      %257 = sbr.rel (%p254) target = $region12
    $region11: #{transformer_forward.8} parent=5 // pred_region
      %s258 = ssub.s32 %s13, 1
      // Predicated region
      $region13: #{transformer_forward.8} parent=11 // pred_check
        %p259 = pneg %p195
      $region14: #{transformer_forward.8} parent=11 // pred_check_branch
        %261 = sbr.rel (%p259) target = $region16
      $region15: #{transformer_forward.8} parent=11 // pred_region
        _
      $region16: #{transformer_forward.8} parent=11 // pred_fallthru
        _
      // Predicated region
      $region17: #{transformer_forward.8} parent=11 // pred_check
        %p262 = pneg %p216
      $region18: #{transformer_forward.8} parent=11 // pred_check_branch
        %264 = sbr.rel (%p262) target = $region20
      $region19: #{transformer_forward.8} parent=11 // pred_region
        _
      $region20: #{transformer_forward.8} parent=11 // pred_fallthru
        _
    $region12: #{transformer_forward.8} parent=5 // pred_fallthru
      _
    %p265 = scmp.lt.s32.totalorder %s13, 2
    // Predicated region
    $region21: #{transformer_forward.8} parent=5 // pred_check
      %p266 = pneg %p265
    $region22: #{transformer_forward.8} parent=5 // pred_check_branch
      %268 = sbr.rel (%p266) target = $region24
    $region23: #{transformer_forward.8} parent=5 // pred_region
      // Predicated region
      $region25: #{transformer_forward.8} parent=23 // pred_check
        %p269 = pneg %p54
      $region26: #{transformer_forward.8} parent=23 // pred_check_branch
        %271 = sbr.rel (%p269) target = $region28
      $region27: #{transformer_forward.8} parent=23 // pred_region
        %p272 = scmp.lt.s32.totalorder %s20, 1
        %s273 = scalar_select %p272, %s20, 1
        %p274 = scmp.lt.s32.totalorder %s21, 0
        %s275 = scalar_select %p274, %s21, 0
        %s276 = sadd.s32 %s275, %s273
        %s277 = smul.addr %s276, 4
        %s278 = scalar_lea.vmem %s0, %s277
      $region28: #{transformer_forward.8} parent=23 // pred_fallthru
        _
      // Predicated region
      $region29: #{transformer_forward.8} parent=23 // pred_check
        %p279 = pneg %p82
      $region30: #{transformer_forward.8} parent=23 // pred_check_branch
        %281 = sbr.rel (%p279) target = $region32
      $region31: #{transformer_forward.8} parent=23 // pred_region
        %p282 = scmp.lt.s32.totalorder %s20, 1
        %s283 = scalar_select %p282, %s20, 1
        %p284 = scmp.lt.s32.totalorder %s22, 0
        %s285 = scalar_select %p284, %s22, 0
        %s286 = sadd.s32 %s285, %s283
        %s287 = smul.addr %s286, 4
        %s288 = scalar_lea.vmem %s1, %s287
      $region32: #{transformer_forward.8} parent=23 // pred_fallthru
        _
      // Predicated region
      $region33: #{transformer_forward.8} parent=23 // pred_check
        %p289 = pneg %p110
      $region34: #{transformer_forward.8} parent=23 // pred_check_branch
        %291 = sbr.rel (%p289) target = $region36
      $region35: #{transformer_forward.8} parent=23 // pred_region
        %p292 = scmp.lt.s32.totalorder %s20, 1
        %s293 = scalar_select %p292, %s20, 1
        %p294 = scmp.lt.s32.totalorder %s22, 0
        %s295 = scalar_select %p294, %s22, 0
        %s296 = sadd.s32 %s295, %s293
        %s297 = smul.addr %s296, 4
        %s298 = scalar_lea.vmem %s2, %s297
      $region36: #{transformer_forward.8} parent=23 // pred_fallthru
        _
      // Predicated region
      $region37: #{transformer_forward.8} parent=23 // pred_check
        %p299 = pneg %p140
      $region38: #{transformer_forward.8} parent=23 // pred_check_branch
        %301 = sbr.rel (%p299) target = $region40
      $region39: #{transformer_forward.8} parent=23 // pred_region
        %p302 = scmp.lt.s32.totalorder %s20, 1
        %s303 = scalar_select %p302, %s20, 1
        %p304 = scmp.lt.s32.totalorder %s21, 0
        %s305 = scalar_select %p304, %s21, 0
        %p306 = scmp.lt.s32.totalorder %s22, 0
        %s307 = scalar_select %p306, %s22, 0
        %s308 = sadd.s32 %s307, %s305
        %s309 = sadd.s32 %s308, %s303
        %s310 = smul.addr %s309, 8
        %s311 = scalar_lea.vmem %s3, %s310
      $region40: #{transformer_forward.8} parent=23 // pred_fallthru
        _
      // Predicated region
      $region41: #{transformer_forward.8} parent=23 // pred_check
        %p312 = pneg %p168
      $region42: #{transformer_forward.8} parent=23 // pred_check_branch
        %314 = sbr.rel (%p312) target = $region44
      $region43: #{transformer_forward.8} parent=23 // pred_region
        %p315 = scmp.lt.s32.totalorder %s20, 1
        %s316 = scalar_select %p315, %s20, 1
        %p317 = scmp.lt.s32.totalorder %s21, 0
        %s318 = scalar_select %p317, %s21, 0
        %s319 = sadd.s32 %s318, %s316
        %s320 = smul.addr %s319, 8
        %s321 = scalar_lea.vmem %s4, %s320
      $region44: #{transformer_forward.8} parent=23 // pred_fallthru
        _
    $region24: #{transformer_forward.8} parent=5 // pred_fallthru
      _
    %p322 = scmp.le.s32.totalorder 1, %s13
    %p323 = scmp.lt.s32.totalorder %s13, 3
    %p324 = pnand %p322, %p323
    %p325 = pneg %p324
    // Predicated region
    $region45: #{transformer_forward.8} parent=5 // pred_check
      _
    $region46: #{transformer_forward.8} parent=5 // pred_check_branch
      %327 = sbr.rel (%p324) target = $region48
    $region47: #{transformer_forward.8} parent=5 // pred_region
      %s328 = ssub.s32 %s13, 1
      %p329 = scmp.lt.s32.totalorder %s23, 1
      %s330 = scalar_select %p329, %s23, 1
      %p331 = scmp.lt.s32.totalorder %s24, 0
      %s332 = scalar_select %p331, %s24, 0
      %s333 = sadd.s32 %s332, %s330
      %s334 = smul.addr %s333, 4
      %s335 = scalar_lea.vmem %s0, %s334
      %p336 = pneg %p60
      %p337 = pneg %p57
      %p338 = scmp.lt.s32.totalorder %s23, 1
      %s339 = scalar_select %p338, %s23, 1
      %p340 = scmp.lt.s32.totalorder %s25, 0
      %s341 = scalar_select %p340, %s25, 0
      %s342 = sadd.s32 %s341, %s339
      %s343 = smul.addr %s342, 4
      %s344 = scalar_lea.vmem %s1, %s343
      %p345 = pneg %p88
      %p346 = pneg %p85
      %p347 = scmp.lt.s32.totalorder %s23, 1
      %s348 = scalar_select %p347, %s23, 1
      %p349 = scmp.lt.s32.totalorder %s25, 0
      %s350 = scalar_select %p349, %s25, 0
      %s351 = sadd.s32 %s350, %s348
      %s352 = smul.addr %s351, 4
      %s353 = scalar_lea.vmem %s2, %s352
      %p354 = pneg %p116
      %p355 = pneg %p113
      %p356 = scmp.lt.s32.totalorder %s23, 1
      %s357 = scalar_select %p356, %s23, 1
      %p358 = scmp.lt.s32.totalorder %s24, 0
      %s359 = scalar_select %p358, %s24, 0
      %p360 = scmp.lt.s32.totalorder %s25, 0
      %s361 = scalar_select %p360, %s25, 0
      %s362 = sadd.s32 %s361, %s359
      %s363 = sadd.s32 %s362, %s357
      %s364 = smul.addr %s363, 8
      %s365 = scalar_lea.vmem %s3, %s364
      %p366 = pneg %p146
      %p367 = pneg %p143
      %p368 = scmp.lt.s32.totalorder %s23, 1
      %s369 = scalar_select %p368, %s23, 1
      %p370 = scmp.lt.s32.totalorder %s24, 0
      %s371 = scalar_select %p370, %s24, 0
      %s372 = sadd.s32 %s371, %s369
      %s373 = smul.addr %s372, 8
      %s374 = scalar_lea.vmem %s4, %s373
      %p375 = pneg %p174
      %p376 = pneg %p171
      %p377 = pneg %p195
      %p378 = pneg %p192
      %p379 = pneg %p216
      %p380 = pneg %p213
      %p381 = pneg %p244
      %p382 = pneg %p241
      %p383 = scmp.lt.s32.totalorder %s23, 1
      %s384 = scalar_select %p383, %s23, 1
      %p385 = scmp.lt.s32.totalorder %s24, 0
      %s386 = scalar_select %p385, %s24, 0
      %s387 = sadd.s32 %s386, %s384
      %s388 = smul.addr %s387, 8
      %s389 = scalar_lea.vmem %s7, %s388
      %p390 = scmp.lt.s32.totalorder %s23, 1
      %s391 = scalar_select %p390, %s23, 1
      %p392 = scmp.lt.s32.totalorder %s24, 0
      %s393 = scalar_select %p392, %s24, 0
      %s394 = sadd.s32 %s393, %s391
      %s395 = smul.addr %s394, 4
      %s396 = scalar_lea.vmem %s0, %s395
      %p397 = scmp.lt.s32.totalorder %s23, 1
      %s398 = scalar_select %p397, %s23, 1
      %p399 = scmp.lt.s32.totalorder %s25, 0
      %s400 = scalar_select %p399, %s25, 0
      %s401 = sadd.s32 %s400, %s398
      %s402 = smul.addr %s401, 4
      %s403 = scalar_lea.vmem %s1, %s402
      %p404 = scmp.lt.s32.totalorder %s23, 1
      %s405 = scalar_select %p404, %s23, 1
      %p406 = scmp.lt.s32.totalorder %s25, 0
      %s407 = scalar_select %p406, %s25, 0
      %s408 = sadd.s32 %s407, %s405
      %s409 = smul.addr %s408, 4
      %s410 = scalar_lea.vmem %s2, %s409
      %p411 = scmp.lt.s32.totalorder %s23, 1
      %s412 = scalar_select %p411, %s23, 1
      %p413 = scmp.lt.s32.totalorder %s24, 0
      %s414 = scalar_select %p413, %s24, 0
      %p415 = scmp.lt.s32.totalorder %s25, 0
      %s416 = scalar_select %p415, %s25, 0
      %s417 = sadd.s32 %s416, %s414
      %s418 = sadd.s32 %s417, %s412
      %s419 = smul.addr %s418, 8
      %s420 = scalar_lea.vmem %s3, %s419
      %p421 = scmp.lt.s32.totalorder %s23, 1
      %s422 = scalar_select %p421, %s23, 1
      %p423 = scmp.lt.s32.totalorder %s24, 0
      %s424 = scalar_select %p423, %s24, 0
      %s425 = sadd.s32 %s424, %s422
      %s426 = smul.addr %s425, 8
      %s427 = scalar_lea.vmem %s4, %s426
      %p428 = scmp.lt.s32.totalorder %s23, 1
      %s429 = scalar_select %p428, %s23, 1
      %p430 = scmp.lt.s32.totalorder %s24, 0
      %s431 = scalar_select %p430, %s24, 0
      %s432 = sadd.s32 %s431, %s429
      %s433 = smul.addr %s432, 8
      %s434 = scalar_lea.vmem %s7, %s433
      %p436 = scmp.eq.s32.totalorder %s25, 0
      // Predicated region
      $region49: #{transformer_forward.8} parent=47 // pred_check
        %p437 = pneg %p436
      $region50: #{transformer_forward.8} parent=47 // pred_check_branch
        %439 = sbr.rel (%p437) target = $region52
      $region51: #{transformer_forward.8} parent=47 // pred_region
        %vm440 = vcmask 7168
        %441 = vst.msk [vmem:[#allocation2] sm:$0xff] %vm440, -1e+30
        %442 = vst.msk [vmem:[#allocation3] sm:$0xff] %vm440, 0.0
        %vm443 = vcmask 261120
        %444 = vst.msk [vmem:[#allocation4] sm:$0xff] %vm443, 0.0
      $region52: #{transformer_forward.8} parent=47 // pred_fallthru
        _
      %v445 = vld [vmem:[%s396] sm:$0xf]
      %v446 = vld [vmem:[%s403] sm:$0xf]
      %v447 = vld [vmem:[%s410] sm:$0xf]
      %vm448 = vcmask 261120
      %v450 = vsel %vm448, %v445, 0
      %v453 = vsel %vm448, %v446, 0
      %455 = vmatprep.subr.bf16.mxu0 0
      %456 = vmatpush1.bf16.xpose.msra.mxu0 0
      %457 = vmatprep.subr.bf16.mxu0 0
      %458 = vmatpush1.bf16.xpose.msra.mxu0 0
      %459 = vmatprep.subr.bf16.mxu0 0
      %460 = vmatpush1.bf16.xpose.msra.mxu0 0
      %461 = vmatprep.subr.bf16.mxu0 0
      %462 = vmatpush1.bf16.xpose.msra.mxu0 0
      %463 = vmatprep.subr.bf16.mxu0 0
      %464 = vmatpush1.bf16.xpose.msra.mxu0 0
      %465 = vmatprep.subr.bf16.mxu0 0
      %466 = vmatpush1.bf16.xpose.msra.mxu0 0
      %467 = vmatprep.subr.bf16.mxu0 0
      %468 = vmatpush1.bf16.xpose.msra.mxu0 0
      %469 = vmatprep.subr.bf16.mxu0 0
      %470 = vmatpush1.bf16.xpose.msra.mxu0 %v453
      %471 = vmatprep.subr.bf16.mxu0 0
      %472 = vmatpush2.bf16.xpose.msra.mxu0 0
      %473 = vmatprep.subr.bf16.mxu0 0
      %474 = vmatpush2.bf16.xpose.msra.mxu0 0
      %475 = vmatprep.subr.bf16.mxu0 0
      %476 = vmatpush2.bf16.xpose.msra.mxu0 0
      %477 = vmatprep.subr.bf16.mxu0 0
      %478 = vmatpush2.bf16.xpose.msra.mxu0 0
      %479 = vmatprep.subr.bf16.mxu0 0
      %480 = vmatpush2.bf16.xpose.msra.mxu0 0
      %481 = vmatprep.subr.bf16.mxu0 0
      %482 = vmatpush2.bf16.xpose.msra.mxu0 0
      %483 = vmatprep.subr.bf16.mxu0 0
      %484 = vmatpush2.bf16.xpose.msra.mxu0 0
      %485 = vmatprep.subr.bf16.mxu0 0
      %486 = vmatpush2.bf16.xpose.msra.mxu0 0
      %487 = vmatprep.mubr.bf16.mxu0 0
      %488 = vmatmul.mubr.bf16.gmra.mxu0 %v450
      %v489 = vpop.f32.mrf.mxu0
      %v490 = vadd.f32 0.0, %v489
      %v491 = vpop.f32.mrf.mxu0
      %v492 = vpop.f32.mrf.mxu0
      %v493 = vpop.f32.mrf.mxu0
      %494 = vdwg.mxu0
      %v495 = vmul.f32 %v490, 0.17677669
      %v496 = vld [vmem:[%s420] sm:$0xff]
      %v497 = vadd.f32 %v495, %v496
      %v498 = vld [vmem:[#allocation2] sm:$0xff]
      %vm499 = vcmask 64512
      %v500 = vsel %vm499, %v497, -inf
      %501 = vmax.xlane.f32.xlu0 %v500
      %v502 = vpop.xlane.xlu0 %501
      %v503 = vmax.f32 %v498, %v502
      %v504 = vsub.f32 %v498, %v503
      %v505 = vmul.f32 %v504, 1.442695
      %v506 = vpow.pop %v505
      %508 = vset.pattern.permute.xlu0 0
      %509 = vperm.xlu0 %508, %v503
      %v510 = vpop.permute.xlu0 %509
      %v512 = vsub.f32 %v497, %v510
      %v513 = vmul.f32 %v512, 1.442695
      %v514 = vpow.pop %v513
      %v515 = vld [vmem:[#allocation3] sm:$0xff]
      %v516 = vmul.f32 %v506, %v515
      %v517 = vsel %vm499, %v514, 0.0
      %518 = vadd.xlane.f32.xlu0 %v517
      %v519 = vpop.xlane.xlu0 %518
      %v520 = vadd.f32 %v516, %v519
      %vm521 = vcmask 7168
      %522 = vst.msk [vmem:[#allocation3] sm:$0xff] %vm521, %v520
      %v523 = vld [vmem:[#allocation4] sm:$0xff]
      %525 = vset.pattern.permute.xlu0 0
      %526 = vperm.xlu0 %525, %v506
      %v527 = vpop.permute.xlu0 %526
      %v529 = vmul.f32 %v527, %v523
      %v530 = vpack.c.bf16 %v514, %v514
      %v532 = vsel %vm499, %v530, 0
      %vm534 = vcmask 1043456
      %v536 = vsel %vm534, %v447, 0
      %538 = vmatprep.subr.bf16.mxu0 0
      %539 = vmatpush1.bf16.msra.mxu0 0
      %540 = vmatprep.subr.bf16.mxu0 0
      %541 = vmatpush1.bf16.msra.mxu0 0
      %542 = vmatprep.subr.bf16.mxu0 0
      %543 = vmatpush1.bf16.msra.mxu0 0
      %544 = vmatprep.subr.bf16.mxu0 0
      %545 = vmatpush1.bf16.msra.mxu0 0
      %546 = vmatprep.subr.bf16.mxu0 0
      %547 = vmatpush1.bf16.msra.mxu0 0
      %548 = vmatprep.subr.bf16.mxu0 0
      %549 = vmatpush1.bf16.msra.mxu0 0
      %550 = vmatprep.subr.bf16.mxu0 0
      %551 = vmatpush1.bf16.msra.mxu0 0
      %552 = vmatprep.subr.bf16.mxu0 0
      %553 = vmatpush1.bf16.msra.mxu0 %v536
      %554 = vmatprep.subr.bf16.mxu0 0
      %555 = vmatpush2.bf16.msra.mxu0 0
      %556 = vmatprep.subr.bf16.mxu0 0
      %557 = vmatpush2.bf16.msra.mxu0 0
      %558 = vmatprep.subr.bf16.mxu0 0
      %559 = vmatpush2.bf16.msra.mxu0 0
      %560 = vmatprep.subr.bf16.mxu0 0
      %561 = vmatpush2.bf16.msra.mxu0 0
      %562 = vmatprep.subr.bf16.mxu0 0
      %563 = vmatpush2.bf16.msra.mxu0 0
      %564 = vmatprep.subr.bf16.mxu0 0
      %565 = vmatpush2.bf16.msra.mxu0 0
      %566 = vmatprep.subr.bf16.mxu0 0
      %567 = vmatpush2.bf16.msra.mxu0 0
      %568 = vmatprep.subr.bf16.mxu0 0
      %569 = vmatpush2.bf16.msra.mxu0 0
      %570 = vmatprep.mubr.bf16.mxu0 0
      %571 = vmatmul.mubr.bf16.gmra.mxu0 %v532
      %v572 = vpop.f32.mrf.mxu0
      %v573 = vadd.f32 0.0, %v572
      %v574 = vpop.f32.mrf.mxu0
      %v575 = vpop.f32.mrf.mxu0
      %v576 = vpop.f32.mrf.mxu0
      %577 = vdwg.mxu0
      %v578 = vadd.f32 %v529, %v573
      %579 = vst.msk [vmem:[#allocation4] sm:$0xff] %vm448, %v578
      %580 = vst.msk [vmem:[#allocation2] sm:$0xff] %vm521, %v503
      // Predicated region
      $region53: #{transformer_forward.8} parent=47 // pred_check
        %p581 = pneg %p436
      $region54: #{transformer_forward.8} parent=47 // pred_check_branch
        %583 = sbr.rel (%p581) target = $region56
      $region55: #{transformer_forward.8} parent=47 // pred_region
        %v584 = vld [vmem:[#allocation4] sm:$0xff]
        %v585 = vld [vmem:[#allocation3] sm:$0xff]
        %v586 = vrcp.pop %v585
        %588 = vset.pattern.permute.xlu0 0
        %589 = vperm.xlu0 %588, %v586
        %v590 = vpop.permute.xlu0 %589
        %v592 = vmul.f32 %v584, %v590
        %v593 = vcombine.high %v592, 0.0
        %v595 = vunpack.c.l.s4 1983009808
        %v596 = vunpack.c.0.s8 %v595
        %v597 = vlaneseq
        %v598 = vshrl.u32 %v597, 7
        %v599 = vsub.s32 %v596, %v598
        %v600 = vrot.slane %v592, %v599
        %v602 = vunpack.c.l.s4 1983009808
        %v603 = vunpack.c.0.s8 %v602
        %v604 = vlaneseq
        %v605 = vshrl.u32 %v604, 7
        %v606 = vsub.s32 %v603, %v605
        %v607 = vrot.slane %v593, %v606
        %v608 = vcombine.high %v600, 0.0
        %v610 = vunpack.c.l.s4 1934713408
        %v611 = vunpack.c.0.s8 %v610
        %v612 = vlaneseq
        %v613 = vshrl.u32 %v612, 7
        %v614 = vsub.s32 %v611, %v613
        %v615 = vrot.slane %v600, %v614
        %v617 = vunpack.c.l.s4 1934713408
        %v618 = vunpack.c.0.s8 %v617
        %v619 = vlaneseq
        %v620 = vshrl.u32 %v619, 7
        %v621 = vsub.s32 %v618, %v620
        %v622 = vrot.slane %v608, %v621
        %v623 = vcombine.high %v607, 0.0
        %v625 = vunpack.c.l.s4 1934713408
        %v626 = vunpack.c.0.s8 %v625
        %v627 = vlaneseq
        %v628 = vshrl.u32 %v627, 7
        %v629 = vsub.s32 %v626, %v628
        %v630 = vrot.slane %v607, %v629
        %v632 = vunpack.c.l.s4 1934713408
        %v633 = vunpack.c.0.s8 %v632
        %v634 = vlaneseq
        %v635 = vshrl.u32 %v634, 7
        %v636 = vsub.s32 %v633, %v635
        %v637 = vrot.slane %v623, %v636
        %v638 = vcombine.high %v615, 0.0
        %v639 = vcombine.high %v622, 0.0
        %v640 = vcombine.high %v630, 0.0
        %v641 = vcombine.high %v637, 0.0
        %v642 = vpack.c.bf16 %v615, %v615
        %v643 = vpack.c.bf16 %v638, %v638
        %v644 = vpack.c.bf16 %v622, %v622
        %v645 = vpack.c.bf16 %v639, %v639
        %v646 = vpack.c.bf16 %v630, %v630
        %v647 = vpack.c.bf16 %v640, %v640
        %v648 = vpack.c.bf16 %v637, %v637
        %v649 = vpack.c.bf16 %v641, %v641
        %v650 = vld [vmem:[%s5] sm:$0xf]
        %v651 = vld [vmem:[%s5 + $0x4] sm:$0xf]
        %v652 = vld [vmem:[%s5 + $0x8] sm:$0xf]
        %v653 = vld [vmem:[%s5 + $0xc] sm:$0xf]
        %v654 = vld [vmem:[%s6] sm:$0x1]
        %v656 = vlaneseq
        %v657 = vshrl.u32 %v656, 7
        %v658 = vsub.s32 0, %v657
        %v659 = vrot.slane %v654, %v658
        %v669 = vunpack.c.l.b16 %v642
        %v670 = vunpack.c.l.b16 %v643
        %v671 = vunpack.c.l.b16 %v644
        %v672 = vunpack.c.l.b16 %v645
        %v673 = vunpack.c.l.b16 %v646
        %v674 = vunpack.c.l.b16 %v647
        %v675 = vunpack.c.l.b16 %v648
        %v676 = vunpack.c.l.b16 %v649
        %v677 = vrot.slane %v670, 7
        %vm678 = vcmask 1041409
        %v679 = vsel %vm678, %v677, %v669
        %v680 = vrot.slane %v671, 6
        %vm681 = vcmask 1042434
        %v682 = vsel %vm681, %v680, %v679
        %v683 = vrot.slane %v672, 5
        %vm684 = vcmask 1043459
        %v685 = vsel %vm684, %v683, %v682
        %v686 = vrot.slane %v673, 4
        %vm687 = vcmask 1044484
        %v688 = vsel %vm687, %v686, %v685
        %v689 = vrot.slane %v674, 3
        %vm690 = vcmask 1045509
        %v691 = vsel %vm690, %v689, %v688
        %v692 = vrot.slane %v675, 2
        %vm693 = vcmask 1046534
        %v694 = vsel %vm693, %v692, %v691
        %v695 = vrot.slane %v676, 1
        %vm696 = vcmask 1047559
        %v697 = vsel %vm696, %v695, %v694
        %v698 = vpack.c.b16 %v697, %v697
        %v703 = vunpack.c.l.b16 %v650
        %v704 = vunpack.c.l.b16 %v651
        %v705 = vunpack.c.l.b16 %v652
        %v706 = vunpack.c.l.b16 %v653
        %v707 = vpack.c.b16 %v704, %v703
        %v708 = vpack.c.b16 %v706, %v705
        %v712 = vsel %vm448, %v698, 0
        %714 = vmatprep.subr.bf16.mxu0 0
        %715 = vmatpush1.bf16.msra.mxu0 0
        %716 = vmatprep.subr.bf16.mxu0 0
        %717 = vmatpush1.bf16.msra.mxu0 0
        %718 = vmatprep.subr.bf16.mxu0 0
        %719 = vmatpush1.bf16.msra.mxu0 0
        %720 = vmatprep.subr.bf16.mxu0 0
        %721 = vmatpush1.bf16.msra.mxu0 0
        %722 = vmatprep.subr.bf16.mxu0 0
        %723 = vmatpush1.bf16.msra.mxu0 0
        %724 = vmatprep.subr.bf16.mxu0 0
        %725 = vmatpush1.bf16.msra.mxu0 0
        %726 = vmatprep.subr.bf16.mxu0 0
        %727 = vmatpush1.bf16.msra.mxu0 %v708
        %728 = vmatprep.subr.bf16.mxu0 0
        %729 = vmatpush1.bf16.msra.mxu0 %v707
        %730 = vmatprep.subr.bf16.mxu0 0
        %731 = vmatpush2.bf16.msra.mxu0 0
        %732 = vmatprep.subr.bf16.mxu0 0
        %733 = vmatpush2.bf16.msra.mxu0 0
        %734 = vmatprep.subr.bf16.mxu0 0
        %735 = vmatpush2.bf16.msra.mxu0 0
        %736 = vmatprep.subr.bf16.mxu0 0
        %737 = vmatpush2.bf16.msra.mxu0 0
        %738 = vmatprep.subr.bf16.mxu0 0
        %739 = vmatpush2.bf16.msra.mxu0 0
        %740 = vmatprep.subr.bf16.mxu0 0
        %741 = vmatpush2.bf16.msra.mxu0 0
        %742 = vmatprep.subr.bf16.mxu0 0
        %743 = vmatpush2.bf16.msra.mxu0 0
        %744 = vmatprep.subr.bf16.mxu0 0
        %745 = vmatpush2.bf16.msra.mxu0 0
        %746 = vmatprep.mubr.bf16.mxu0 0
        %747 = vmatmul.mubr.bf16.gmra.mxu0 %v712
        %v748 = vpop.f32.mrf.mxu0
        %v749 = vadd.f32 %v659, %v748
        %v750 = vpop.f32.mrf.mxu0
        %v751 = vpop.f32.mrf.mxu0
        %v752 = vpop.f32.mrf.mxu0
        %753 = vdwg.mxu0
        %v754 = vld [vmem:[%s427] sm:$0xff]
        %v755 = vadd.f32 %v749, %v754
        %756 = vst.msk [vmem:[%s434] sm:$0xff] %vm448, %v755
      $region56: #{transformer_forward.8} parent=47 // pred_fallthru
        _
      %p757 = scmp.lt.s32.totalorder %s23, 1
      %s758 = scalar_select %p757, %s23, 1
      %p759 = scmp.lt.s32.totalorder %s24, 0
      %s760 = scalar_select %p759, %s24, 0
      %s761 = sadd.s32 %s760, %s758
      %s762 = smul.addr %s761, 8
      %s763 = scalar_lea.vmem %s7, %s762
      // Predicated region
      $region57: #{transformer_forward.8} parent=47 // pred_check
        %p764 = pneg %p241
      $region58: #{transformer_forward.8} parent=47 // pred_check_branch
        %766 = sbr.rel (%p764) target = $region60
      $region59: #{transformer_forward.8} parent=47 // pred_region
        _
      $region60: #{transformer_forward.8} parent=47 // pred_fallthru
        _
    $region48: #{transformer_forward.8} parent=5 // pred_fallthru
      _
    %p767 = scmp.le.s32.totalorder 2, %s13
    // Predicated region
    $region61: #{transformer_forward.8} parent=5 // pred_check
      %p768 = pneg %p767
    $region62: #{transformer_forward.8} parent=5 // pred_check_branch
      %770 = sbr.rel (%p768) target = $region64
    $region63: #{transformer_forward.8} parent=5 // pred_region
      %s771 = ssub.s32 %s13, 2
      // Predicated region
      $region65: #{transformer_forward.8} parent=63 // pred_check
        %p772 = pneg %p247
      $region66: #{transformer_forward.8} parent=63 // pred_check_branch
        %774 = sbr.rel (%p772) target = $region68
      $region67: #{transformer_forward.8} parent=63 // pred_region
        %p775 = scmp.lt.s32.totalorder %s26, 1
        %s776 = scalar_select %p775, %s26, 1
        %p777 = scmp.lt.s32.totalorder %s27, 0
        %s778 = scalar_select %p777, %s27, 0
        %s779 = sadd.s32 %s778, %s776
        %s780 = smul.addr %s779, 8
        %s781 = scalar_lea.vmem %s7, %s780
      $region68: #{transformer_forward.8} parent=63 // pred_fallthru
        _
    $region64: #{transformer_forward.8} parent=5 // pred_fallthru
      _
  $region6: #{transformer_forward.8} parent=0 // loop_footer
    %s17 = sadd.s32 1, %s13
  $region7: #{transformer_forward.8} parent=0 // loop_footer_branch
    %12 = sbr.rel target = $region3
  $region8: #{transformer_forward.8} parent=0 // loop_exit
    _

// kernel: transformer_forward.11
$region0: #{transformer_forward.11}
  #allocation0 [shape = 'u32[]', space=smem, size = 0x4, offset = 0x4, fixed_abs, tag = 'smem constant byte address 0x4 - core index']
  #allocation1 [shape = 'u32[144,128]{1,0:T(1,128)}', space=vmem, size = 0x12000, scoped, tag = 'internal scratch']
  #allocation2 [shape = 'f32[2,8,1]{2,1,0:T(8,128)}', space=vmem, size = 0x2000, scoped, tag = 'scratch operand']
  #allocation3 [shape = 'f32[2,8,1]{2,1,0:T(8,128)}', space=vmem, size = 0x2000, scoped, tag = 'scratch operand']
  #allocation4 [shape = 'f32[2,8,16]{2,1,0:T(8,128)}', space=vmem, size = 0x2000, scoped, tag = 'scratch operand']
  %s0 = inlined_call_operand.vmem [shape: bf16[2,2,8,16], index: 0, kind: input, shape index: {}]
  %s1 = inlined_call_operand.vmem [shape: bf16[2,2,8,16], index: 1, kind: input, shape index: {}]
  %s2 = inlined_call_operand.vmem [shape: bf16[2,2,8,16], index: 2, kind: input, shape index: {}]
  %s3 = inlined_call_operand.vmem [shape: f32[2,8,8], index: 3, kind: input, shape index: {}]
  %s4 = inlined_call_operand.vmem [shape: f32[2,8,32], index: 4, kind: input, shape index: {}]
  %s5 = inlined_call_operand.vmem [shape: bf16[32,32], index: 5, kind: input, shape index: {}]
  %s6 = inlined_call_operand.vmem [shape: f32[1,32], index: 6, kind: input, shape index: {}]
  %s7 = inlined_call_operand.vmem [shape: f32[2,8,32], index: 7, kind: output, shape index: {}]
  %s8 = sld [smem:[#allocation0]]
  $region69: #{transformer_forward.11} parent=0
    _
  %s10 = ssub.s32 1, %s8
  %s11 = scalar_select 0, %s10, %s8
  loop: start=0, step=1, limit=4
  $region2: #{transformer_forward.11} parent=0 // loop_pre_header
    _
  $region3: #{transformer_forward.11} parent=0 // loop_header
    %s13 = sphi 0, %s17
    %p14 = scmp.ge.s32.totalorder %s13, 4
    %s20 = sphi 0, %s39
    %s21 = sphi 0, %s35
    %s22 = sphi 0, %s31
    %s23 = sphi 0, %s20
    %s24 = sphi 0, %s21
    %s25 = sphi 0, %s22
    %s26 = sphi 0, %s23
    %s27 = sphi 0, %s24
    %s28 = sphi 0, %s25
    %s44 = sphi 0, %s46
    %s47 = sphi 0, %s44
    %s48 = sphi 0, %s47
    %s64 = sphi 0, %s48
    %s72 = sphi 0, %s74
    %s75 = sphi 0, %s72
    %s76 = sphi 0, %s75
    %s92 = sphi 0, %s76
    %s100 = sphi 0, %s102
    %s103 = sphi 0, %s100
    %s104 = sphi 0, %s103
    %s120 = sphi 0, %s104
    %s130 = sphi 0, %s132
    %s133 = sphi 0, %s130
    %s134 = sphi 0, %s133
    %s150 = sphi 0, %s134
    %s158 = sphi 0, %s160
    %s161 = sphi 0, %s158
    %s162 = sphi 0, %s161
    %s178 = sphi 0, %s162
    %s182 = sphi 0, %s182
    %s184 = sphi 0, %s182
    %s185 = sphi 0, %s184
    %s199 = sphi 0, %s185
    %s203 = sphi 0, %s203
    %s205 = sphi 0, %s203
    %s206 = sphi 0, %s205
    %s220 = sphi 0, %s206
    %s228 = sphi 0, %s230
    %s231 = sphi 0, %s228
    %s232 = sphi 0, %s231
    %s248 = sphi 0, %s232
  $region4: #{transformer_forward.11} parent=0 // loop_header_branch
    %16 = sbr.rel (%p14) target = $region8
  $region5: #{transformer_forward.11} parent=0 // loop_body
    %s18 = ssub.s32 %s13, 1
    %s19 = ssub.s32 %s13, 2
    %s29 = sadd.s32 1, %s22
    %p30 = scmp.ge.s32.totalorder %s29, 1
    %s31 = scalar_select %p30, 0, %s29
    %s32 = sadd.s32 1, %s21
    %s33 = scalar_select %p30, %s32, %s21
    %p34 = scmp.ge.s32.totalorder %s33, 1
    %s35 = scalar_select %p34, 0, %s33
    %s36 = sadd.s32 1, %s20
    %s37 = scalar_select %p34, %s36, %s20
    %p38 = scmp.ge.s32.totalorder %s37, 2
    %s39 = scalar_select %p38, 0, %s37
    %s40 = ssub.s32 %s20, %s39
    %s41 = ssub.s32 %s21, %s35
    %s42 = sor.u32 %s40, %s41
    %p43 = scmp.eq.s32.totalorder %s42, 0
    %s45 = sadd.s32 %s44, 1
    %s46 = scalar_select %p43, %s44, %s45
    %p49 = pneg %p43
    %p50 = scmp.eq.s32.totalorder %s13, 1
    %p51 = por %p49, %p50
    %p52 = scmp.ne.s32.totalorder %s44, %s47
    %p53 = scmp.eq.s32.totalorder %s13, 0
    %p54 = por %p52, %p53
    %p55 = scmp.ne.s32.totalorder %s44, %s47
    %p56 = scmp.eq.s32.totalorder %s18, 1
    %p57 = por %p55, %p56
    %p58 = scmp.ne.s32.totalorder %s47, %s48
    %p59 = scmp.eq.s32.totalorder %s18, 0
    %p60 = por %p58, %p59
    %p61 = scmp.ne.s32.totalorder %s47, %s48
    %p62 = scmp.eq.s32.totalorder %s19, 1
    %p63 = por %p61, %p62
    %p65 = scmp.ne.s32.totalorder %s48, %s64
    %p66 = scmp.eq.s32.totalorder %s19, 0
    %p67 = por %p65, %p66
    %s68 = ssub.s32 %s20, %s39
    %s69 = ssub.s32 %s22, %s31
    %s70 = sor.u32 %s68, %s69
    %p71 = scmp.eq.s32.totalorder %s70, 0
    %s73 = sadd.s32 %s72, 1
    %s74 = scalar_select %p71, %s72, %s73
    %p77 = pneg %p71
    %p78 = scmp.eq.s32.totalorder %s13, 1
    %p79 = por %p77, %p78
    %p80 = scmp.ne.s32.totalorder %s72, %s75
    %p81 = scmp.eq.s32.totalorder %s13, 0
    %p82 = por %p80, %p81
    %p83 = scmp.ne.s32.totalorder %s72, %s75
    %p84 = scmp.eq.s32.totalorder %s18, 1
    %p85 = por %p83, %p84
    %p86 = scmp.ne.s32.totalorder %s75, %s76
    %p87 = scmp.eq.s32.totalorder %s18, 0
    %p88 = por %p86, %p87
    %p89 = scmp.ne.s32.totalorder %s75, %s76
    %p90 = scmp.eq.s32.totalorder %s19, 1
    %p91 = por %p89, %p90
    %p93 = scmp.ne.s32.totalorder %s76, %s92
    %p94 = scmp.eq.s32.totalorder %s19, 0
    %p95 = por %p93, %p94
    %s96 = ssub.s32 %s20, %s39
    %s97 = ssub.s32 %s22, %s31
    %s98 = sor.u32 %s96, %s97
    %p99 = scmp.eq.s32.totalorder %s98, 0
    %s101 = sadd.s32 %s100, 1
    %s102 = scalar_select %p99, %s100, %s101
    %p105 = pneg %p99
    %p106 = scmp.eq.s32.totalorder %s13, 1
    %p107 = por %p105, %p106
    %p108 = scmp.ne.s32.totalorder %s100, %s103
    %p109 = scmp.eq.s32.totalorder %s13, 0
    %p110 = por %p108, %p109
    %p111 = scmp.ne.s32.totalorder %s100, %s103
    %p112 = scmp.eq.s32.totalorder %s18, 1
    %p113 = por %p111, %p112
    %p114 = scmp.ne.s32.totalorder %s103, %s104
    %p115 = scmp.eq.s32.totalorder %s18, 0
    %p116 = por %p114, %p115
    %p117 = scmp.ne.s32.totalorder %s103, %s104
    %p118 = scmp.eq.s32.totalorder %s19, 1
    %p119 = por %p117, %p118
    %p121 = scmp.ne.s32.totalorder %s104, %s120
    %p122 = scmp.eq.s32.totalorder %s19, 0
    %p123 = por %p121, %p122
    %s124 = ssub.s32 %s20, %s39
    %s125 = ssub.s32 %s21, %s35
    %s126 = sor.u32 %s124, %s125
    %s127 = ssub.s32 %s22, %s31
    %s128 = sor.u32 %s126, %s127
    %p129 = scmp.eq.s32.totalorder %s128, 0
    %s131 = sadd.s32 %s130, 1
    %s132 = scalar_select %p129, %s130, %s131
    %p135 = pneg %p129
    %p136 = scmp.eq.s32.totalorder %s13, 1
    %p137 = por %p135, %p136
    %p138 = scmp.ne.s32.totalorder %s130, %s133
    %p139 = scmp.eq.s32.totalorder %s13, 0
    %p140 = por %p138, %p139
    %p141 = scmp.ne.s32.totalorder %s130, %s133
    %p142 = scmp.eq.s32.totalorder %s18, 1
    %p143 = por %p141, %p142
    %p144 = scmp.ne.s32.totalorder %s133, %s134
    %p145 = scmp.eq.s32.totalorder %s18, 0
    %p146 = por %p144, %p145
    %p147 = scmp.ne.s32.totalorder %s133, %s134
    %p148 = scmp.eq.s32.totalorder %s19, 1
    %p149 = por %p147, %p148
    %p151 = scmp.ne.s32.totalorder %s134, %s150
    %p152 = scmp.eq.s32.totalorder %s19, 0
    %p153 = por %p151, %p152
    %s154 = ssub.s32 %s20, %s39
    %s155 = ssub.s32 %s21, %s35
    %s156 = sor.u32 %s154, %s155
    %p157 = scmp.eq.s32.totalorder %s156, 0
    %s159 = sadd.s32 %s158, 1
    %s160 = scalar_select %p157, %s158, %s159
    %p163 = pneg %p157
    %p164 = scmp.eq.s32.totalorder %s13, 1
    %p165 = por %p163, %p164
    %p166 = scmp.ne.s32.totalorder %s158, %s161
    %p167 = scmp.eq.s32.totalorder %s13, 0
    %p168 = por %p166, %p167
    %p169 = scmp.ne.s32.totalorder %s158, %s161
    %p170 = scmp.eq.s32.totalorder %s18, 1
    %p171 = por %p169, %p170
    %p172 = scmp.ne.s32.totalorder %s161, %s162
    %p173 = scmp.eq.s32.totalorder %s18, 0
    %p174 = por %p172, %p173
    %p175 = scmp.ne.s32.totalorder %s161, %s162
    %p176 = scmp.eq.s32.totalorder %s19, 1
    %p177 = por %p175, %p176
    %p179 = scmp.ne.s32.totalorder %s162, %s178
    %p180 = scmp.eq.s32.totalorder %s19, 0
    %p181 = por %p179, %p180
    %s183 = sadd.s32 %s182, 1
    %p186 = scmp.eq.s32.totalorder %s13, 1
    %p187 = scmp.ne.s32.totalorder %s182, %s184
    %p188 = scmp.eq.s32.totalorder %s13, 0
    %p189 = por %p187, %p188
    %p190 = scmp.ne.s32.totalorder %s182, %s184
    %p191 = scmp.eq.s32.totalorder %s18, 1
    %p192 = por %p190, %p191
    %p193 = scmp.ne.s32.totalorder %s184, %s185
    %p194 = scmp.eq.s32.totalorder %s18, 0
    %p195 = por %p193, %p194
    %p196 = scmp.ne.s32.totalorder %s184, %s185
    %p197 = scmp.eq.s32.totalorder %s19, 1
    %p198 = por %p196, %p197
    %p200 = scmp.ne.s32.totalorder %s185, %s199
    %p201 = scmp.eq.s32.totalorder %s19, 0
    %p202 = por %p200, %p201
    %s204 = sadd.s32 %s203, 1
    %p207 = scmp.eq.s32.totalorder %s13, 1
    %p208 = scmp.ne.s32.totalorder %s203, %s205
    %p209 = scmp.eq.s32.totalorder %s13, 0
    %p210 = por %p208, %p209
    %p211 = scmp.ne.s32.totalorder %s203, %s205
    %p212 = scmp.eq.s32.totalorder %s18, 1
    %p213 = por %p211, %p212
    %p214 = scmp.ne.s32.totalorder %s205, %s206
    %p215 = scmp.eq.s32.totalorder %s18, 0
    %p216 = por %p214, %p215
    %p217 = scmp.ne.s32.totalorder %s205, %s206
    %p218 = scmp.eq.s32.totalorder %s19, 1
    %p219 = por %p217, %p218
    %p221 = scmp.ne.s32.totalorder %s206, %s220
    %p222 = scmp.eq.s32.totalorder %s19, 0
    %p223 = por %p221, %p222
    %s224 = ssub.s32 %s20, %s39
    %s225 = ssub.s32 %s21, %s35
    %s226 = sor.u32 %s224, %s225
    %p227 = scmp.eq.s32.totalorder %s226, 0
    %s229 = sadd.s32 %s228, 1
    %s230 = scalar_select %p227, %s228, %s229
    %p233 = pneg %p227
    %p234 = scmp.eq.s32.totalorder %s13, 1
    %p235 = por %p233, %p234
    %p236 = scmp.ne.s32.totalorder %s228, %s231
    %p237 = scmp.eq.s32.totalorder %s13, 0
    %p238 = por %p236, %p237
    %p239 = scmp.ne.s32.totalorder %s228, %s231
    %p240 = scmp.eq.s32.totalorder %s18, 1
    %p241 = por %p239, %p240
    %p242 = scmp.ne.s32.totalorder %s231, %s232
    %p243 = scmp.eq.s32.totalorder %s18, 0
    %p244 = por %p242, %p243
    %p245 = scmp.ne.s32.totalorder %s231, %s232
    %p246 = scmp.eq.s32.totalorder %s19, 1
    %p247 = por %p245, %p246
    %p249 = scmp.ne.s32.totalorder %s232, %s248
    %p250 = scmp.eq.s32.totalorder %s19, 0
    %p251 = por %p249, %p250
    %p252 = scmp.le.s32.totalorder 1, %s13
    %p253 = scmp.lt.s32.totalorder %s13, 3
    %p254 = pnand %p252, %p253
    %p255 = pneg %p254
    // Predicated region
    $region9: #{transformer_forward.11} parent=5 // pred_check
      _
    $region10: #{transformer_forward.11} parent=5 // pred_check_branch
      %257 = sbr.rel (%p254) target = $region12
    $region11: #{transformer_forward.11} parent=5 // pred_region
      %s258 = ssub.s32 %s13, 1
      // Predicated region
      $region13: #{transformer_forward.11} parent=11 // pred_check
        %p259 = pneg %p195
      $region14: #{transformer_forward.11} parent=11 // pred_check_branch
        %261 = sbr.rel (%p259) target = $region16
      $region15: #{transformer_forward.11} parent=11 // pred_region
        _
      $region16: #{transformer_forward.11} parent=11 // pred_fallthru
        _
      // Predicated region
      $region17: #{transformer_forward.11} parent=11 // pred_check
        %p262 = pneg %p216
      $region18: #{transformer_forward.11} parent=11 // pred_check_branch
        %264 = sbr.rel (%p262) target = $region20
      $region19: #{transformer_forward.11} parent=11 // pred_region
        _
      $region20: #{transformer_forward.11} parent=11 // pred_fallthru
        _
    $region12: #{transformer_forward.11} parent=5 // pred_fallthru
      _
    %p265 = scmp.lt.s32.totalorder %s13, 2
    // Predicated region
    $region21: #{transformer_forward.11} parent=5 // pred_check
      %p266 = pneg %p265
    $region22: #{transformer_forward.11} parent=5 // pred_check_branch
      %268 = sbr.rel (%p266) target = $region24
    $region23: #{transformer_forward.11} parent=5 // pred_region
      // Predicated region
      $region25: #{transformer_forward.11} parent=23 // pred_check
        %p269 = pneg %p54
      $region26: #{transformer_forward.11} parent=23 // pred_check_branch
        %271 = sbr.rel (%p269) target = $region28
      $region27: #{transformer_forward.11} parent=23 // pred_region
        %p272 = scmp.lt.s32.totalorder %s20, 1
        %s273 = scalar_select %p272, %s20, 1
        %p274 = scmp.lt.s32.totalorder %s21, 0
        %s275 = scalar_select %p274, %s21, 0
        %s276 = smul.addr %s273, 2
        %s277 = sadd.s32 %s275, %s276
        %s278 = smul.addr %s277, 4
        %s279 = scalar_lea.vmem %s0, %s278
      $region28: #{transformer_forward.11} parent=23 // pred_fallthru
        _
      // Predicated region
      $region29: #{transformer_forward.11} parent=23 // pred_check
        %p280 = pneg %p82
      $region30: #{transformer_forward.11} parent=23 // pred_check_branch
        %282 = sbr.rel (%p280) target = $region32
      $region31: #{transformer_forward.11} parent=23 // pred_region
        %p283 = scmp.lt.s32.totalorder %s20, 1
        %s284 = scalar_select %p283, %s20, 1
        %p285 = scmp.lt.s32.totalorder %s22, 0
        %s286 = scalar_select %p285, %s22, 0
        %s287 = smul.addr %s284, 2
        %s288 = sadd.s32 %s286, %s287
        %s289 = smul.addr %s288, 4
        %s290 = scalar_lea.vmem %s1, %s289
      $region32: #{transformer_forward.11} parent=23 // pred_fallthru
        _
      // Predicated region
      $region33: #{transformer_forward.11} parent=23 // pred_check
        %p291 = pneg %p110
      $region34: #{transformer_forward.11} parent=23 // pred_check_branch
        %293 = sbr.rel (%p291) target = $region36
      $region35: #{transformer_forward.11} parent=23 // pred_region
        %p294 = scmp.lt.s32.totalorder %s20, 1
        %s295 = scalar_select %p294, %s20, 1
        %p296 = scmp.lt.s32.totalorder %s22, 0
        %s297 = scalar_select %p296, %s22, 0
        %s298 = smul.addr %s295, 2
        %s299 = sadd.s32 %s297, %s298
        %s300 = smul.addr %s299, 4
        %s301 = scalar_lea.vmem %s2, %s300
      $region36: #{transformer_forward.11} parent=23 // pred_fallthru
        _
      // Predicated region
      $region37: #{transformer_forward.11} parent=23 // pred_check
        %p302 = pneg %p140
      $region38: #{transformer_forward.11} parent=23 // pred_check_branch
        %304 = sbr.rel (%p302) target = $region40
      $region39: #{transformer_forward.11} parent=23 // pred_region
        %p305 = scmp.lt.s32.totalorder %s20, 1
        %s306 = scalar_select %p305, %s20, 1
        %p307 = scmp.lt.s32.totalorder %s21, 0
        %s308 = scalar_select %p307, %s21, 0
        %p309 = scmp.lt.s32.totalorder %s22, 0
        %s310 = scalar_select %p309, %s22, 0
        %s311 = sadd.s32 %s310, %s308
        %s312 = sadd.s32 %s311, %s306
        %s313 = smul.addr %s312, 8
        %s314 = scalar_lea.vmem %s3, %s313
      $region40: #{transformer_forward.11} parent=23 // pred_fallthru
        _
      // Predicated region
      $region41: #{transformer_forward.11} parent=23 // pred_check
        %p315 = pneg %p168
      $region42: #{transformer_forward.11} parent=23 // pred_check_branch
        %317 = sbr.rel (%p315) target = $region44
      $region43: #{transformer_forward.11} parent=23 // pred_region
        %p318 = scmp.lt.s32.totalorder %s20, 1
        %s319 = scalar_select %p318, %s20, 1
        %p320 = scmp.lt.s32.totalorder %s21, 0
        %s321 = scalar_select %p320, %s21, 0
        %s322 = sadd.s32 %s321, %s319
        %s323 = smul.addr %s322, 8
        %s324 = scalar_lea.vmem %s4, %s323
      $region44: #{transformer_forward.11} parent=23 // pred_fallthru
        _
    $region24: #{transformer_forward.11} parent=5 // pred_fallthru
      _
    %p325 = scmp.le.s32.totalorder 1, %s13
    %p326 = scmp.lt.s32.totalorder %s13, 3
    %p327 = pnand %p325, %p326
    %p328 = pneg %p327
    // Predicated region
    $region45: #{transformer_forward.11} parent=5 // pred_check
      _
    $region46: #{transformer_forward.11} parent=5 // pred_check_branch
      %330 = sbr.rel (%p327) target = $region48
    $region47: #{transformer_forward.11} parent=5 // pred_region
      %s331 = ssub.s32 %s13, 1
      %p332 = scmp.lt.s32.totalorder %s23, 1
      %s333 = scalar_select %p332, %s23, 1
      %p334 = scmp.lt.s32.totalorder %s24, 0
      %s335 = scalar_select %p334, %s24, 0
      %s336 = smul.addr %s333, 2
      %s337 = sadd.s32 %s335, %s336
      %s338 = smul.addr %s337, 4
      %s339 = scalar_lea.vmem %s0, %s338
      %p340 = pneg %p60
      %p341 = pneg %p57
      %p342 = scmp.lt.s32.totalorder %s23, 1
      %s343 = scalar_select %p342, %s23, 1
      %p344 = scmp.lt.s32.totalorder %s25, 0
      %s345 = scalar_select %p344, %s25, 0
      %s346 = smul.addr %s343, 2
      %s347 = sadd.s32 %s345, %s346
      %s348 = smul.addr %s347, 4
      %s349 = scalar_lea.vmem %s1, %s348
      %p350 = pneg %p88
      %p351 = pneg %p85
      %p352 = scmp.lt.s32.totalorder %s23, 1
      %s353 = scalar_select %p352, %s23, 1
      %p354 = scmp.lt.s32.totalorder %s25, 0
      %s355 = scalar_select %p354, %s25, 0
      %s356 = smul.addr %s353, 2
      %s357 = sadd.s32 %s355, %s356
      %s358 = smul.addr %s357, 4
      %s359 = scalar_lea.vmem %s2, %s358
      %p360 = pneg %p116
      %p361 = pneg %p113
      %p362 = scmp.lt.s32.totalorder %s23, 1
      %s363 = scalar_select %p362, %s23, 1
      %p364 = scmp.lt.s32.totalorder %s24, 0
      %s365 = scalar_select %p364, %s24, 0
      %p366 = scmp.lt.s32.totalorder %s25, 0
      %s367 = scalar_select %p366, %s25, 0
      %s368 = sadd.s32 %s367, %s365
      %s369 = sadd.s32 %s368, %s363
      %s370 = smul.addr %s369, 8
      %s371 = scalar_lea.vmem %s3, %s370
      %p372 = pneg %p146
      %p373 = pneg %p143
      %p374 = scmp.lt.s32.totalorder %s23, 1
      %s375 = scalar_select %p374, %s23, 1
      %p376 = scmp.lt.s32.totalorder %s24, 0
      %s377 = scalar_select %p376, %s24, 0
      %s378 = sadd.s32 %s377, %s375
      %s379 = smul.addr %s378, 8
      %s380 = scalar_lea.vmem %s4, %s379
      %p381 = pneg %p174
      %p382 = pneg %p171
      %p383 = pneg %p195
      %p384 = pneg %p192
      %p385 = pneg %p216
      %p386 = pneg %p213
      %p387 = pneg %p244
      %p388 = pneg %p241
      %p389 = scmp.lt.s32.totalorder %s23, 1
      %s390 = scalar_select %p389, %s23, 1
      %p391 = scmp.lt.s32.totalorder %s24, 0
      %s392 = scalar_select %p391, %s24, 0
      %s393 = sadd.s32 %s392, %s390
      %s394 = smul.addr %s393, 8
      %s395 = scalar_lea.vmem %s7, %s394
      %p396 = scmp.lt.s32.totalorder %s23, 1
      %s397 = scalar_select %p396, %s23, 1
      %p398 = scmp.lt.s32.totalorder %s24, 0
      %s399 = scalar_select %p398, %s24, 0
      %s400 = smul.addr %s397, 2
      %s401 = sadd.s32 %s399, %s400
      %s402 = smul.addr %s401, 4
      %s403 = scalar_lea.vmem %s0, %s402
      %p404 = scmp.lt.s32.totalorder %s23, 1
      %s405 = scalar_select %p404, %s23, 1
      %p406 = scmp.lt.s32.totalorder %s25, 0
      %s407 = scalar_select %p406, %s25, 0
      %s408 = smul.addr %s405, 2
      %s409 = sadd.s32 %s407, %s408
      %s410 = smul.addr %s409, 4
      %s411 = scalar_lea.vmem %s1, %s410
      %p412 = scmp.lt.s32.totalorder %s23, 1
      %s413 = scalar_select %p412, %s23, 1
      %p414 = scmp.lt.s32.totalorder %s25, 0
      %s415 = scalar_select %p414, %s25, 0
      %s416 = smul.addr %s413, 2
      %s417 = sadd.s32 %s415, %s416
      %s418 = smul.addr %s417, 4
      %s419 = scalar_lea.vmem %s2, %s418
      %p420 = scmp.lt.s32.totalorder %s23, 1
      %s421 = scalar_select %p420, %s23, 1
      %p422 = scmp.lt.s32.totalorder %s24, 0
      %s423 = scalar_select %p422, %s24, 0
      %p424 = scmp.lt.s32.totalorder %s25, 0
      %s425 = scalar_select %p424, %s25, 0
      %s426 = sadd.s32 %s425, %s423
      %s427 = sadd.s32 %s426, %s421
      %s428 = smul.addr %s427, 8
      %s429 = scalar_lea.vmem %s3, %s428
      %p430 = scmp.lt.s32.totalorder %s23, 1
      %s431 = scalar_select %p430, %s23, 1
      %p432 = scmp.lt.s32.totalorder %s24, 0
      %s433 = scalar_select %p432, %s24, 0
      %s434 = sadd.s32 %s433, %s431
      %s435 = smul.addr %s434, 8
      %s436 = scalar_lea.vmem %s4, %s435
      %p437 = scmp.lt.s32.totalorder %s23, 1
      %s438 = scalar_select %p437, %s23, 1
      %p439 = scmp.lt.s32.totalorder %s24, 0
      %s440 = scalar_select %p439, %s24, 0
      %s441 = sadd.s32 %s440, %s438
      %s442 = smul.addr %s441, 8
      %s443 = scalar_lea.vmem %s7, %s442
      %p445 = scmp.eq.s32.totalorder %s25, 0
      // Predicated region
      $region49: #{transformer_forward.11} parent=47 // pred_check
        %p446 = pneg %p445
      $region50: #{transformer_forward.11} parent=47 // pred_check_branch
        %448 = sbr.rel (%p446) target = $region52
      $region51: #{transformer_forward.11} parent=47 // pred_region
        %vm449 = vcmask 7168
        %450 = vst.msk [vmem:[#allocation2] sm:$0xff] %vm449, -1e+30
        %451 = vst.msk [vmem:[#allocation2 + $0x8] sm:$0xff] %vm449, -1e+30
        %452 = vst.msk [vmem:[#allocation3] sm:$0xff] %vm449, 0.0
        %453 = vst.msk [vmem:[#allocation3 + $0x8] sm:$0xff] %vm449, 0.0
        %vm454 = vcmask 130048
        %455 = vst.msk [vmem:[#allocation4] sm:$0xff] %vm454, 0.0
        %456 = vst.msk [vmem:[#allocation4 + $0x8] sm:$0xff] %vm454, 0.0
      $region52: #{transformer_forward.11} parent=47 // pred_fallthru
        _
      %v457 = vld [vmem:[%s403] sm:$0xf]
      %v458 = vld [vmem:[%s403 + $0x4] sm:$0xf]
      %v459 = vld [vmem:[%s411] sm:$0xf]
      %v460 = vld [vmem:[%s411 + $0x4] sm:$0xf]
      %v461 = vld [vmem:[%s419] sm:$0xf]
      %v462 = vld [vmem:[%s419 + $0x4] sm:$0xf]
      %vm463 = vcmask 130048
      %v465 = vsel %vm463, %v457, 0
      %v468 = vsel %vm463, %v459, 0
      %470 = vmatprep.subr.bf16.mxu0 0
      %471 = vmatpush1.bf16.xpose.msra.mxu0 0
      %472 = vmatprep.subr.bf16.mxu0 0
      %473 = vmatpush1.bf16.xpose.msra.mxu0 0
      %474 = vmatprep.subr.bf16.mxu0 0
      %475 = vmatpush1.bf16.xpose.msra.mxu0 0
      %476 = vmatprep.subr.bf16.mxu0 0
      %477 = vmatpush1.bf16.xpose.msra.mxu0 0
      %478 = vmatprep.subr.bf16.mxu0 0
      %479 = vmatpush1.bf16.xpose.msra.mxu0 0
      %480 = vmatprep.subr.bf16.mxu0 0
      %481 = vmatpush1.bf16.xpose.msra.mxu0 0
      %482 = vmatprep.subr.bf16.mxu0 0
      %483 = vmatpush1.bf16.xpose.msra.mxu0 0
      %484 = vmatprep.subr.bf16.mxu0 0
      %485 = vmatpush1.bf16.xpose.msra.mxu0 %v468
      %486 = vmatprep.subr.bf16.mxu0 0
      %487 = vmatpush2.bf16.xpose.msra.mxu0 0
      %488 = vmatprep.subr.bf16.mxu0 0
      %489 = vmatpush2.bf16.xpose.msra.mxu0 0
      %490 = vmatprep.subr.bf16.mxu0 0
      %491 = vmatpush2.bf16.xpose.msra.mxu0 0
      %492 = vmatprep.subr.bf16.mxu0 0
      %493 = vmatpush2.bf16.xpose.msra.mxu0 0
      %494 = vmatprep.subr.bf16.mxu0 0
      %495 = vmatpush2.bf16.xpose.msra.mxu0 0
      %496 = vmatprep.subr.bf16.mxu0 0
      %497 = vmatpush2.bf16.xpose.msra.mxu0 0
      %498 = vmatprep.subr.bf16.mxu0 0
      %499 = vmatpush2.bf16.xpose.msra.mxu0 0
      %500 = vmatprep.subr.bf16.mxu0 0
      %501 = vmatpush2.bf16.xpose.msra.mxu0 0
      %502 = vmatprep.mubr.bf16.mxu0 0
      %503 = vmatmul.mubr.bf16.gmra.mxu0 %v465
      %v504 = vpop.f32.mrf.mxu0
      %v505 = vadd.f32 0.0, %v504
      %v506 = vpop.f32.mrf.mxu0
      %v507 = vpop.f32.mrf.mxu0
      %v508 = vpop.f32.mrf.mxu0
      %509 = vdwg.mxu0
      %v511 = vsel %vm463, %v458, 0
      %v514 = vsel %vm463, %v460, 0
      %516 = vmatprep.subr.bf16.mxu0 0
      %517 = vmatpush1.bf16.xpose.msra.mxu0 0
      %518 = vmatprep.subr.bf16.mxu0 0
      %519 = vmatpush1.bf16.xpose.msra.mxu0 0
      %520 = vmatprep.subr.bf16.mxu0 0
      %521 = vmatpush1.bf16.xpose.msra.mxu0 0
      %522 = vmatprep.subr.bf16.mxu0 0
      %523 = vmatpush1.bf16.xpose.msra.mxu0 0
      %524 = vmatprep.subr.bf16.mxu0 0
      %525 = vmatpush1.bf16.xpose.msra.mxu0 0
      %526 = vmatprep.subr.bf16.mxu0 0
      %527 = vmatpush1.bf16.xpose.msra.mxu0 0
      %528 = vmatprep.subr.bf16.mxu0 0
      %529 = vmatpush1.bf16.xpose.msra.mxu0 0
      %530 = vmatprep.subr.bf16.mxu0 0
      %531 = vmatpush1.bf16.xpose.msra.mxu0 %v514
      %532 = vmatprep.subr.bf16.mxu0 0
      %533 = vmatpush2.bf16.xpose.msra.mxu0 0
      %534 = vmatprep.subr.bf16.mxu0 0
      %535 = vmatpush2.bf16.xpose.msra.mxu0 0
      %536 = vmatprep.subr.bf16.mxu0 0
      %537 = vmatpush2.bf16.xpose.msra.mxu0 0
      %538 = vmatprep.subr.bf16.mxu0 0
      %539 = vmatpush2.bf16.xpose.msra.mxu0 0
      %540 = vmatprep.subr.bf16.mxu0 0
      %541 = vmatpush2.bf16.xpose.msra.mxu0 0
      %542 = vmatprep.subr.bf16.mxu0 0
      %543 = vmatpush2.bf16.xpose.msra.mxu0 0
      %544 = vmatprep.subr.bf16.mxu0 0
      %545 = vmatpush2.bf16.xpose.msra.mxu0 0
      %546 = vmatprep.subr.bf16.mxu0 0
      %547 = vmatpush2.bf16.xpose.msra.mxu0 0
      %548 = vmatprep.mubr.bf16.mxu0 0
      %549 = vmatmul.mubr.bf16.gmra.mxu0 %v511
      %v550 = vpop.f32.mrf.mxu0
      %v551 = vadd.f32 0.0, %v550
      %v552 = vpop.f32.mrf.mxu0
      %v553 = vpop.f32.mrf.mxu0
      %v554 = vpop.f32.mrf.mxu0
      %555 = vdwg.mxu0
      %v556 = vmul.f32 %v505, 0.25
      %v557 = vmul.f32 %v551, 0.25
      %v558 = vld [vmem:[%s429] sm:$0xff]
      %v559 = vadd.f32 %v556, %v558
      %v560 = vadd.f32 %v557, %v558
      %v561 = vld [vmem:[#allocation2] sm:$0xff]
      %v562 = vld [vmem:[#allocation2 + $0x8] sm:$0xff]
      %vm563 = vcmask 64512
      %v564 = vsel %vm563, %v559, -inf
      %565 = vmax.xlane.f32.xlu0 %v564
      %v566 = vpop.xlane.xlu0 %565
      %v567 = vsel %vm563, %v560, -inf
      %568 = vmax.xlane.f32.xlu0 %v567
      %v569 = vpop.xlane.xlu0 %568
      %v570 = vmax.f32 %v561, %v566
      %v571 = vmax.f32 %v562, %v569
      %v572 = vsub.f32 %v561, %v570
      %v573 = vsub.f32 %v562, %v571
      %v574 = vmul.f32 %v572, 1.442695
      %v575 = vpow.pop %v574
      %v576 = vmul.f32 %v573, 1.442695
      %v577 = vpow.pop %v576
      %579 = vset.pattern.permute.xlu0 0
      %580 = vperm.xlu0 %579, %v570
      %v581 = vpop.permute.xlu0 %580
      %584 = vset.pattern.permute.xlu0 0
      %585 = vperm.xlu0 %584, %v571
      %v586 = vpop.permute.xlu0 %585
      %v588 = vsub.f32 %v559, %v581
      %v589 = vsub.f32 %v560, %v586
      %v590 = vmul.f32 %v588, 1.442695
      %v591 = vpow.pop %v590
      %v592 = vmul.f32 %v589, 1.442695
      %v593 = vpow.pop %v592
      %v594 = vld [vmem:[#allocation3] sm:$0xff]
      %v595 = vld [vmem:[#allocation3 + $0x8] sm:$0xff]
      %v596 = vmul.f32 %v575, %v594
      %v597 = vmul.f32 %v577, %v595
      %v598 = vsel %vm563, %v591, 0.0
      %599 = vadd.xlane.f32.xlu0 %v598
      %v600 = vpop.xlane.xlu0 %599
      %v601 = vsel %vm563, %v593, 0.0
      %602 = vadd.xlane.f32.xlu0 %v601
      %v603 = vpop.xlane.xlu0 %602
      %v604 = vadd.f32 %v596, %v600
      %v605 = vadd.f32 %v597, %v603
      %vm606 = vcmask 7168
      %607 = vst.msk [vmem:[#allocation3] sm:$0xff] %vm606, %v604
      %608 = vst.msk [vmem:[#allocation3 + $0x8] sm:$0xff] %vm606, %v605
      %v609 = vld [vmem:[#allocation4] sm:$0xff]
      %v610 = vld [vmem:[#allocation4 + $0x8] sm:$0xff]
      %612 = vset.pattern.permute.xlu0 0
      %613 = vperm.xlu0 %612, %v575
      %v614 = vpop.permute.xlu0 %613
      %617 = vset.pattern.permute.xlu0 0
      %618 = vperm.xlu0 %617, %v577
      %v619 = vpop.permute.xlu0 %618
      %v621 = vmul.f32 %v614, %v609
      %v622 = vmul.f32 %v619, %v610
      %v623 = vpack.c.bf16 %v591, %v591
      %v624 = vpack.c.bf16 %v593, %v593
      %v626 = vsel %vm563, %v623, 0
      %vm628 = vcmask 1043456
      %v630 = vsel %vm628, %v461, 0
      %632 = vmatprep.subr.bf16.mxu0 0
      %633 = vmatpush1.bf16.msra.mxu0 0
      %634 = vmatprep.subr.bf16.mxu0 0
      %635 = vmatpush1.bf16.msra.mxu0 0
      %636 = vmatprep.subr.bf16.mxu0 0
      %637 = vmatpush1.bf16.msra.mxu0 0
      %638 = vmatprep.subr.bf16.mxu0 0
      %639 = vmatpush1.bf16.msra.mxu0 0
      %640 = vmatprep.subr.bf16.mxu0 0
      %641 = vmatpush1.bf16.msra.mxu0 0
      %642 = vmatprep.subr.bf16.mxu0 0
      %643 = vmatpush1.bf16.msra.mxu0 0
      %644 = vmatprep.subr.bf16.mxu0 0
      %645 = vmatpush1.bf16.msra.mxu0 0
      %646 = vmatprep.subr.bf16.mxu0 0
      %647 = vmatpush1.bf16.msra.mxu0 %v630
      %648 = vmatprep.subr.bf16.mxu0 0
      %649 = vmatpush2.bf16.msra.mxu0 0
      %650 = vmatprep.subr.bf16.mxu0 0
      %651 = vmatpush2.bf16.msra.mxu0 0
      %652 = vmatprep.subr.bf16.mxu0 0
      %653 = vmatpush2.bf16.msra.mxu0 0
      %654 = vmatprep.subr.bf16.mxu0 0
      %655 = vmatpush2.bf16.msra.mxu0 0
      %656 = vmatprep.subr.bf16.mxu0 0
      %657 = vmatpush2.bf16.msra.mxu0 0
      %658 = vmatprep.subr.bf16.mxu0 0
      %659 = vmatpush2.bf16.msra.mxu0 0
      %660 = vmatprep.subr.bf16.mxu0 0
      %661 = vmatpush2.bf16.msra.mxu0 0
      %662 = vmatprep.subr.bf16.mxu0 0
      %663 = vmatpush2.bf16.msra.mxu0 0
      %664 = vmatprep.mubr.bf16.mxu0 0
      %665 = vmatmul.mubr.bf16.gmra.mxu0 %v626
      %v666 = vpop.f32.mrf.mxu0
      %v667 = vadd.f32 0.0, %v666
      %v668 = vpop.f32.mrf.mxu0
      %v669 = vpop.f32.mrf.mxu0
      %v670 = vpop.f32.mrf.mxu0
      %671 = vdwg.mxu0
      %v673 = vsel %vm563, %v624, 0
      %v676 = vsel %vm628, %v462, 0
      %678 = vmatprep.subr.bf16.mxu0 0
      %679 = vmatpush1.bf16.msra.mxu0 0
      %680 = vmatprep.subr.bf16.mxu0 0
      %681 = vmatpush1.bf16.msra.mxu0 0
      %682 = vmatprep.subr.bf16.mxu0 0
      %683 = vmatpush1.bf16.msra.mxu0 0
      %684 = vmatprep.subr.bf16.mxu0 0
      %685 = vmatpush1.bf16.msra.mxu0 0
      %686 = vmatprep.subr.bf16.mxu0 0
      %687 = vmatpush1.bf16.msra.mxu0 0
      %688 = vmatprep.subr.bf16.mxu0 0
      %689 = vmatpush1.bf16.msra.mxu0 0
      %690 = vmatprep.subr.bf16.mxu0 0
      %691 = vmatpush1.bf16.msra.mxu0 0
      %692 = vmatprep.subr.bf16.mxu0 0
      %693 = vmatpush1.bf16.msra.mxu0 %v676
      %694 = vmatprep.subr.bf16.mxu0 0
      %695 = vmatpush2.bf16.msra.mxu0 0
      %696 = vmatprep.subr.bf16.mxu0 0
      %697 = vmatpush2.bf16.msra.mxu0 0
      %698 = vmatprep.subr.bf16.mxu0 0
      %699 = vmatpush2.bf16.msra.mxu0 0
      %700 = vmatprep.subr.bf16.mxu0 0
      %701 = vmatpush2.bf16.msra.mxu0 0
      %702 = vmatprep.subr.bf16.mxu0 0
      %703 = vmatpush2.bf16.msra.mxu0 0
      %704 = vmatprep.subr.bf16.mxu0 0
      %705 = vmatpush2.bf16.msra.mxu0 0
      %706 = vmatprep.subr.bf16.mxu0 0
      %707 = vmatpush2.bf16.msra.mxu0 0
      %708 = vmatprep.subr.bf16.mxu0 0
      %709 = vmatpush2.bf16.msra.mxu0 0
      %710 = vmatprep.mubr.bf16.mxu0 0
      %711 = vmatmul.mubr.bf16.gmra.mxu0 %v673
      %v712 = vpop.f32.mrf.mxu0
      %v713 = vadd.f32 0.0, %v712
      %v714 = vpop.f32.mrf.mxu0
      %v715 = vpop.f32.mrf.mxu0
      %v716 = vpop.f32.mrf.mxu0
      %717 = vdwg.mxu0
      %v718 = vadd.f32 %v621, %v667
      %v719 = vadd.f32 %v622, %v713
      %720 = vst.msk [vmem:[#allocation4] sm:$0xff] %vm463, %v718
      %721 = vst.msk [vmem:[#allocation4 + $0x8] sm:$0xff] %vm463, %v719
      %722 = vst.msk [vmem:[#allocation2] sm:$0xff] %vm606, %v570
      %723 = vst.msk [vmem:[#allocation2 + $0x8] sm:$0xff] %vm606, %v571
      // Predicated region
      $region53: #{transformer_forward.11} parent=47 // pred_check
        %p724 = pneg %p445
      $region54: #{transformer_forward.11} parent=47 // pred_check_branch
        %726 = sbr.rel (%p724) target = $region56
      $region55: #{transformer_forward.11} parent=47 // pred_region
        %v727 = vld [vmem:[#allocation4] sm:$0xff]
        %v728 = vld [vmem:[#allocation4 + $0x8] sm:$0xff]
        %v729 = vld [vmem:[#allocation3] sm:$0xff]
        %v730 = vld [vmem:[#allocation3 + $0x8] sm:$0xff]
        %v731 = vrcp.pop %v729
        %v732 = vrcp.pop %v730
        %734 = vset.pattern.permute.xlu0 0
        %735 = vperm.xlu0 %734, %v731
        %v736 = vpop.permute.xlu0 %735
        %739 = vset.pattern.permute.xlu0 0
        %740 = vperm.xlu0 %739, %v732
        %v741 = vpop.permute.xlu0 %740
        %v743 = vmul.f32 %v727, %v736
        %v744 = vmul.f32 %v728, %v741
        %v745 = vcombine.high %v743, 0.0
        %v747 = vunpack.c.l.s4 1983009808
        %v748 = vunpack.c.0.s8 %v747
        %v749 = vlaneseq
        %v750 = vshrl.u32 %v749, 7
        %v751 = vsub.s32 %v748, %v750
        %v752 = vrot.slane %v743, %v751
        %v754 = vunpack.c.l.s4 1983009808
        %v755 = vunpack.c.0.s8 %v754
        %v756 = vlaneseq
        %v757 = vshrl.u32 %v756, 7
        %v758 = vsub.s32 %v755, %v757
        %v759 = vrot.slane %v745, %v758
        %v760 = vcombine.high %v744, 0.0
        %v762 = vunpack.c.l.s4 1983009808
        %v763 = vunpack.c.0.s8 %v762
        %v764 = vlaneseq
        %v765 = vshrl.u32 %v764, 7
        %v766 = vsub.s32 %v763, %v765
        %v767 = vrot.slane %v744, %v766
        %v769 = vunpack.c.l.s4 1983009808
        %v770 = vunpack.c.0.s8 %v769
        %v771 = vlaneseq
        %v772 = vshrl.u32 %v771, 7
        %v773 = vsub.s32 %v770, %v772
        %v774 = vrot.slane %v760, %v773
        %v775 = vcombine.low %v752, %v767
        %v776 = vcombine.high %v752, %v767
        %v778 = vunpack.c.l.s4 1934713408
        %v779 = vunpack.c.0.s8 %v778
        %v780 = vlaneseq
        %v781 = vshrl.u32 %v780, 7
        %v782 = vsub.s32 %v779, %v781
        %v783 = vrot.slane %v775, %v782
        %v785 = vunpack.c.l.s4 1934713408
        %v786 = vunpack.c.0.s8 %v785
        %v787 = vlaneseq
        %v788 = vshrl.u32 %v787, 7
        %v789 = vsub.s32 %v786, %v788
        %v790 = vrot.slane %v776, %v789
        %v791 = vcombine.low %v759, %v774
        %v792 = vcombine.high %v759, %v774
        %v794 = vunpack.c.l.s4 1934713408
        %v795 = vunpack.c.0.s8 %v794
        %v796 = vlaneseq
        %v797 = vshrl.u32 %v796, 7
        %v798 = vsub.s32 %v795, %v797
        %v799 = vrot.slane %v791, %v798
        %v801 = vunpack.c.l.s4 1934713408
        %v802 = vunpack.c.0.s8 %v801
        %v803 = vlaneseq
        %v804 = vshrl.u32 %v803, 7
        %v805 = vsub.s32 %v802, %v804
        %v806 = vrot.slane %v792, %v805
        %v807 = vcombine.high %v783, 0.0
        %v808 = vcombine.high %v790, 0.0
        %v809 = vcombine.high %v799, 0.0
        %v810 = vcombine.high %v806, 0.0
        %v811 = vcombine.low %v783, %v790
        %v813 = vunpack.c.l.s4 1983009808
        %v814 = vunpack.c.0.s8 %v813
        %v815 = vlaneseq
        %v816 = vshrl.u32 %v815, 7
        %v817 = vsub.s32 %v814, %v816
        %v818 = vrot.slane %v811, %v817
        %v819 = vcombine.low %v807, %v808
        %v821 = vunpack.c.l.s4 1983009808
        %v822 = vunpack.c.0.s8 %v821
        %v823 = vlaneseq
        %v824 = vshrl.u32 %v823, 7
        %v825 = vsub.s32 %v822, %v824
        %v826 = vrot.slane %v819, %v825
        %v827 = vcombine.low %v799, %v806
        %v829 = vunpack.c.l.s4 1983009808
        %v830 = vunpack.c.0.s8 %v829
        %v831 = vlaneseq
        %v832 = vshrl.u32 %v831, 7
        %v833 = vsub.s32 %v830, %v832
        %v834 = vrot.slane %v827, %v833
        %v835 = vcombine.low %v809, %v810
        %v837 = vunpack.c.l.s4 1983009808
        %v838 = vunpack.c.0.s8 %v837
        %v839 = vlaneseq
        %v840 = vshrl.u32 %v839, 7
        %v841 = vsub.s32 %v838, %v840
        %v842 = vrot.slane %v835, %v841
        %v843 = vcombine.low %v818, %v826
        %v845 = vunpack.c.l.s4 1934713408
        %v846 = vunpack.c.0.s8 %v845
        %v847 = vlaneseq
        %v848 = vshrl.u32 %v847, 7
        %v849 = vsub.s32 %v846, %v848
        %v850 = vrot.slane %v843, %v849
        %v851 = vcombine.low %v834, %v842
        %v853 = vunpack.c.l.s4 1934713408
        %v854 = vunpack.c.0.s8 %v853
        %v855 = vlaneseq
        %v856 = vshrl.u32 %v855, 7
        %v857 = vsub.s32 %v854, %v856
        %v858 = vrot.slane %v851, %v857
        %v859 = vcombine.low %v850, %v858
        %v860 = vcombine.high %v850, %v858
        %862 = vrot.lane.b32.xlu0 %v860, 16
        %v863 = vpop.permute.xlu0 %862
        %v865 = vsel %vm463, %v859, %v863
        %v866 = vpack.c.bf16 %v865, %v865
        %v867 = vld [vmem:[%s5] sm:$0xf]
        %v868 = vld [vmem:[%s5 + $0x4] sm:$0xf]
        %v869 = vld [vmem:[%s5 + $0x8] sm:$0xf]
        %v870 = vld [vmem:[%s5 + $0xc] sm:$0xf]
        %v871 = vld [vmem:[%s6] sm:$0x1]
        %v873 = vlaneseq
        %v874 = vshrl.u32 %v873, 7
        %v875 = vsub.s32 0, %v874
        %v876 = vrot.slane %v871, %v875
        %v882 = vunpack.c.l.b16 %v867
        %v883 = vunpack.c.l.b16 %v868
        %v884 = vunpack.c.l.b16 %v869
        %v885 = vunpack.c.l.b16 %v870
        %v886 = vpack.c.b16 %v883, %v882
        %v887 = vpack.c.b16 %v885, %v884
        %vm890 = vcmask 261120
        %v892 = vsel %vm890, %v866, 0
        %894 = vmatprep.subr.bf16.mxu0 0
        %895 = vmatpush1.bf16.msra.mxu0 0
        %896 = vmatprep.subr.bf16.mxu0 0
        %897 = vmatpush1.bf16.msra.mxu0 0
        %898 = vmatprep.subr.bf16.mxu0 0
        %899 = vmatpush1.bf16.msra.mxu0 0
        %900 = vmatprep.subr.bf16.mxu0 0
        %901 = vmatpush1.bf16.msra.mxu0 0
        %902 = vmatprep.subr.bf16.mxu0 0
        %903 = vmatpush1.bf16.msra.mxu0 0
        %904 = vmatprep.subr.bf16.mxu0 0
        %905 = vmatpush1.bf16.msra.mxu0 0
        %906 = vmatprep.subr.bf16.mxu0 0
        %907 = vmatpush1.bf16.msra.mxu0 %v887
        %908 = vmatprep.subr.bf16.mxu0 0
        %909 = vmatpush1.bf16.msra.mxu0 %v886
        %910 = vmatprep.subr.bf16.mxu0 0
        %911 = vmatpush2.bf16.msra.mxu0 0
        %912 = vmatprep.subr.bf16.mxu0 0
        %913 = vmatpush2.bf16.msra.mxu0 0
        %914 = vmatprep.subr.bf16.mxu0 0
        %915 = vmatpush2.bf16.msra.mxu0 0
        %916 = vmatprep.subr.bf16.mxu0 0
        %917 = vmatpush2.bf16.msra.mxu0 0
        %918 = vmatprep.subr.bf16.mxu0 0
        %919 = vmatpush2.bf16.msra.mxu0 0
        %920 = vmatprep.subr.bf16.mxu0 0
        %921 = vmatpush2.bf16.msra.mxu0 0
        %922 = vmatprep.subr.bf16.mxu0 0
        %923 = vmatpush2.bf16.msra.mxu0 0
        %924 = vmatprep.subr.bf16.mxu0 0
        %925 = vmatpush2.bf16.msra.mxu0 0
        %926 = vmatprep.mubr.bf16.mxu0 0
        %927 = vmatmul.mubr.bf16.gmra.mxu0 %v892
        %v928 = vpop.f32.mrf.mxu0
        %v929 = vadd.f32 %v876, %v928
        %v930 = vpop.f32.mrf.mxu0
        %v931 = vpop.f32.mrf.mxu0
        %v932 = vpop.f32.mrf.mxu0
        %933 = vdwg.mxu0
        %v934 = vld [vmem:[%s436] sm:$0xff]
        %v935 = vadd.f32 %v929, %v934
        %936 = vst.msk [vmem:[%s443] sm:$0xff] %vm890, %v935
      $region56: #{transformer_forward.11} parent=47 // pred_fallthru
        _
      %p937 = scmp.lt.s32.totalorder %s23, 1
      %s938 = scalar_select %p937, %s23, 1
      %p939 = scmp.lt.s32.totalorder %s24, 0
      %s940 = scalar_select %p939, %s24, 0
      %s941 = sadd.s32 %s940, %s938
      %s942 = smul.addr %s941, 8
      %s943 = scalar_lea.vmem %s7, %s942
      // Predicated region
      $region57: #{transformer_forward.11} parent=47 // pred_check
        %p944 = pneg %p241
      $region58: #{transformer_forward.11} parent=47 // pred_check_branch
        %946 = sbr.rel (%p944) target = $region60
      $region59: #{transformer_forward.11} parent=47 // pred_region
        _
      $region60: #{transformer_forward.11} parent=47 // pred_fallthru
        _
    $region48: #{transformer_forward.11} parent=5 // pred_fallthru
      _
    %p947 = scmp.le.s32.totalorder 2, %s13
    // Predicated region
    $region61: #{transformer_forward.11} parent=5 // pred_check
      %p948 = pneg %p947
    $region62: #{transformer_forward.11} parent=5 // pred_check_branch
      %950 = sbr.rel (%p948) target = $region64
    $region63: #{transformer_forward.11} parent=5 // pred_region
      %s951 = ssub.s32 %s13, 2
      // Predicated region
      $region65: #{transformer_forward.11} parent=63 // pred_check
        %p952 = pneg %p247
      $region66: #{transformer_forward.11} parent=63 // pred_check_branch
        %954 = sbr.rel (%p952) target = $region68
      $region67: #{transformer_forward.11} parent=63 // pred_region
        %p955 = scmp.lt.s32.totalorder %s26, 1
        %s956 = scalar_select %p955, %s26, 1
        %p957 = scmp.lt.s32.totalorder %s27, 0
        %s958 = scalar_select %p957, %s27, 0
        %s959 = sadd.s32 %s958, %s956
        %s960 = smul.addr %s959, 8
        %s961 = scalar_lea.vmem %s7, %s960
      $region68: #{transformer_forward.11} parent=63 // pred_fallthru
        _
    $region64: #{transformer_forward.11} parent=5 // pred_fallthru
      _
  $region6: #{transformer_forward.11} parent=0 // loop_footer
    %s17 = sadd.s32 1, %s13
  $region7: #{transformer_forward.11} parent=0 // loop_footer_branch
    %12 = sbr.rel target = $region3
  $region8: #{transformer_forward.11} parent=0 // loop_exit
    _

// kernel: transformer_forward.13
$region0: #{transformer_forward.13}
  #allocation0 [shape = 'u32[]', space=smem, size = 0x4, offset = 0x4, fixed_abs, tag = 'smem constant byte address 0x4 - core index']
  #allocation1 [shape = 'u32[144,128]{1,0:T(1,128)}', space=vmem, size = 0x12000, scoped, tag = 'internal scratch']
  %s0 = inlined_call_operand.vmem [shape: bf16[2,8,32], index: 0, kind: input, shape index: {}]
  %s1 = inlined_call_operand.vmem [shape: bf16[32,128], index: 1, kind: input, shape index: {}]
  %s2 = inlined_call_operand.vmem [shape: f32[1,128], index: 2, kind: input, shape index: {}]
  %s3 = inlined_call_operand.hbm [shape: f32[2,8,128], index: 3, kind: output, shape index: {}]
  %s4 = sld [smem:[#allocation0]]
  $region45: #{transformer_forward.13} parent=0
    _
  %s6 = ssub.s32 1, %s4
  %s7 = scalar_select 0, %s6, %s4
  $region1: #{transformer_forward.13} parent=0
    #allocation2 [shape = 'u8[8192]{0}', space=vmem, size = 0x2000, scoped, tag = 'output window, operand 0']
    #allocation3 [shape = 's32[2]{0}', space=sflag, size = 0x8, scoped, tag = 'scoped memory for transformer_forward.13']
    %8 = vsyncpa [#allocation3], 0
    %s9 = scalar_lea.sflag [#allocation3], 1
    %10 = vsyncpa %s9, 0
    loop: start=0, step=1, limit=4
    $region2: #{transformer_forward.13} parent=1 // loop_pre_header
      _
    $region3: #{transformer_forward.13} parent=1 // loop_header
      %s12 = sphi 0, %s16
      %p13 = scmp.ge.s32.totalorder %s12, 4
      %s19 = sphi 0, %s38
      %s20 = sphi 0, %s34
      %s21 = sphi 0, %s30
      %s22 = sphi 0, %s19
      %s23 = sphi 0, %s20
      %s24 = sphi 0, %s21
      %s25 = sphi 0, %s22
      %s26 = sphi 0, %s23
      %s27 = sphi 0, %s24
      %s43 = sphi 0, %s45
      %s46 = sphi 0, %s43
      %s47 = sphi 0, %s46
      %s63 = sphi 0, %s47
      %s69 = sphi 0, %s71
      %s72 = sphi 0, %s69
      %s73 = sphi 0, %s72
      %s89 = sphi 0, %s73
      %s95 = sphi 0, %s97
      %s98 = sphi 0, %s95
      %s99 = sphi 0, %s98
      %s115 = sphi 0, %s99
      %s125 = sphi 0, %s127
      %s128 = sphi 0, %s125
      %s129 = sphi 0, %s128
      %s145 = sphi 0, %s129
    $region4: #{transformer_forward.13} parent=1 // loop_header_branch
      %15 = sbr.rel (%p13) target = $region8
    $region5: #{transformer_forward.13} parent=1 // loop_body
      %s17 = ssub.s32 %s12, 1
      %s18 = ssub.s32 %s12, 2
      %s28 = sadd.s32 1, %s21
      %p29 = scmp.ge.s32.totalorder %s28, 1
      %s30 = scalar_select %p29, 0, %s28
      %s31 = sadd.s32 1, %s20
      %s32 = scalar_select %p29, %s31, %s20
      %p33 = scmp.ge.s32.totalorder %s32, 1
      %s34 = scalar_select %p33, 0, %s32
      %s35 = sadd.s32 1, %s19
      %s36 = scalar_select %p33, %s35, %s19
      %p37 = scmp.ge.s32.totalorder %s36, 2
      %s38 = scalar_select %p37, 0, %s36
      %s39 = ssub.s32 %s19, %s38
      %s40 = ssub.s32 %s20, %s34
      %s41 = sor.u32 %s39, %s40
      %p42 = scmp.eq.s32.totalorder %s41, 0
      %s44 = sadd.s32 %s43, 1
      %s45 = scalar_select %p42, %s43, %s44
      %p48 = pneg %p42
      %p49 = scmp.eq.s32.totalorder %s12, 1
      %p50 = por %p48, %p49
      %p51 = scmp.ne.s32.totalorder %s43, %s46
      %p52 = scmp.eq.s32.totalorder %s12, 0
      %p53 = por %p51, %p52
      %p54 = scmp.ne.s32.totalorder %s43, %s46
      %p55 = scmp.eq.s32.totalorder %s17, 1
      %p56 = por %p54, %p55
      %p57 = scmp.ne.s32.totalorder %s46, %s47
      %p58 = scmp.eq.s32.totalorder %s17, 0
      %p59 = por %p57, %p58
      %p60 = scmp.ne.s32.totalorder %s46, %s47
      %p61 = scmp.eq.s32.totalorder %s18, 1
      %p62 = por %p60, %p61
      %p64 = scmp.ne.s32.totalorder %s47, %s63
      %p65 = scmp.eq.s32.totalorder %s18, 0
      %p66 = por %p64, %p65
      %s67 = ssub.s32 %s21, %s30
      %p68 = scmp.eq.s32.totalorder %s67, 0
      %s70 = sadd.s32 %s69, 1
      %s71 = scalar_select %p68, %s69, %s70
      %p74 = pneg %p68
      %p75 = scmp.eq.s32.totalorder %s12, 1
      %p76 = por %p74, %p75
      %p77 = scmp.ne.s32.totalorder %s69, %s72
      %p78 = scmp.eq.s32.totalorder %s12, 0
      %p79 = por %p77, %p78
      %p80 = scmp.ne.s32.totalorder %s69, %s72
      %p81 = scmp.eq.s32.totalorder %s17, 1
      %p82 = por %p80, %p81
      %p83 = scmp.ne.s32.totalorder %s72, %s73
      %p84 = scmp.eq.s32.totalorder %s17, 0
      %p85 = por %p83, %p84
      %p86 = scmp.ne.s32.totalorder %s72, %s73
      %p87 = scmp.eq.s32.totalorder %s18, 1
      %p88 = por %p86, %p87
      %p90 = scmp.ne.s32.totalorder %s73, %s89
      %p91 = scmp.eq.s32.totalorder %s18, 0
      %p92 = por %p90, %p91
      %s93 = ssub.s32 %s21, %s30
      %p94 = scmp.eq.s32.totalorder %s93, 0
      %s96 = sadd.s32 %s95, 1
      %s97 = scalar_select %p94, %s95, %s96
      %p100 = pneg %p94
      %p101 = scmp.eq.s32.totalorder %s12, 1
      %p102 = por %p100, %p101
      %p103 = scmp.ne.s32.totalorder %s95, %s98
      %p104 = scmp.eq.s32.totalorder %s12, 0
      %p105 = por %p103, %p104
      %p106 = scmp.ne.s32.totalorder %s95, %s98
      %p107 = scmp.eq.s32.totalorder %s17, 1
      %p108 = por %p106, %p107
      %p109 = scmp.ne.s32.totalorder %s98, %s99
      %p110 = scmp.eq.s32.totalorder %s17, 0
      %p111 = por %p109, %p110
      %p112 = scmp.ne.s32.totalorder %s98, %s99
      %p113 = scmp.eq.s32.totalorder %s18, 1
      %p114 = por %p112, %p113
      %p116 = scmp.ne.s32.totalorder %s99, %s115
      %p117 = scmp.eq.s32.totalorder %s18, 0
      %p118 = por %p116, %p117
      %s119 = ssub.s32 %s19, %s38
      %s120 = ssub.s32 %s20, %s34
      %s121 = sor.u32 %s119, %s120
      %s122 = ssub.s32 %s21, %s30
      %s123 = sor.u32 %s121, %s122
      %p124 = scmp.eq.s32.totalorder %s123, 0
      %s126 = sadd.s32 %s125, 1
      %s127 = scalar_select %p124, %s125, %s126
      %p130 = pneg %p124
      %p131 = scmp.eq.s32.totalorder %s12, 1
      %p132 = por %p130, %p131
      %p133 = scmp.ne.s32.totalorder %s125, %s128
      %p134 = scmp.eq.s32.totalorder %s12, 0
      %p135 = por %p133, %p134
      %p136 = scmp.ne.s32.totalorder %s125, %s128
      %p137 = scmp.eq.s32.totalorder %s17, 1
      %p138 = por %p136, %p137
      %p139 = scmp.ne.s32.totalorder %s128, %s129
      %p140 = scmp.eq.s32.totalorder %s17, 0
      %p141 = por %p139, %p140
      %p142 = scmp.ne.s32.totalorder %s128, %s129
      %p143 = scmp.eq.s32.totalorder %s18, 1
      %p144 = por %p142, %p143
      %p146 = scmp.ne.s32.totalorder %s129, %s145
      %p147 = scmp.eq.s32.totalorder %s18, 0
      %p148 = por %p146, %p147
      %p149 = scmp.le.s32.totalorder 1, %s12
      %p150 = scmp.lt.s32.totalorder %s12, 3
      %p151 = pnand %p149, %p150
      %p152 = pneg %p151
      // Predicated region
      $region9: #{transformer_forward.13} parent=5 // pred_check
        _
      $region10: #{transformer_forward.13} parent=5 // pred_check_branch
        %154 = sbr.rel (%p151) target = $region12
      $region11: #{transformer_forward.13} parent=5 // pred_region
        %s155 = ssub.s32 %s12, 1
        // Predicated region
        $region13: #{transformer_forward.13} parent=11 // pred_check
          %p156 = pneg %p85
        $region14: #{transformer_forward.13} parent=11 // pred_check_branch
          %158 = sbr.rel (%p156) target = $region16
        $region15: #{transformer_forward.13} parent=11 // pred_region
          %p159 = scmp.lt.s32.totalorder %s24, 0
          %s160 = scalar_select %p159, %s24, 0
          %s161 = smul.addr %s160, 4
          %s162 = scalar_lea.vmem %s1, %s161
        $region16: #{transformer_forward.13} parent=11 // pred_fallthru
          _
        // Predicated region
        $region17: #{transformer_forward.13} parent=11 // pred_check
          %p163 = pneg %p111
        $region18: #{transformer_forward.13} parent=11 // pred_check_branch
          %165 = sbr.rel (%p163) target = $region20
        $region19: #{transformer_forward.13} parent=11 // pred_region
          %p166 = scmp.lt.s32.totalorder %s24, 0
          %s167 = scalar_select %p166, %s24, 0
          %s168 = scalar_lea.vmem %s2, %s167
        $region20: #{transformer_forward.13} parent=11 // pred_fallthru
          _
      $region12: #{transformer_forward.13} parent=5 // pred_fallthru
        _
      %p169 = scmp.lt.s32.totalorder %s12, 2
      // Predicated region
      $region21: #{transformer_forward.13} parent=5 // pred_check
        %p170 = pneg %p169
      $region22: #{transformer_forward.13} parent=5 // pred_check_branch
        %172 = sbr.rel (%p170) target = $region24
      $region23: #{transformer_forward.13} parent=5 // pred_region
        // Predicated region
        $region25: #{transformer_forward.13} parent=23 // pred_check
          %p173 = pneg %p53
        $region26: #{transformer_forward.13} parent=23 // pred_check_branch
          %175 = sbr.rel (%p173) target = $region28
        $region27: #{transformer_forward.13} parent=23 // pred_region
          %p176 = scmp.lt.s32.totalorder %s19, 1
          %s177 = scalar_select %p176, %s19, 1
          %p178 = scmp.lt.s32.totalorder %s20, 0
          %s179 = scalar_select %p178, %s20, 0
          %s180 = sadd.s32 %s179, %s177
          %s181 = smul.addr %s180, 4
          %s182 = scalar_lea.vmem %s0, %s181
        $region28: #{transformer_forward.13} parent=23 // pred_fallthru
          _
      $region24: #{transformer_forward.13} parent=5 // pred_fallthru
        _
      %p183 = scmp.le.s32.totalorder 1, %s12
      %p184 = scmp.lt.s32.totalorder %s12, 3
      %p185 = pnand %p183, %p184
      %p186 = pneg %p185
      // Predicated region
      $region29: #{transformer_forward.13} parent=5 // pred_check
        _
      $region30: #{transformer_forward.13} parent=5 // pred_check_branch
        %188 = sbr.rel (%p185) target = $region32
      $region31: #{transformer_forward.13} parent=5 // pred_region
        %s189 = ssub.s32 %s12, 1
        %p190 = scmp.lt.s32.totalorder %s22, 1
        %s191 = scalar_select %p190, %s22, 1
        %p192 = scmp.lt.s32.totalorder %s23, 0
        %s193 = scalar_select %p192, %s23, 0
        %s194 = sadd.s32 %s193, %s191
        %s195 = smul.addr %s194, 4
        %s196 = scalar_lea.vmem %s0, %s195
        %p197 = pneg %p59
        %p198 = pneg %p56
        %p199 = scmp.lt.s32.totalorder %s24, 0
        %s200 = scalar_select %p199, %s24, 0
        %s201 = smul.addr %s200, 4
        %s202 = scalar_lea.vmem %s1, %s201
        %p203 = pneg %p85
        %p204 = pneg %p82
        %p205 = scmp.lt.s32.totalorder %s24, 0
        %s206 = scalar_select %p205, %s24, 0
        %s207 = scalar_lea.vmem %s2, %s206
        %p208 = pneg %p111
        %p209 = pneg %p108
        %p210 = pneg %p141
        %p211 = pneg %p138
        %s212 = sand.u32 %s128, 1
        %s213 = scalar_lea.sflag [#allocation3], %s212
        %s214 = sand.u32 %s128, 1
        %s215 = smul.addr %s214, 8
        %s216 = scalar_lea.vmem [#allocation2], %s215
        %p217 = scmp.lt.s32.totalorder %s22, 1
        %s218 = scalar_select %p217, %s22, 1
        %p219 = scmp.lt.s32.totalorder %s23, 0
        %s220 = scalar_select %p219, %s23, 0
        %s221 = sadd.s32 %s220, %s218
        %s222 = smul.addr %s221, 4
        %s223 = scalar_lea.vmem %s0, %s222
        %p224 = scmp.lt.s32.totalorder %s24, 0
        %s225 = scalar_select %p224, %s24, 0
        %s226 = smul.addr %s225, 4
        %s227 = scalar_lea.vmem %s1, %s226
        %p228 = scmp.lt.s32.totalorder %s24, 0
        %s229 = scalar_select %p228, %s24, 0
        %s230 = scalar_lea.vmem %s2, %s229
        %v232 = vld [vmem:[%s223] sm:$0xf]
        %v233 = vld [vmem:[%s227] sm:$0xf]
        %v234 = vld [vmem:[%s227 + $0x4] sm:$0xf]
        %v235 = vld [vmem:[%s227 + $0x8] sm:$0xf]
        %v236 = vld [vmem:[%s227 + $0xc] sm:$0xf]
        %v237 = vld [vmem:[%s230] sm:$0x1]
        %v239 = vlaneseq
        %v240 = vshrl.u32 %v239, 7
        %v241 = vsub.s32 0, %v240
        %v242 = vrot.slane %v237, %v241
        %v248 = vunpack.c.l.b16 %v233
        %v249 = vunpack.c.l.b16 %v234
        %v250 = vunpack.c.l.b16 %v235
        %v251 = vunpack.c.l.b16 %v236
        %v252 = vpack.c.b16 %v249, %v248
        %v253 = vpack.c.b16 %v251, %v250
        %vm256 = vcmask 261120
        %v258 = vsel %vm256, %v232, 0
        %260 = vmatprep.subr.bf16.mxu0 0
        %261 = vmatpush1.bf16.msra.mxu0 0
        %262 = vmatprep.subr.bf16.mxu0 0
        %263 = vmatpush1.bf16.msra.mxu0 0
        %264 = vmatprep.subr.bf16.mxu0 0
        %265 = vmatpush1.bf16.msra.mxu0 0
        %266 = vmatprep.subr.bf16.mxu0 0
        %267 = vmatpush1.bf16.msra.mxu0 0
        %268 = vmatprep.subr.bf16.mxu0 0
        %269 = vmatpush1.bf16.msra.mxu0 0
        %270 = vmatprep.subr.bf16.mxu0 0
        %271 = vmatpush1.bf16.msra.mxu0 0
        %272 = vmatprep.subr.bf16.mxu0 0
        %273 = vmatpush1.bf16.msra.mxu0 %v253
        %274 = vmatprep.subr.bf16.mxu0 0
        %275 = vmatpush1.bf16.msra.mxu0 %v252
        %276 = vmatprep.subr.bf16.mxu0 0
        %277 = vmatpush2.bf16.msra.mxu0 0
        %278 = vmatprep.subr.bf16.mxu0 0
        %279 = vmatpush2.bf16.msra.mxu0 0
        %280 = vmatprep.subr.bf16.mxu0 0
        %281 = vmatpush2.bf16.msra.mxu0 0
        %282 = vmatprep.subr.bf16.mxu0 0
        %283 = vmatpush2.bf16.msra.mxu0 0
        %284 = vmatprep.subr.bf16.mxu0 0
        %285 = vmatpush2.bf16.msra.mxu0 0
        %286 = vmatprep.subr.bf16.mxu0 0
        %287 = vmatpush2.bf16.msra.mxu0 0
        %288 = vmatprep.subr.bf16.mxu0 0
        %289 = vmatpush2.bf16.msra.mxu0 0
        %290 = vmatprep.subr.bf16.mxu0 0
        %291 = vmatpush2.bf16.msra.mxu0 0
        %292 = vmatprep.mubr.bf16.mxu0 0
        %293 = vmatmul.mubr.bf16.gmra.mxu0 %v258
        %v294 = vpop.f32.mrf.mxu0
        %v295 = vadd.f32 %v242, %v294
        %v296 = vpop.f32.mrf.mxu0
        %v297 = vpop.f32.mrf.mxu0
        %v298 = vpop.f32.mrf.mxu0
        %299 = vdwg.mxu0
        %300 = vst [vmem:[%s216] sm:$0xff] %v295
        %s301 = sand.u32 %s128, 1
        %s302 = scalar_lea.sflag [#allocation3], %s301
        %s303 = sand.u32 %s128, 1
        %s304 = smul.addr %s303, 8
        %s305 = scalar_lea.vmem [#allocation2], %s304
        // Predicated region
        $region33: #{transformer_forward.13} parent=31 // pred_check
          %p306 = pneg %p138
        $region34: #{transformer_forward.13} parent=31 // pred_check_branch
          %308 = sbr.rel (%p306) target = $region36
        $region35: #{transformer_forward.13} parent=31 // pred_region
          %s310 = ssub.s32 128, 128
          %311 = vsyncadd %s302, %s310
          %s312 = sadd.s32 %s24, %s23
          %s313 = sadd.s32 %s312, %s22
          %s314 = smul.addr %s313, 128
          %s315 = scalar_lea.hbm %s3, %s314
          %s317 = sshll.u32 %s305, 4
          %s318 = int_to_ptr.vmem [resolvable:$true] %s317
          %320 = dma.vmem_to_hbm [thread:$0]  %s318, 128, %s315, %s302
        $region36: #{transformer_forward.13} parent=31 // pred_fallthru
          _
      $region32: #{transformer_forward.13} parent=5 // pred_fallthru
        _
      %p321 = scmp.le.s32.totalorder 2, %s12
      // Predicated region
      $region37: #{transformer_forward.13} parent=5 // pred_check
        %p322 = pneg %p321
      $region38: #{transformer_forward.13} parent=5 // pred_check_branch
        %324 = sbr.rel (%p322) target = $region40
      $region39: #{transformer_forward.13} parent=5 // pred_region
        %s325 = ssub.s32 %s12, 2
        // Predicated region
        $region41: #{transformer_forward.13} parent=39 // pred_check
          %p326 = pneg %p144
        $region42: #{transformer_forward.13} parent=39 // pred_check_branch
          %328 = sbr.rel (%p326) target = $region44
        $region43: #{transformer_forward.13} parent=39 // pred_region
          %s329 = sand.u32 %s129, 1
          %s330 = scalar_lea.sflag [#allocation3], %s329
          %s331 = sand.u32 %s129, 1
          %s332 = smul.addr %s331, 8
          %s333 = scalar_lea.vmem [#allocation2], %s332
          %334 = dma.done %s330, 128
        $region44: #{transformer_forward.13} parent=39 // pred_fallthru
          _
      $region40: #{transformer_forward.13} parent=5 // pred_fallthru
        _
    $region6: #{transformer_forward.13} parent=1 // loop_footer
      %s16 = sadd.s32 1, %s12
    $region7: #{transformer_forward.13} parent=1 // loop_footer_branch
      %11 = sbr.rel target = $region3
    $region8: #{transformer_forward.13} parent=1 // loop_exit
      _
    %335 = vsyncpa [#allocation3], 1
    %s336 = scalar_lea.sflag [#allocation3], 1
    %337 = vsyncpa %s336, 1

</llo_original>
